<compile_context>
chip_gen: v7x
topology: tpu7x:2x2x1
jax: 0.10.0
libtpu: 0.0.40
codegen_flags: <defaults>
</compile_context>

<pallas_src>
import math

import jax
import jax.numpy as jnp
from jax.experimental import pallas as pl
from jax.experimental.pallas import tpu as pltpu

# ----- model / problem sizes (small, consistent with the module) -----
B, S, D_IN = 2, 8, 16
HIDDEN = 128                 # d_model, divisible by nhead
NHEAD = 4
HEAD_DIM = HIDDEN // NHEAD
FFN = 2048                   # PyTorch TransformerEncoderLayer default dim_feedforward
NUM_LAYERS = 2
D_OUT = 8

N_TOK = B * S                # 16 token rows (2 sublane groups)
D_IN_PAD = 128               # lane-dense padded input width
D_OUT_PAD = 128              # lane-dense padded output width
FFN_CHUNK = 512              # FFN column chunk streamed per grid step
N_CHUNKS = FFN // FFN_CHUNK  # 4
LN_EPS = 1e-5


def _mm(a, w):
    """a @ w on the MXU: operands cast to bf16, f32 accumulation."""
    return jax.lax.dot_general(
        a.astype(jnp.bfloat16), w.astype(jnp.bfloat16),
        (((1,), (0,)), ((), ())),
        preferred_element_type=jnp.float32)


def transformer_kernel(x_ref, emb_w_ref, emb_b_ref, fc_w_ref, fc_b_ref,
                       in_w_ref, in_b_ref, out_w_ref, out_b_ref,
                       ln1_w_ref, ln1_b_ref, ln2_w_ref, ln2_b_ref,
                       l1_w_ref, l1_b_ref, l2_w_ref, l2_b_ref,
                       o_ref, h_scr, h1_scr, ff_acc):
    l = pl.program_id(0)      # layer index
    c = pl.program_id(1)      # FFN column-chunk index

    def layer_norm(t, w, b):
        mu = jnp.mean(t, axis=-1, keepdims=True)
        d = t - mu
        var = jnp.mean(d * d, axis=-1, keepdims=True)
        return d * jax.lax.rsqrt(var + LN_EPS) * w + b

    # --- embedding: Linear(D_IN -> HIDDEN), very first grid step only ---
    @pl.when(jnp.logical_and(l == 0, c == 0))
    def _():
        h_scr[...] = _mm(x_ref[...], emb_w_ref[...]) + emb_b_ref[...]

    # --- self-attention + norm1: first FFN chunk of every layer ---
    @pl.when(c == 0)
    def _():
        h = h_scr[...]                                       # (N_TOK, H) f32
        qkv = _mm(h, in_w_ref[...]) + in_b_ref[...]          # (N_TOK, 3H) f32
        q = qkv[:, :HIDDEN].reshape(B, S, HIDDEN).astype(jnp.bfloat16)
        k = qkv[:, HIDDEN:2 * HIDDEN].reshape(B, S, HIDDEN).astype(jnp.bfloat16)
        v = qkv[:, 2 * HIDDEN:].reshape(B, S, HIDDEN).astype(jnp.bfloat16)

        scale = 1.0 / math.sqrt(HEAD_DIM)
        ctx_heads = []
        for hh in range(NHEAD):                              # static, 4 heads
            c0 = hh * HEAD_DIM
            qh = q[:, :, c0:c0 + HEAD_DIM]                   # (B, S, hd)
            kh = k[:, :, c0:c0 + HEAD_DIM]
            vh = v[:, :, c0:c0 + HEAD_DIM]
            sc = jnp.einsum('bqd,bkd->bqk', qh, kh,
                            preferred_element_type=jnp.float32) * scale
            sc = sc - jnp.max(sc, axis=-1, keepdims=True)
            p = jnp.exp(sc)
            p = p * pl.reciprocal(jnp.sum(p, axis=-1, keepdims=True))  # exact
            ho = jnp.einsum('bqk,bkd->bqd', p.astype(jnp.bfloat16), vh,
                            preferred_element_type=jnp.float32)        # (B,S,hd)
            ctx_heads.append(ho.reshape(N_TOK, HEAD_DIM))
        ctx = jnp.concatenate(ctx_heads, axis=-1)            # (N_TOK, H)
        attn = _mm(ctx, out_w_ref[...])                      # ONE K=H out-proj
        # out_proj bias folded into the residual add feeding norm1
        h1_scr[...] = layer_norm(h + attn + out_b_ref[...],
                                 ln1_w_ref[...], ln1_b_ref[...])

    # --- feed-forward chunk (every grid step) ---
    h1 = h1_scr[...]                                         # (N_TOK, H) f32
    # bias + ReLU fused, cast to bf16 immediately for the second matmul
    ff = jnp.maximum(_mm(h1, l1_w_ref[...]) + l1_b_ref[...], 0.0
                     ).astype(jnp.bfloat16)                  # (N_TOK, FFN_CHUNK)
    contrib = jax.lax.dot_general(ff, l2_w_ref[...],
                                  (((1,), (0,)), ((), ())),
                                  preferred_element_type=jnp.float32)

    @pl.when(c == 0)
    def _():
        ff_acc[...] = contrib                                # no zeros-init

    @pl.when(c > 0)
    def _():
        ff_acc[...] += contrib

    # --- last chunk: norm2 + hidden-state update ---
    @pl.when(c == N_CHUNKS - 1)
    def _():
        h_scr[...] = layer_norm(h1_scr[...] + ff_acc[...] + l2_b_ref[...],
                                ln2_w_ref[...], ln2_b_ref[...])

    # --- very last grid step: fc head (applied to all tokens, lane/sublane dense) ---
    @pl.when(jnp.logical_and(l == NUM_LAYERS - 1, c == N_CHUNKS - 1))
    def _():
        o_ref[...] = _mm(h_scr[...], fc_w_ref[...]) + fc_b_ref[...]   # (N_TOK, 128)


def transformer_forward(x, kp):
    # zero-pad x to 128 lanes so the embedding matmul is (16,128)x(128,128)
    x_pad = jnp.zeros((N_TOK, D_IN_PAD), jnp.float32).at[:, :D_IN].set(
        x.reshape(N_TOK, D_IN))

    def const2d(shape):
        return pl.BlockSpec(shape, lambda l, c: (0, 0))

    def per_layer(shape):
        return pl.BlockSpec((None,) + shape, lambda l, c: (l, 0, 0))

    grid_spec = pltpu.PrefetchScalarGridSpec(
        num_scalar_prefetch=0,
        grid=(NUM_LAYERS, N_CHUNKS),
        in_specs=[
            const2d((N_TOK, D_IN_PAD)),          # x (padded)
            const2d((D_IN_PAD, HIDDEN)),         # emb_w (padded)
            const2d((1, HIDDEN)),                # emb_b
            const2d((HIDDEN, D_OUT_PAD)),        # fc_w (padded)
            const2d((1, D_OUT_PAD)),             # fc_b (padded)
            per_layer((HIDDEN, 3 * HIDDEN)),     # in_w
            per_layer((1, 3 * HIDDEN)),          # in_b
            per_layer((HIDDEN, HIDDEN)),         # out_w
            per_layer((1, HIDDEN)),              # out_b
            per_layer((1, HIDDEN)),              # ln1_w
            per_layer((1, HIDDEN)),              # ln1_b
            per_layer((1, HIDDEN)),              # ln2_w
            per_layer((1, HIDDEN)),              # ln2_b
            # FFN weights streamed in column chunks -> smaller exposed prefetch
            pl.BlockSpec((None, HIDDEN, FFN_CHUNK), lambda l, c: (l, 0, c)),  # l1_w
            pl.BlockSpec((None, 1, FFN_CHUNK), lambda l, c: (l, 0, c)),       # l1_b
            pl.BlockSpec((None, FFN_CHUNK, HIDDEN), lambda l, c: (l, c, 0)),  # l2_w
            per_layer((1, HIDDEN)),              # l2_b
        ],
        out_specs=pl.BlockSpec((N_TOK, D_OUT_PAD), lambda l, c: (0, 0)),
        scratch_shapes=[pltpu.VMEM((N_TOK, HIDDEN), jnp.float32),   # h (state)
                        pltpu.VMEM((N_TOK, HIDDEN), jnp.float32),   # h1 (post norm1)
                        pltpu.VMEM((N_TOK, HIDDEN), jnp.float32)],  # FFN accum
    )

    out_padded = pl.pallas_call(
        transformer_kernel,
        out_shape=jax.ShapeDtypeStruct((N_TOK, D_OUT_PAD), jnp.float32),
        grid_spec=grid_spec,
        compiler_params=pltpu.CompilerParams(
            dimension_semantics=("arbitrary", "arbitrary")),
    )(x_pad,
      kp["emb_w"], kp["emb_b"], kp["fc_w"], kp["fc_b"],
      kp["in_w"], kp["in_b"], kp["out_w"], kp["out_b"],
      kp["ln1_w"], kp["ln1_b"], kp["ln2_w"], kp["ln2_b"],
      kp["l1_w"], kp["l1_b"], kp["l2_w"], kp["l2_b"])

    # last sequence position per batch (rows S-1, 2S-1, ...), first D_OUT lanes
    return out_padded[S - 1::S, :D_OUT]


# ----- deterministic parameter init (master f32 weights, PyTorch layout) -----
def init_params(key):
    ks = jax.random.split(key, 12)
    s = 0.05

    def n(k, shape):
        return (s * jax.random.normal(k, shape)).astype(jnp.float32)

    return {
        "emb_w": n(ks[0], (HIDDEN, D_IN)),
        "emb_b": n(ks[1], (HIDDEN,)),
        "in_w":  n(ks[2], (NUM_LAYERS, 3 * HIDDEN, HIDDEN)),
        "in_b":  n(ks[3], (NUM_LAYERS, 3 * HIDDEN)),
        "out_w": n(ks[4], (NUM_LAYERS, HIDDEN, HIDDEN)),
        "out_b": n(ks[5], (NUM_LAYERS, HIDDEN)),
        "ln1_w": jnp.ones((NUM_LAYERS, HIDDEN), jnp.float32),
        "ln1_b": jnp.zeros((NUM_LAYERS, HIDDEN), jnp.float32),
        "ln2_w": jnp.ones((NUM_LAYERS, HIDDEN), jnp.float32),
        "ln2_b": jnp.zeros((NUM_LAYERS, HIDDEN), jnp.float32),
        "l1_w":  n(ks[6], (NUM_LAYERS, FFN, HIDDEN)),
        "l1_b":  n(ks[7], (NUM_LAYERS, FFN)),
        "l2_w":  n(ks[8], (NUM_LAYERS, HIDDEN, FFN)),
        "l2_b":  n(ks[9], (NUM_LAYERS, HIDDEN)),
        "fc_w":  n(ks[10], (D_OUT, HIDDEN)),
        "fc_b":  n(ks[11], (D_OUT,)),
    }


# ----- wrapper-side weight prep: transpose to (in, out), cast to bf16, pad -----
def prepare_kernel_params(p):
    bf = jnp.bfloat16
    emb_w = jnp.zeros((D_IN_PAD, HIDDEN), jnp.float32).at[:D_IN, :].set(p["emb_w"].T)
    fc_w = jnp.zeros((HIDDEN, D_OUT_PAD), jnp.float32).at[:, :D_OUT].set(p["fc_w"].T)
    fc_b = jnp.zeros((1, D_OUT_PAD), jnp.float32).at[:, :D_OUT].set(p["fc_b"][None, :])
    return {
        "emb_w": emb_w.astype(bf),                                 # (128, H)
        "emb_b": p["emb_b"][None, :],                              # (1, H) f32
        "in_w":  jnp.transpose(p["in_w"], (0, 2, 1)).astype(bf),   # (L, H, 3H)
        "in_b":  p["in_b"][:, None, :],                            # (L, 1, 3H)
        "out_w": jnp.transpose(p["out_w"], (0, 2, 1)).astype(bf),  # (L, H, H)
        "out_b": p["out_b"][:, None, :],
        "ln1_w": p["ln1_w"][:, None, :],
        "ln1_b": p["ln1_b"][:, None, :],
        "ln2_w": p["ln2_w"][:, None, :],
        "ln2_b": p["ln2_b"][:, None, :],
        "l1_w":  jnp.transpose(p["l1_w"], (0, 2, 1)).astype(bf),   # (L, H, FFN)
        "l1_b":  p["l1_b"][:, None, :],
        "l2_w":  jnp.transpose(p["l2_w"], (0, 2, 1)).astype(bf),   # (L, FFN, H)
        "l2_b":  p["l2_b"][:, None, :],
        "fc_w":  fc_w.astype(bf),                                  # (H, 128)
        "fc_b":  fc_b,                                             # (1, 128)
    }


# ----- pure-JAX f32 reference (mirrors PyTorch eval forward) -----
def reference_forward(x, p):
    def ln(t, w, b):
        mu = jnp.mean(t, axis=-1, keepdims=True)
        var = jnp.mean((t - mu) ** 2, axis=-1, keepdims=True)
        return (t - mu) / jnp.sqrt(var + LN_EPS) * w + b

    h = x.reshape(N_TOK, D_IN) @ p["emb_w"].T + p["emb_b"]
    for l in range(NUM_LAYERS):
        qkv = h @ p["in_w"][l].T + p["in_b"][l]
        q, k, v = (qkv[:, :HIDDEN], qkv[:, HIDDEN:2 * HIDDEN], qkv[:, 2 * HIDDEN:])
        split = lambda t: t.reshape(B, S, NHEAD, HEAD_DIM)
        qh, kh, vh = split(q), split(k), split(v)
        sc = jnp.einsum("bshd,bthd->bhst", qh, kh) / math.sqrt(HEAD_DIM)
        pa = jax.nn.softmax(sc, axis=-1)
        ao = jnp.einsum("bhst,bthd->bshd", pa, vh).reshape(N_TOK, HIDDEN)
        ao = ao @ p["out_w"][l].T + p["out_b"][l]
        h = ln(h + ao, p["ln1_w"][l], p["ln1_b"][l])
        ff = jax.nn.relu(h @ p["l1_w"][l].T + p["l1_b"][l])
        ff = ff @ p["l2_w"][l].T + p["l2_b"][l]
        h = ln(h + ff, p["ln2_w"][l], p["ln2_b"][l])
    last = h.reshape(B, S, HIDDEN)[:, -1, :]
    return last @ p["fc_w"].T + p["fc_b"]


if __name__ == "__main__":
    key = jax.random.PRNGKey(0)
    k_x, k_p = jax.random.split(key)
    x = jax.random.normal(k_x, (B, S, D_IN), dtype=jnp.float32)
    params = init_params(k_p)
    kparams = prepare_kernel_params(params)

    out = transformer_forward(x, kparams)
    out = jax.block_until_ready(out)

    ref = reference_forward(x, params)
    err = float(jnp.max(jnp.abs(out - ref)))
    assert out.shape == (B, D_OUT)
    # tolerance is loose because kernel matmuls run with bf16 operands (f32 accum)
    assert err < 5e-2, f"max abs diff vs reference too large: {err}"
    print("KERNEL_OK")
</pallas_src>

<mosaic_0001>
module attributes {stable_mosaic.version = 11 : i64} {
  func.func @transformer_kernel(%arg0: i32, %arg1: i32, %arg2: memref<16x128xf32, #tpu.memory_space<vmem>>, %arg3: memref<128x128xbf16, #tpu.memory_space<vmem>>, %arg4: memref<1x128xf32, #tpu.memory_space<vmem>>, %arg5: memref<128x128xbf16, #tpu.memory_space<vmem>>, %arg6: memref<1x128xf32, #tpu.memory_space<vmem>>, %arg7: memref<1x128x384xbf16, #tpu.memory_space<vmem>>, %arg8: memref<1x1x384xf32, #tpu.memory_space<vmem>>, %arg9: memref<1x128x128xbf16, #tpu.memory_space<vmem>>, %arg10: memref<1x1x128xf32, #tpu.memory_space<vmem>>, %arg11: memref<1x1x128xf32, #tpu.memory_space<vmem>>, %arg12: memref<1x1x128xf32, #tpu.memory_space<vmem>>, %arg13: memref<1x1x128xf32, #tpu.memory_space<vmem>>, %arg14: memref<1x1x128xf32, #tpu.memory_space<vmem>>, %arg15: memref<1x128x512xbf16, #tpu.memory_space<vmem>>, %arg16: memref<1x1x512xf32, #tpu.memory_space<vmem>>, %arg17: memref<1x512x128xbf16, #tpu.memory_space<vmem>>, %arg18: memref<1x1x128xf32, #tpu.memory_space<vmem>>, %arg19: memref<16x128xf32, #tpu.memory_space<vmem>>, %arg20: memref<16x128xf32, #tpu.memory_space<vmem>>, %arg21: memref<16x128xf32, #tpu.memory_space<vmem>>, %arg22: memref<16x128xf32, #tpu.memory_space<vmem>>) attributes {dimension_semantics = [#tpu.dimension_semantics<arbitrary>, #tpu.dimension_semantics<arbitrary>], iteration_bounds = array<i64: 2, 4>, scalar_prefetch = 0 : i64, scratch_operands = 3 : i64, tpu.core_type = #tpu.core_type<tc>, window_params = [{pipeline_mode = #tpu.pipeline_mode<synchronous>, transform_indices = @transform_0, window_bounds = array<i64: 16, 128>}, {pipeline_mode = #tpu.pipeline_mode<synchronous>, transform_indices = @transform_1, window_bounds = array<i64: 128, 128>}, {pipeline_mode = #tpu.pipeline_mode<synchronous>, transform_indices = @transform_2, window_bounds = array<i64: 1, 128>}, {pipeline_mode = #tpu.pipeline_mode<synchronous>, transform_indices = @transform_3, window_bounds = array<i64: 128, 128>}, {pipeline_mode = #tpu.pipeline_mode<synchronous>, transform_indices = @transform_4, window_bounds = array<i64: 1, 128>}, {transform_indices = @transform_5, window_bounds = array<i64: 1, 128, 384>}, {transform_indices = @transform_6, window_bounds = array<i64: 1, 1, 384>}, {transform_indices = @transform_7, window_bounds = array<i64: 1, 128, 128>}, {transform_indices = @transform_8, window_bounds = array<i64: 1, 1, 128>}, {transform_indices = @transform_9, window_bounds = array<i64: 1, 1, 128>}, {transform_indices = @transform_10, window_bounds = array<i64: 1, 1, 128>}, {transform_indices = @transform_11, window_bounds = array<i64: 1, 1, 128>}, {transform_indices = @transform_12, window_bounds = array<i64: 1, 1, 128>}, {transform_indices = @transform_13, window_bounds = array<i64: 1, 128, 512>}, {transform_indices = @transform_14, window_bounds = array<i64: 1, 1, 512>}, {transform_indices = @transform_15, window_bounds = array<i64: 1, 512, 128>}, {transform_indices = @transform_16, window_bounds = array<i64: 1, 1, 128>}, {pipeline_mode = #tpu.pipeline_mode<synchronous>, transform_indices = @transform_17, window_bounds = array<i64: 16, 128>}]} {
    %c0_i32 = arith.constant 0 : i32
    %0 = arith.cmpi eq, %arg0, %c0_i32 : i32
    %c0_i32_0 = arith.constant 0 : i32
    %1 = arith.cmpi eq, %arg1, %c0_i32_0 : i32
    %2 = arith.andi %0, %1 : i1
    %3 = arith.extui %2 : i1 to i32
    %c0_i32_1 = arith.constant 0 : i32
    %4 = arith.cmpi ne, %3, %c0_i32_1 : i32
    scf.if %4 {
      %c0_23 = arith.constant 0 : index
      %c0_24 = arith.constant 0 : index
      %37 = vector.load %arg2[%c0_23, %c0_24] : memref<16x128xf32, #tpu.memory_space<vmem>>, vector<16x128xf32>
      %c0_25 = arith.constant 0 : index
      %c0_26 = arith.constant 0 : index
      %38 = vector.load %arg3[%c0_25, %c0_26] : memref<128x128xbf16, #tpu.memory_space<vmem>>, vector<128x128xbf16>
      %39 = arith.truncf %37 : vector<16x128xf32> to vector<16x128xbf16>
      %cst_27 = arith.constant dense<0.000000e+00> : vector<16x128xf32>
      %40 = tpu.matmul %39, %38, %cst_27 {dimension_numbers = #tpu.dot_dimension_numbers<[1], [0], [0], [1], [0, 0, 1, 1], [], []>} : vector<16x128xbf16>, vector<128x128xbf16>, vector<16x128xf32> -> vector<16x128xf32>
      %c0_28 = arith.constant 0 : index
      %c0_29 = arith.constant 0 : index
      %41 = vector.load %arg4[%c0_28, %c0_29] : memref<1x128xf32, #tpu.memory_space<vmem>>, vector<1x128xf32>
      %42 = vector.broadcast %41 : vector<1x128xf32> to vector<16x128xf32>
      %43 = arith.addf %40, %42 : vector<16x128xf32>
      %c0_30 = arith.constant 0 : index
      %c0_31 = arith.constant 0 : index
      %44 = vector.load %arg20[%c0_30, %c0_31] : memref<16x128xf32, #tpu.memory_space<vmem>>, vector<16x128xf32>
      tpu.vector_store %arg20[%c0_30, %c0_31], %43 {strides = array<i32>} : memref<16x128xf32, #tpu.memory_space<vmem>>, vector<16x128xf32>,
    } else {
    }
    %c0_i32_2 = arith.constant 0 : i32
    %5 = arith.cmpi eq, %arg1, %c0_i32_2 : i32
    %6 = arith.extui %5 : i1 to i32
    %c0_i32_3 = arith.constant 0 : i32
    %7 = arith.cmpi ne, %6, %c0_i32_3 : i32
    scf.if %7 {
      %c0_23 = arith.constant 0 : index
      %c0_24 = arith.constant 0 : index
      %37 = vector.load %arg20[%c0_23, %c0_24] : memref<16x128xf32, #tpu.memory_space<vmem>>, vector<16x128xf32>
      %c0_25 = arith.constant 0 : index
      %c0_26 = arith.constant 0 : index
      %c0_27 = arith.constant 0 : index
      %38 = vector.load %arg7[%c0_25, %c0_26, %c0_27] : memref<1x128x384xbf16, #tpu.memory_space<vmem>>, vector<1x128x384xbf16>
      %39 = vector.shape_cast %38 : vector<1x128x384xbf16> to vector<128x384xbf16>
      %40 = arith.truncf %37 : vector<16x128xf32> to vector<16x128xbf16>
      %cst_28 = arith.constant dense<0.000000e+00> : vector<16x384xf32>
      %41 = tpu.matmul %40, %39, %cst_28 {dimension_numbers = #tpu.dot_dimension_numbers<[1], [0], [0], [1], [0, 0, 1, 1], [], []>} : vector<16x128xbf16>, vector<128x384xbf16>, vector<16x384xf32> -> vector<16x384xf32>
      %c0_29 = arith.constant 0 : index
      %c0_30 = arith.constant 0 : index
      %c0_31 = arith.constant 0 : index
      %42 = vector.load %arg8[%c0_29, %c0_30, %c0_31] : memref<1x1x384xf32, #tpu.memory_space<vmem>>, vector<1x1x384xf32>
      %43 = vector.shape_cast %42 : vector<1x1x384xf32> to vector<1x384xf32>
      %44 = vector.broadcast %43 : vector<1x384xf32> to vector<16x384xf32>
      %45 = arith.addf %41, %44 : vector<16x384xf32>
      %46 = vector.extract_strided_slice %45 {offsets = [0, 0], sizes = [16, 128], strides = [1, 1]} : vector<16x384xf32> to vector<16x128xf32>
      %47 = vector.shape_cast %46 : vector<16x128xf32> to vector<2x8x128xf32>
      %48 = arith.truncf %47 : vector<2x8x128xf32> to vector<2x8x128xbf16>
      %49 = vector.extract_strided_slice %45 {offsets = [0, 128], sizes = [16, 128], strides = [1, 1]} : vector<16x384xf32> to vector<16x128xf32>
      %50 = vector.shape_cast %49 : vector<16x128xf32> to vector<2x8x128xf32>
      %51 = arith.truncf %50 : vector<2x8x128xf32> to vector<2x8x128xbf16>
      %52 = vector.extract_strided_slice %45 {offsets = [0, 256], sizes = [16, 128], strides = [1, 1]} : vector<16x384xf32> to vector<16x128xf32>
      %53 = vector.shape_cast %52 : vector<16x128xf32> to vector<2x8x128xf32>
      %54 = arith.truncf %53 : vector<2x8x128xf32> to vector<2x8x128xbf16>
      %55 = vector.extract_strided_slice %48 {offsets = [0, 0, 0], sizes = [2, 8, 32], strides = [1, 1, 1]} : vector<2x8x128xbf16> to vector<2x8x32xbf16>
      %56 = vector.extract_strided_slice %51 {offsets = [0, 0, 0], sizes = [2, 8, 32], strides = [1, 1, 1]} : vector<2x8x128xbf16> to vector<2x8x32xbf16>
      %57 = vector.extract_strided_slice %54 {offsets = [0, 0, 0], sizes = [2, 8, 32], strides = [1, 1, 1]} : vector<2x8x128xbf16> to vector<2x8x32xbf16>
      "tpu.trace_start"() <{level = 10 : i32, message = "bqd,bkd->bqk"}> : () -> ()
      %cst_32 = arith.constant dense<0.000000e+00> : vector<2x8x8xf32>
      %58 = tpu.matmul %55, %56, %cst_32 {dimension_numbers = #tpu.dot_dimension_numbers<[2], [2], [1], [1], [0, 0, 0, 1, 1, 1], [0], [0]>} : vector<2x8x32xbf16>, vector<2x8x32xbf16>, vector<2x8x8xf32> -> vector<2x8x8xf32>
      "tpu.trace_stop"() : () -> ()
      %cst_33 = arith.constant 0.176776692 : f32
      %59 = vector.broadcast %cst_33 : f32 to vector<2x8x8xf32>
      %60 = arith.mulf %58, %59 : vector<2x8x8xf32>
      %cst_34 = arith.constant dense<0xFF800000> : vector<2x8xf32>
      %61 = vector.multi_reduction <maximumf>, %60, %cst_34 [2] : vector<2x8x8xf32> to vector<2x8xf32>
      %62 = vector.shape_cast %61 : vector<2x8xf32> to vector<2x8x1xf32>
      %63 = vector.broadcast %62 : vector<2x8x1xf32> to vector<2x8x8xf32>
      %64 = arith.subf %60, %63 : vector<2x8x8xf32>
      %65 = math.exp %64 : vector<2x8x8xf32>
      %cst_35 = arith.constant dense<0.000000e+00> : vector<2x8xf32>
      %66 = vector.multi_reduction <add>, %65, %cst_35 [2] : vector<2x8x8xf32> to vector<2x8xf32>
      %67 = vector.shape_cast %66 : vector<2x8xf32> to vector<2x8x1xf32>
      %68 = tpu.reciprocal %67 : vector<2x8x1xf32> -> vector<2x8x1xf32>
      %69 = vector.broadcast %68 : vector<2x8x1xf32> to vector<2x8x8xf32>
      %70 = arith.mulf %65, %69 : vector<2x8x8xf32>
      %71 = arith.truncf %70 : vector<2x8x8xf32> to vector<2x8x8xbf16>
      "tpu.trace_start"() <{level = 10 : i32, message = "bqk,bkd->bqd"}> : () -> ()
      %cst_36 = arith.constant dense<0.000000e+00> : vector<2x8x32xf32>
      %72 = tpu.matmul %71, %57, %cst_36 {dimension_numbers = #tpu.dot_dimension_numbers<[2], [1], [1], [2], [0, 0, 0, 1, 1, 2], [0], [0]>} : vector<2x8x8xbf16>, vector<2x8x32xbf16>, vector<2x8x32xf32> -> vector<2x8x32xf32>
      "tpu.trace_stop"() : () -> ()
      %73 = vector.shape_cast %72 : vector<2x8x32xf32> to vector<16x32xf32>
      %74 = vector.extract_strided_slice %48 {offsets = [0, 0, 32], sizes = [2, 8, 32], strides = [1, 1, 1]} : vector<2x8x128xbf16> to vector<2x8x32xbf16>
      %75 = vector.extract_strided_slice %51 {offsets = [0, 0, 32], sizes = [2, 8, 32], strides = [1, 1, 1]} : vector<2x8x128xbf16> to vector<2x8x32xbf16>
      %76 = vector.extract_strided_slice %54 {offsets = [0, 0, 32], sizes = [2, 8, 32], strides = [1, 1, 1]} : vector<2x8x128xbf16> to vector<2x8x32xbf16>
      "tpu.trace_start"() <{level = 10 : i32, message = "bqd,bkd->bqk"}> : () -> ()
      %cst_37 = arith.constant dense<0.000000e+00> : vector<2x8x8xf32>
      %77 = tpu.matmul %74, %75, %cst_37 {dimension_numbers = #tpu.dot_dimension_numbers<[2], [2], [1], [1], [0, 0, 0, 1, 1, 1], [0], [0]>} : vector<2x8x32xbf16>, vector<2x8x32xbf16>, vector<2x8x8xf32> -> vector<2x8x8xf32>
      "tpu.trace_stop"() : () -> ()
      %cst_38 = arith.constant 0.176776692 : f32
      %78 = vector.broadcast %cst_38 : f32 to vector<2x8x8xf32>
      %79 = arith.mulf %77, %78 : vector<2x8x8xf32>
      %cst_39 = arith.constant dense<0xFF800000> : vector<2x8xf32>
      %80 = vector.multi_reduction <maximumf>, %79, %cst_39 [2] : vector<2x8x8xf32> to vector<2x8xf32>
      %81 = vector.shape_cast %80 : vector<2x8xf32> to vector<2x8x1xf32>
      %82 = vector.broadcast %81 : vector<2x8x1xf32> to vector<2x8x8xf32>
      %83 = arith.subf %79, %82 : vector<2x8x8xf32>
      %84 = math.exp %83 : vector<2x8x8xf32>
      %cst_40 = arith.constant dense<0.000000e+00> : vector<2x8xf32>
      %85 = vector.multi_reduction <add>, %84, %cst_40 [2] : vector<2x8x8xf32> to vector<2x8xf32>
      %86 = vector.shape_cast %85 : vector<2x8xf32> to vector<2x8x1xf32>
      %87 = tpu.reciprocal %86 : vector<2x8x1xf32> -> vector<2x8x1xf32>
      %88 = vector.broadcast %87 : vector<2x8x1xf32> to vector<2x8x8xf32>
      %89 = arith.mulf %84, %88 : vector<2x8x8xf32>
      %90 = arith.truncf %89 : vector<2x8x8xf32> to vector<2x8x8xbf16>
      "tpu.trace_start"() <{level = 10 : i32, message = "bqk,bkd->bqd"}> : () -> ()
      %cst_41 = arith.constant dense<0.000000e+00> : vector<2x8x32xf32>
      %91 = tpu.matmul %90, %76, %cst_41 {dimension_numbers = #tpu.dot_dimension_numbers<[2], [1], [1], [2], [0, 0, 0, 1, 1, 2], [0], [0]>} : vector<2x8x8xbf16>, vector<2x8x32xbf16>, vector<2x8x32xf32> -> vector<2x8x32xf32>
      "tpu.trace_stop"() : () -> ()
      %92 = vector.shape_cast %91 : vector<2x8x32xf32> to vector<16x32xf32>
      %93 = vector.extract_strided_slice %48 {offsets = [0, 0, 64], sizes = [2, 8, 32], strides = [1, 1, 1]} : vector<2x8x128xbf16> to vector<2x8x32xbf16>
      %94 = vector.extract_strided_slice %51 {offsets = [0, 0, 64], sizes = [2, 8, 32], strides = [1, 1, 1]} : vector<2x8x128xbf16> to vector<2x8x32xbf16>
      %95 = vector.extract_strided_slice %54 {offsets = [0, 0, 64], sizes = [2, 8, 32], strides = [1, 1, 1]} : vector<2x8x128xbf16> to vector<2x8x32xbf16>
      "tpu.trace_start"() <{level = 10 : i32, message = "bqd,bkd->bqk"}> : () -> ()
      %cst_42 = arith.constant dense<0.000000e+00> : vector<2x8x8xf32>
      %96 = tpu.matmul %93, %94, %cst_42 {dimension_numbers = #tpu.dot_dimension_numbers<[2], [2], [1], [1], [0, 0, 0, 1, 1, 1], [0], [0]>} : vector<2x8x32xbf16>, vector<2x8x32xbf16>, vector<2x8x8xf32> -> vector<2x8x8xf32>
      "tpu.trace_stop"() : () -> ()
      %cst_43 = arith.constant 0.176776692 : f32
      %97 = vector.broadcast %cst_43 : f32 to vector<2x8x8xf32>
      %98 = arith.mulf %96, %97 : vector<2x8x8xf32>
      %cst_44 = arith.constant dense<0xFF800000> : vector<2x8xf32>
      %99 = vector.multi_reduction <maximumf>, %98, %cst_44 [2] : vector<2x8x8xf32> to vector<2x8xf32>
      %100 = vector.shape_cast %99 : vector<2x8xf32> to vector<2x8x1xf32>
      %101 = vector.broadcast %100 : vector<2x8x1xf32> to vector<2x8x8xf32>
      %102 = arith.subf %98, %101 : vector<2x8x8xf32>
      %103 = math.exp %102 : vector<2x8x8xf32>
      %cst_45 = arith.constant dense<0.000000e+00> : vector<2x8xf32>
      %104 = vector.multi_reduction <add>, %103, %cst_45 [2] : vector<2x8x8xf32> to vector<2x8xf32>
      %105 = vector.shape_cast %104 : vector<2x8xf32> to vector<2x8x1xf32>
      %106 = tpu.reciprocal %105 : vector<2x8x1xf32> -> vector<2x8x1xf32>
      %107 = vector.broadcast %106 : vector<2x8x1xf32> to vector<2x8x8xf32>
      %108 = arith.mulf %103, %107 : vector<2x8x8xf32>
      %109 = arith.truncf %108 : vector<2x8x8xf32> to vector<2x8x8xbf16>
      "tpu.trace_start"() <{level = 10 : i32, message = "bqk,bkd->bqd"}> : () -> ()
      %cst_46 = arith.constant dense<0.000000e+00> : vector<2x8x32xf32>
      %110 = tpu.matmul %109, %95, %cst_46 {dimension_numbers = #tpu.dot_dimension_numbers<[2], [1], [1], [2], [0, 0, 0, 1, 1, 2], [0], [0]>} : vector<2x8x8xbf16>, vector<2x8x32xbf16>, vector<2x8x32xf32> -> vector<2x8x32xf32>
      "tpu.trace_stop"() : () -> ()
      %111 = vector.shape_cast %110 : vector<2x8x32xf32> to vector<16x32xf32>
      %112 = vector.extract_strided_slice %48 {offsets = [0, 0, 96], sizes = [2, 8, 32], strides = [1, 1, 1]} : vector<2x8x128xbf16> to vector<2x8x32xbf16>
      %113 = vector.extract_strided_slice %51 {offsets = [0, 0, 96], sizes = [2, 8, 32], strides = [1, 1, 1]} : vector<2x8x128xbf16> to vector<2x8x32xbf16>
      %114 = vector.extract_strided_slice %54 {offsets = [0, 0, 96], sizes = [2, 8, 32], strides = [1, 1, 1]} : vector<2x8x128xbf16> to vector<2x8x32xbf16>
      "tpu.trace_start"() <{level = 10 : i32, message = "bqd,bkd->bqk"}> : () -> ()
      %cst_47 = arith.constant dense<0.000000e+00> : vector<2x8x8xf32>
      %115 = tpu.matmul %112, %113, %cst_47 {dimension_numbers = #tpu.dot_dimension_numbers<[2], [2], [1], [1], [0, 0, 0, 1, 1, 1], [0], [0]>} : vector<2x8x32xbf16>, vector<2x8x32xbf16>, vector<2x8x8xf32> -> vector<2x8x8xf32>
      "tpu.trace_stop"() : () -> ()
      %cst_48 = arith.constant 0.176776692 : f32
      %116 = vector.broadcast %cst_48 : f32 to vector<2x8x8xf32>
      %117 = arith.mulf %115, %116 : vector<2x8x8xf32>
      %cst_49 = arith.constant dense<0xFF800000> : vector<2x8xf32>
      %118 = vector.multi_reduction <maximumf>, %117, %cst_49 [2] : vector<2x8x8xf32> to vector<2x8xf32>
      %119 = vector.shape_cast %118 : vector<2x8xf32> to vector<2x8x1xf32>
      %120 = vector.broadcast %119 : vector<2x8x1xf32> to vector<2x8x8xf32>
      %121 = arith.subf %117, %120 : vector<2x8x8xf32>
      %122 = math.exp %121 : vector<2x8x8xf32>
      %cst_50 = arith.constant dense<0.000000e+00> : vector<2x8xf32>
      %123 = vector.multi_reduction <add>, %122, %cst_50 [2] : vector<2x8x8xf32> to vector<2x8xf32>
      %124 = vector.shape_cast %123 : vector<2x8xf32> to vector<2x8x1xf32>
      %125 = tpu.reciprocal %124 : vector<2x8x1xf32> -> vector<2x8x1xf32>
      %126 = vector.broadcast %125 : vector<2x8x1xf32> to vector<2x8x8xf32>
      %127 = arith.mulf %122, %126 : vector<2x8x8xf32>
      %128 = arith.truncf %127 : vector<2x8x8xf32> to vector<2x8x8xbf16>
      "tpu.trace_start"() <{level = 10 : i32, message = "bqk,bkd->bqd"}> : () -> ()
      %cst_51 = arith.constant dense<0.000000e+00> : vector<2x8x32xf32>
      %129 = tpu.matmul %128, %114, %cst_51 {dimension_numbers = #tpu.dot_dimension_numbers<[2], [1], [1], [2], [0, 0, 0, 1, 1, 2], [0], [0]>} : vector<2x8x8xbf16>, vector<2x8x32xbf16>, vector<2x8x32xf32> -> vector<2x8x32xf32>
      "tpu.trace_stop"() : () -> ()
      %130 = vector.shape_cast %129 : vector<2x8x32xf32> to vector<16x32xf32>
      %131 = tpu.concatenate %73, %92, %111, %130 in 1 : vector<16x32xf32>, vector<16x32xf32>, vector<16x32xf32>, vector<16x32xf32> -> vector<16x128xf32>
      %c0_52 = arith.constant 0 : index
      %c0_53 = arith.constant 0 : index
      %c0_54 = arith.constant 0 : index
      %132 = vector.load %arg9[%c0_52, %c0_53, %c0_54] : memref<1x128x128xbf16, #tpu.memory_space<vmem>>, vector<1x128x128xbf16>
      %133 = vector.shape_cast %132 : vector<1x128x128xbf16> to vector<128x128xbf16>
      %134 = arith.truncf %131 : vector<16x128xf32> to vector<16x128xbf16>
      %cst_55 = arith.constant dense<0.000000e+00> : vector<16x128xf32>
      %135 = tpu.matmul %134, %133, %cst_55 {dimension_numbers = #tpu.dot_dimension_numbers<[1], [0], [0], [1], [0, 0, 1, 1], [], []>} : vector<16x128xbf16>, vector<128x128xbf16>, vector<16x128xf32> -> vector<16x128xf32>
      %136 = arith.addf %37, %135 : vector<16x128xf32>
      %c0_56 = arith.constant 0 : index
      %c0_57 = arith.constant 0 : index
      %c0_58 = arith.constant 0 : index
      %137 = vector.load %arg10[%c0_56, %c0_57, %c0_58] : memref<1x1x128xf32, #tpu.memory_space<vmem>>, vector<1x1x128xf32>
      %138 = vector.shape_cast %137 : vector<1x1x128xf32> to vector<1x128xf32>
      %139 = vector.broadcast %138 : vector<1x128xf32> to vector<16x128xf32>
      %140 = arith.addf %136, %139 : vector<16x128xf32>
      %c0_59 = arith.constant 0 : index
      %c0_60 = arith.constant 0 : index
      %c0_61 = arith.constant 0 : index
      %141 = vector.load %arg11[%c0_59, %c0_60, %c0_61] : memref<1x1x128xf32, #tpu.memory_space<vmem>>, vector<1x1x128xf32>
      %142 = vector.shape_cast %141 : vector<1x1x128xf32> to vector<1x128xf32>
      %c0_62 = arith.constant 0 : index
      %c0_63 = arith.constant 0 : index
      %c0_64 = arith.constant 0 : index
      %143 = vector.load %arg12[%c0_62, %c0_63, %c0_64] : memref<1x1x128xf32, #tpu.memory_space<vmem>>, vector<1x1x128xf32>
      %144 = vector.shape_cast %143 : vector<1x1x128xf32> to vector<1x128xf32>
      %cst_65 = arith.constant dense<0.000000e+00> : vector<16xf32>
      %145 = vector.multi_reduction <add>, %140, %cst_65 [1] : vector<16x128xf32> to vector<16xf32>
      %146 = vector.shape_cast %145 : vector<16xf32> to vector<16x1xf32>
      %cst_66 = arith.constant 1.280000e+02 : f32
      %147 = vector.broadcast %cst_66 : f32 to vector<16x1xf32>
      %148 = arith.divf %146, %147 : vector<16x1xf32>
      %149 = vector.broadcast %148 : vector<16x1xf32> to vector<16x128xf32>
      %150 = arith.subf %140, %149 : vector<16x128xf32>
      %151 = arith.mulf %150, %150 : vector<16x128xf32>
      %cst_67 = arith.constant dense<0.000000e+00> : vector<16xf32>
      %152 = vector.multi_reduction <add>, %151, %cst_67 [1] : vector<16x128xf32> to vector<16xf32>
      %153 = vector.shape_cast %152 : vector<16xf32> to vector<16x1xf32>
      %cst_68 = arith.constant 1.280000e+02 : f32
      %154 = vector.broadcast %cst_68 : f32 to vector<16x1xf32>
      %155 = arith.divf %153, %154 : vector<16x1xf32>
      %cst_69 = arith.constant 9.99999974E-6 : f32
      %156 = vector.broadcast %cst_69 : f32 to vector<16x1xf32>
      %157 = arith.addf %155, %156 : vector<16x1xf32>
      %158 = math.rsqrt %157 : vector<16x1xf32>
      %159 = vector.broadcast %158 : vector<16x1xf32> to vector<16x128xf32>
      %160 = arith.mulf %150, %159 : vector<16x128xf32>
      %161 = vector.broadcast %142 : vector<1x128xf32> to vector<16x128xf32>
      %162 = arith.mulf %160, %161 : vector<16x128xf32>
      %163 = vector.broadcast %144 : vector<1x128xf32> to vector<16x128xf32>
      %164 = arith.addf %162, %163 : vector<16x128xf32>
      %c0_70 = arith.constant 0 : index
      %c0_71 = arith.constant 0 : index
      %165 = vector.load %arg21[%c0_70, %c0_71] : memref<16x128xf32, #tpu.memory_space<vmem>>, vector<16x128xf32>
      tpu.vector_store %arg21[%c0_70, %c0_71], %164 {strides = array<i32>} : memref<16x128xf32, #tpu.memory_space<vmem>>, vector<16x128xf32>,
    } else {
    }
    %c0 = arith.constant 0 : index
    %c0_4 = arith.constant 0 : index
    %8 = vector.load %arg21[%c0, %c0_4] : memref<16x128xf32, #tpu.memory_space<vmem>>, vector<16x128xf32>
    %c0_5 = arith.constant 0 : index
    %c0_6 = arith.constant 0 : index
    %c0_7 = arith.constant 0 : index
    %9 = vector.load %arg15[%c0_5, %c0_6, %c0_7] : memref<1x128x512xbf16, #tpu.memory_space<vmem>>, vector<1x128x512xbf16>
    %10 = vector.shape_cast %9 : vector<1x128x512xbf16> to vector<128x512xbf16>
    %11 = arith.truncf %8 : vector<16x128xf32> to vector<16x128xbf16>
    %cst = arith.constant dense<0.000000e+00> : vector<16x512xf32>
    %12 = tpu.matmul %11, %10, %cst {dimension_numbers = #tpu.dot_dimension_numbers<[1], [0], [0], [1], [0, 0, 1, 1], [], []>} : vector<16x128xbf16>, vector<128x512xbf16>, vector<16x512xf32> -> vector<16x512xf32>
    %c0_8 = arith.constant 0 : index
    %c0_9 = arith.constant 0 : index
    %c0_10 = arith.constant 0 : index
    %13 = vector.load %arg16[%c0_8, %c0_9, %c0_10] : memref<1x1x512xf32, #tpu.memory_space<vmem>>, vector<1x1x512xf32>
    %14 = vector.shape_cast %13 : vector<1x1x512xf32> to vector<1x512xf32>
    %15 = vector.broadcast %14 : vector<1x512xf32> to vector<16x512xf32>
    %16 = arith.addf %12, %15 : vector<16x512xf32>
    %cst_11 = arith.constant 0.000000e+00 : f32
    %17 = vector.broadcast %cst_11 : f32 to vector<16x512xf32>
    %18 = arith.maximumf %16, %17 : vector<16x512xf32>
    %19 = arith.truncf %18 : vector<16x512xf32> to vector<16x512xbf16>
    %c0_12 = arith.constant 0 : index
    %c0_13 = arith.constant 0 : index
    %c0_14 = arith.constant 0 : index
    %20 = vector.load %arg17[%c0_12, %c0_13, %c0_14] : memref<1x512x128xbf16, #tpu.memory_space<vmem>>, vector<1x512x128xbf16>
    %21 = vector.shape_cast %20 : vector<1x512x128xbf16> to vector<512x128xbf16>
    %cst_15 = arith.constant dense<0.000000e+00> : vector<16x128xf32>
    %22 = tpu.matmul %19, %21, %cst_15 {dimension_numbers = #tpu.dot_dimension_numbers<[1], [0], [0], [1], [0, 0, 1, 1], [], []>} : vector<16x512xbf16>, vector<512x128xbf16>, vector<16x128xf32> -> vector<16x128xf32>
    %c0_i32_16 = arith.constant 0 : i32
    %23 = arith.cmpi eq, %arg1, %c0_i32_16 : i32
    %24 = arith.extui %23 : i1 to i32
    %c0_i32_17 = arith.constant 0 : i32
    %25 = arith.cmpi ne, %24, %c0_i32_17 : i32
    scf.if %25 {
      %c0_23 = arith.constant 0 : index
      %c0_24 = arith.constant 0 : index
      %37 = vector.load %arg22[%c0_23, %c0_24] : memref<16x128xf32, #tpu.memory_space<vmem>>, vector<16x128xf32>
      tpu.vector_store %arg22[%c0_23, %c0_24], %22 {strides = array<i32>} : memref<16x128xf32, #tpu.memory_space<vmem>>, vector<16x128xf32>,
    } else {
    }
    %c0_i32_18 = arith.constant 0 : i32
    %26 = arith.cmpi sgt, %arg1, %c0_i32_18 : i32
    %27 = arith.extui %26 : i1 to i32
    %c0_i32_19 = arith.constant 0 : i32
    %28 = arith.cmpi ne, %27, %c0_i32_19 : i32
    scf.if %28 {
      %c0_23 = arith.constant 0 : index
      %c0_24 = arith.constant 0 : index
      %37 = vector.load %arg22[%c0_23, %c0_24] : memref<16x128xf32, #tpu.memory_space<vmem>>, vector<16x128xf32>
      %38 = arith.addf %37, %22 : vector<16x128xf32>
      %c0_25 = arith.constant 0 : index
      %c0_26 = arith.constant 0 : index
      %39 = vector.load %arg22[%c0_25, %c0_26] : memref<16x128xf32, #tpu.memory_space<vmem>>, vector<16x128xf32>
      tpu.vector_store %arg22[%c0_25, %c0_26], %38 {strides = array<i32>} : memref<16x128xf32, #tpu.memory_space<vmem>>, vector<16x128xf32>,
    } else {
    }
    %c3_i32 = arith.constant 3 : i32
    %29 = arith.cmpi eq, %arg1, %c3_i32 : i32
    %30 = arith.extui %29 : i1 to i32
    %c0_i32_20 = arith.constant 0 : i32
    %31 = arith.cmpi ne, %30, %c0_i32_20 : i32
    scf.if %31 {
      %c0_23 = arith.constant 0 : index
      %c0_24 = arith.constant 0 : index
      %37 = vector.load %arg21[%c0_23, %c0_24] : memref<16x128xf32, #tpu.memory_space<vmem>>, vector<16x128xf32>
      %c0_25 = arith.constant 0 : index
      %c0_26 = arith.constant 0 : index
      %38 = vector.load %arg22[%c0_25, %c0_26] : memref<16x128xf32, #tpu.memory_space<vmem>>, vector<16x128xf32>
      %39 = arith.addf %37, %38 : vector<16x128xf32>
      %c0_27 = arith.constant 0 : index
      %c0_28 = arith.constant 0 : index
      %c0_29 = arith.constant 0 : index
      %40 = vector.load %arg18[%c0_27, %c0_28, %c0_29] : memref<1x1x128xf32, #tpu.memory_space<vmem>>, vector<1x1x128xf32>
      %41 = vector.shape_cast %40 : vector<1x1x128xf32> to vector<1x128xf32>
      %42 = vector.broadcast %41 : vector<1x128xf32> to vector<16x128xf32>
      %43 = arith.addf %39, %42 : vector<16x128xf32>
      %c0_30 = arith.constant 0 : index
      %c0_31 = arith.constant 0 : index
      %c0_32 = arith.constant 0 : index
      %44 = vector.load %arg13[%c0_30, %c0_31, %c0_32] : memref<1x1x128xf32, #tpu.memory_space<vmem>>, vector<1x1x128xf32>
      %45 = vector.shape_cast %44 : vector<1x1x128xf32> to vector<1x128xf32>
      %c0_33 = arith.constant 0 : index
      %c0_34 = arith.constant 0 : index
      %c0_35 = arith.constant 0 : index
      %46 = vector.load %arg14[%c0_33, %c0_34, %c0_35] : memref<1x1x128xf32, #tpu.memory_space<vmem>>, vector<1x1x128xf32>
      %47 = vector.shape_cast %46 : vector<1x1x128xf32> to vector<1x128xf32>
      %cst_36 = arith.constant dense<0.000000e+00> : vector<16xf32>
      %48 = vector.multi_reduction <add>, %43, %cst_36 [1] : vector<16x128xf32> to vector<16xf32>
      %49 = vector.shape_cast %48 : vector<16xf32> to vector<16x1xf32>
      %cst_37 = arith.constant 1.280000e+02 : f32
      %50 = vector.broadcast %cst_37 : f32 to vector<16x1xf32>
      %51 = arith.divf %49, %50 : vector<16x1xf32>
      %52 = vector.broadcast %51 : vector<16x1xf32> to vector<16x128xf32>
      %53 = arith.subf %43, %52 : vector<16x128xf32>
      %54 = arith.mulf %53, %53 : vector<16x128xf32>
      %cst_38 = arith.constant dense<0.000000e+00> : vector<16xf32>
      %55 = vector.multi_reduction <add>, %54, %cst_38 [1] : vector<16x128xf32> to vector<16xf32>
      %56 = vector.shape_cast %55 : vector<16xf32> to vector<16x1xf32>
      %cst_39 = arith.constant 1.280000e+02 : f32
      %57 = vector.broadcast %cst_39 : f32 to vector<16x1xf32>
      %58 = arith.divf %56, %57 : vector<16x1xf32>
      %cst_40 = arith.constant 9.99999974E-6 : f32
      %59 = vector.broadcast %cst_40 : f32 to vector<16x1xf32>
      %60 = arith.addf %58, %59 : vector<16x1xf32>
      %61 = math.rsqrt %60 : vector<16x1xf32>
      %62 = vector.broadcast %61 : vector<16x1xf32> to vector<16x128xf32>
      %63 = arith.mulf %53, %62 : vector<16x128xf32>
      %64 = vector.broadcast %45 : vector<1x128xf32> to vector<16x128xf32>
      %65 = arith.mulf %63, %64 : vector<16x128xf32>
      %66 = vector.broadcast %47 : vector<1x128xf32> to vector<16x128xf32>
      %67 = arith.addf %65, %66 : vector<16x128xf32>
      %c0_41 = arith.constant 0 : index
      %c0_42 = arith.constant 0 : index
      %68 = vector.load %arg20[%c0_41, %c0_42] : memref<16x128xf32, #tpu.memory_space<vmem>>, vector<16x128xf32>
      tpu.vector_store %arg20[%c0_41, %c0_42], %67 {strides = array<i32>} : memref<16x128xf32, #tpu.memory_space<vmem>>, vector<16x128xf32>,
    } else {
    }
    %c1_i32 = arith.constant 1 : i32
    %32 = arith.cmpi eq, %arg0, %c1_i32 : i32
    %c3_i32_21 = arith.constant 3 : i32
    %33 = arith.cmpi eq, %arg1, %c3_i32_21 : i32
    %34 = arith.andi %32, %33 : i1
    %35 = arith.extui %34 : i1 to i32
    %c0_i32_22 = arith.constant 0 : i32
    %36 = arith.cmpi ne, %35, %c0_i32_22 : i32
    scf.if %36 {
      %c0_23 = arith.constant 0 : index
      %c0_24 = arith.constant 0 : index
      %37 = vector.load %arg20[%c0_23, %c0_24] : memref<16x128xf32, #tpu.memory_space<vmem>>, vector<16x128xf32>
      %c0_25 = arith.constant 0 : index
      %c0_26 = arith.constant 0 : index
      %38 = vector.load %arg5[%c0_25, %c0_26] : memref<128x128xbf16, #tpu.memory_space<vmem>>, vector<128x128xbf16>
      %39 = arith.truncf %37 : vector<16x128xf32> to vector<16x128xbf16>
      %cst_27 = arith.constant dense<0.000000e+00> : vector<16x128xf32>
      %40 = tpu.matmul %39, %38, %cst_27 {dimension_numbers = #tpu.dot_dimension_numbers<[1], [0], [0], [1], [0, 0, 1, 1], [], []>} : vector<16x128xbf16>, vector<128x128xbf16>, vector<16x128xf32> -> vector<16x128xf32>
      %c0_28 = arith.constant 0 : index
      %c0_29 = arith.constant 0 : index
      %41 = vector.load %arg6[%c0_28, %c0_29] : memref<1x128xf32, #tpu.memory_space<vmem>>, vector<1x128xf32>
      %42 = vector.broadcast %41 : vector<1x128xf32> to vector<16x128xf32>
      %43 = arith.addf %40, %42 : vector<16x128xf32>
      %c0_30 = arith.constant 0 : index
      %c0_31 = arith.constant 0 : index
      %44 = vector.load %arg19[%c0_30, %c0_31] : memref<16x128xf32, #tpu.memory_space<vmem>>, vector<16x128xf32>
      tpu.vector_store %arg19[%c0_30, %c0_31], %43 {strides = array<i32>} : memref<16x128xf32, #tpu.memory_space<vmem>>, vector<16x128xf32>,
    } else {
    }
    return
  }
  func.func @transform_0(%arg0: i32, %arg1: i32) -> (i32, i32) {
    %c0_i32 = arith.constant 0 : i32
    %c0_i32_0 = arith.constant 0 : i32
    %c0_i32_1 = arith.constant 0 : i32
    return %c0_i32, %c0_i32_0 : i32, i32
  }
  func.func @transform_1(%arg0: i32, %arg1: i32) -> (i32, i32) {
    %c0_i32 = arith.constant 0 : i32
    %c0_i32_0 = arith.constant 0 : i32
    %c0_i32_1 = arith.constant 0 : i32
    return %c0_i32, %c0_i32_0 : i32, i32
  }
  func.func @transform_2(%arg0: i32, %arg1: i32) -> (i32, i32) {
    %c0_i32 = arith.constant 0 : i32
    %c0_i32_0 = arith.constant 0 : i32
    %c0_i32_1 = arith.constant 0 : i32
    return %c0_i32, %c0_i32_0 : i32, i32
  }
  func.func @transform_3(%arg0: i32, %arg1: i32) -> (i32, i32) {
    %c0_i32 = arith.constant 0 : i32
    %c0_i32_0 = arith.constant 0 : i32
    %c0_i32_1 = arith.constant 0 : i32
    return %c0_i32, %c0_i32_0 : i32, i32
  }
  func.func @transform_4(%arg0: i32, %arg1: i32) -> (i32, i32) {
    %c0_i32 = arith.constant 0 : i32
    %c0_i32_0 = arith.constant 0 : i32
    %c0_i32_1 = arith.constant 0 : i32
    return %c0_i32, %c0_i32_0 : i32, i32
  }
  func.func @transform_5(%arg0: i32, %arg1: i32) -> (i32, i32, i32) {
    %c0_i32 = arith.constant 0 : i32
    %c0_i32_0 = arith.constant 0 : i32
    %c0_i32_1 = arith.constant 0 : i32
    return %arg0, %c0_i32, %c0_i32_0 : i32, i32, i32
  }
  func.func @transform_6(%arg0: i32, %arg1: i32) -> (i32, i32, i32) {
    %c0_i32 = arith.constant 0 : i32
    %c0_i32_0 = arith.constant 0 : i32
    %c0_i32_1 = arith.constant 0 : i32
    return %arg0, %c0_i32, %c0_i32_0 : i32, i32, i32
  }
  func.func @transform_7(%arg0: i32, %arg1: i32) -> (i32, i32, i32) {
    %c0_i32 = arith.constant 0 : i32
    %c0_i32_0 = arith.constant 0 : i32
    %c0_i32_1 = arith.constant 0 : i32
    return %arg0, %c0_i32, %c0_i32_0 : i32, i32, i32
  }
  func.func @transform_8(%arg0: i32, %arg1: i32) -> (i32, i32, i32) {
    %c0_i32 = arith.constant 0 : i32
    %c0_i32_0 = arith.constant 0 : i32
    %c0_i32_1 = arith.constant 0 : i32
    return %arg0, %c0_i32, %c0_i32_0 : i32, i32, i32
  }
  func.func @transform_9(%arg0: i32, %arg1: i32) -> (i32, i32, i32) {
    %c0_i32 = arith.constant 0 : i32
    %c0_i32_0 = arith.constant 0 : i32
    %c0_i32_1 = arith.constant 0 : i32
    return %arg0, %c0_i32, %c0_i32_0 : i32, i32, i32
  }
  func.func @transform_10(%arg0: i32, %arg1: i32) -> (i32, i32, i32) {
    %c0_i32 = arith.constant 0 : i32
    %c0_i32_0 = arith.constant 0 : i32
    %c0_i32_1 = arith.constant 0 : i32
    return %arg0, %c0_i32, %c0_i32_0 : i32, i32, i32
  }
  func.func @transform_11(%arg0: i32, %arg1: i32) -> (i32, i32, i32) {
    %c0_i32 = arith.constant 0 : i32
    %c0_i32_0 = arith.constant 0 : i32
    %c0_i32_1 = arith.constant 0 : i32
    return %arg0, %c0_i32, %c0_i32_0 : i32, i32, i32
  }
  func.func @transform_12(%arg0: i32, %arg1: i32) -> (i32, i32, i32) {
    %c0_i32 = arith.constant 0 : i32
    %c0_i32_0 = arith.constant 0 : i32
    %c0_i32_1 = arith.constant 0 : i32
    return %arg0, %c0_i32, %c0_i32_0 : i32, i32, i32
  }
  func.func @transform_13(%arg0: i32, %arg1: i32) -> (i32, i32, i32) {
    %c0_i32 = arith.constant 0 : i32
    %c0_i32_0 = arith.constant 0 : i32
    return %arg0, %c0_i32, %arg1 : i32, i32, i32
  }
  func.func @transform_14(%arg0: i32, %arg1: i32) -> (i32, i32, i32) {
    %c0_i32 = arith.constant 0 : i32
    %c0_i32_0 = arith.constant 0 : i32
    return %arg0, %c0_i32, %arg1 : i32, i32, i32
  }
  func.func @transform_15(%arg0: i32, %arg1: i32) -> (i32, i32, i32) {
    %c0_i32 = arith.constant 0 : i32
    %c0_i32_0 = arith.constant 0 : i32
    return %arg0, %arg1, %c0_i32 : i32, i32, i32
  }
  func.func @transform_16(%arg0: i32, %arg1: i32) -> (i32, i32, i32) {
    %c0_i32 = arith.constant 0 : i32
    %c0_i32_0 = arith.constant 0 : i32
    %c0_i32_1 = arith.constant 0 : i32
    return %arg0, %c0_i32, %c0_i32_0 : i32, i32, i32
  }
  func.func @transform_17(%arg0: i32, %arg1: i32) -> (i32, i32) {
    %c0_i32 = arith.constant 0 : i32
    %c0_i32_0 = arith.constant 0 : i32
    %c0_i32_1 = arith.constant 0 : i32
    return %c0_i32, %c0_i32_0 : i32, i32
  }
}

</mosaic_0001>

<llo_original>
// kernel: tpu_custom_call.1
$region0: #{tpu_custom_call.1}
  #allocation0 [shape = 'u32[]', space=smem, size = 0x4, offset = 0x4, fixed_abs, tag = 'smem constant byte address 0x4 - core index']
  #allocation1 [shape = 'u32[144,128]{1,0:T(1,128)}', space=vmem, size = 0x12000, scoped, tag = 'internal scratch']
  #allocation2 [shape = 'f32[16,128]{1,0:T(8,128)}', space=vmem, size = 0x2000, scoped, tag = 'scratch operand']
  #allocation3 [shape = 'f32[16,128]{1,0:T(8,128)}', space=vmem, size = 0x2000, scoped, tag = 'scratch operand']
  #allocation4 [shape = 'f32[16,128]{1,0:T(8,128)}', space=vmem, size = 0x2000, scoped, tag = 'scratch operand']
  %s0 = inlined_call_operand.hbm [shape: f32[16,128], index: 0, kind: input, shape index: {}]
  %s1 = inlined_call_operand.hbm [shape: bf16[128,128], index: 1, kind: input, shape index: {}]
  %s2 = inlined_call_operand.hbm [shape: f32[1,128], index: 2, kind: input, shape index: {}]
  %s3 = inlined_call_operand.hbm [shape: bf16[128,128], index: 3, kind: input, shape index: {}]
  %s4 = inlined_call_operand.hbm [shape: f32[1,128], index: 4, kind: input, shape index: {}]
  %s5 = inlined_call_operand.hbm [shape: bf16[2,128,384], index: 5, kind: input, shape index: {}]
  %s6 = inlined_call_operand.vmem [shape: f32[2,1,384], index: 6, kind: input, shape index: {}]
  %s7 = inlined_call_operand.hbm [shape: bf16[2,128,128], index: 7, kind: input, shape index: {}]
  %s8 = inlined_call_operand.vmem [shape: f32[2,1,128], index: 8, kind: input, shape index: {}]
  %s9 = inlined_call_operand.vmem [shape: f32[2,1,128], index: 9, kind: input, shape index: {}]
  %s10 = inlined_call_operand.vmem [shape: f32[2,1,128], index: 10, kind: input, shape index: {}]
  %s11 = inlined_call_operand.vmem [shape: f32[2,1,128], index: 11, kind: input, shape index: {}]
  %s12 = inlined_call_operand.vmem [shape: f32[2,1,128], index: 12, kind: input, shape index: {}]
  %s13 = inlined_call_operand.hbm [shape: bf16[2,128,2048], index: 13, kind: input, shape index: {}]
  %s14 = inlined_call_operand.vmem [shape: f32[2,1,2048], index: 14, kind: input, shape index: {}]
  %s15 = inlined_call_operand.hbm [shape: bf16[2,2048,128], index: 15, kind: input, shape index: {}]
  %s16 = inlined_call_operand.vmem [shape: f32[2,1,128], index: 16, kind: input, shape index: {}]
  %s17 = inlined_call_operand.hbm [shape: f32[16,128], index: 17, kind: output, shape index: {}]
  %s18 = sld [smem:[#allocation0]]
  $region161: #{tpu_custom_call.1} parent=0
    _
  %s20 = ssub.s32 1, %s18
  %s21 = scalar_select 0, %s20, %s18
  $region1: #{tpu_custom_call.1} parent=0
    #allocation5 [shape = 'u8[8192]{0}', space=vmem, size = 0x2000, scoped, tag = 'input window, operand 0, single buffered']
    #allocation6 [shape = 's32[2]{0}', space=sflag, size = 0x8, scoped, tag = 'scoped memory for tpu_custom_call.1']
    #allocation7 [shape = 's32[2]{0}', space=sflag, size = 0x8, scoped, tag = 'scoped memory for tpu_custom_call.1']
    #allocation8 [shape = 'u8[32768]{0}', space=vmem, size = 0x8000, scoped, tag = 'input window, operand 1, single buffered']
    #allocation9 [shape = 's32[1]{0}', space=sflag, size = 0x4, scoped, tag = 'scoped memory for tpu_custom_call.1']
    #allocation10 [shape = 'u8[512]{0}', space=vmem, size = 0x400, scoped, tag = 'input window, operand 2, single buffered']
    #allocation11 [shape = 'u8[32768]{0}', space=vmem, size = 0x8000, scoped, tag = 'input window, operand 3, single buffered']
    #allocation12 [shape = 's32[1]{0}', space=sflag, size = 0x4, scoped, tag = 'scoped memory for tpu_custom_call.1']
    #allocation13 [shape = 'u8[512]{0}', space=vmem, size = 0x400, scoped, tag = 'input window, operand 4, single buffered']
    #allocation14 [shape = 'u8[196608]{0}', space=vmem, size = 0x30000, scoped, tag = 'input window, operand 5']
    #allocation15 [shape = 's32[2]{0}', space=sflag, size = 0x8, scoped, tag = 'scoped memory for tpu_custom_call.1']
    #allocation16 [shape = 'u8[65536]{0}', space=vmem, size = 0x10000, scoped, tag = 'input window, operand 7']
    #allocation17 [shape = 'u8[262144]{0}', space=vmem, size = 0x40000, scoped, tag = 'input window, operand 13']
    #allocation18 [shape = 's32[2]{0}', space=sflag, size = 0x8, scoped, tag = 'scoped memory for tpu_custom_call.1']
    #allocation19 [shape = 'u8[262144]{0}', space=vmem, size = 0x40000, scoped, tag = 'input window, operand 15']
    #allocation20 [shape = 'u8[8192]{0}', space=vmem, size = 0x2000, scoped, tag = 'output window, operand 0, single buffered']
    %22 = vsyncpa [#allocation6], 0
    %23 = vsyncpa [#allocation9], 0
    %24 = vsyncpa [#allocation12], 0
    %25 = vsyncpa [#allocation15], 0
    %s26 = scalar_lea.sflag [#allocation15], 1
    %27 = vsyncpa %s26, 0
    %28 = vsyncpa [#allocation18], 0
    %s29 = scalar_lea.sflag [#allocation18], 1
    %30 = vsyncpa %s29, 0
    %31 = vsyncpa [#allocation7], 0
    loop: start=0, step=1, limit=10
    $region2: #{tpu_custom_call.1} parent=1 // loop_pre_header
      _
    $region3: #{tpu_custom_call.1} parent=1 // loop_header
      %s33 = sphi 0, %s37
      %p34 = scmp.ge.s32.totalorder %s33, 10
      %s40 = sphi 0, %s52
      %s41 = sphi 0, %s48
      %s42 = sphi 0, %s40
      %s43 = sphi 0, %s41
      %s44 = sphi 0, %s42
      %s45 = sphi 0, %s43
      %s53 = sphi 0, %s53
      %s55 = sphi 0, %s53
      %s56 = sphi 0, %s55
      %s70 = sphi 0, %s56
      %s74 = sphi 0, %s74
      %s76 = sphi 0, %s74
      %s77 = sphi 0, %s76
      %s91 = sphi 0, %s77
      %s95 = sphi 0, %s95
      %s97 = sphi 0, %s95
      %s98 = sphi 0, %s97
      %s112 = sphi 0, %s98
      %s116 = sphi 0, %s116
      %s118 = sphi 0, %s116
      %s119 = sphi 0, %s118
      %s133 = sphi 0, %s119
      %s137 = sphi 0, %s137
      %s139 = sphi 0, %s137
      %s140 = sphi 0, %s139
      %s154 = sphi 0, %s140
      %s160 = sphi 0, %s162
      %s163 = sphi 0, %s160
      %s164 = sphi 0, %s163
      %s180 = sphi 0, %s164
      %s186 = sphi 0, %s188
      %s189 = sphi 0, %s186
      %s190 = sphi 0, %s189
      %s206 = sphi 0, %s190
      %s212 = sphi 0, %s214
      %s215 = sphi 0, %s212
      %s216 = sphi 0, %s215
      %s232 = sphi 0, %s216
      %s238 = sphi 0, %s240
      %s241 = sphi 0, %s238
      %s242 = sphi 0, %s241
      %s258 = sphi 0, %s242
      %s264 = sphi 0, %s266
      %s267 = sphi 0, %s264
      %s268 = sphi 0, %s267
      %s284 = sphi 0, %s268
      %s290 = sphi 0, %s292
      %s293 = sphi 0, %s290
      %s294 = sphi 0, %s293
      %s310 = sphi 0, %s294
      %s316 = sphi 0, %s318
      %s319 = sphi 0, %s316
      %s320 = sphi 0, %s319
      %s336 = sphi 0, %s320
      %s342 = sphi 0, %s344
      %s345 = sphi 0, %s342
      %s346 = sphi 0, %s345
      %s362 = sphi 0, %s346
      %s370 = sphi 0, %s372
      %s373 = sphi 0, %s370
      %s374 = sphi 0, %s373
      %s390 = sphi 0, %s374
      %s398 = sphi 0, %s400
      %s401 = sphi 0, %s398
      %s402 = sphi 0, %s401
      %s418 = sphi 0, %s402
      %s426 = sphi 0, %s428
      %s429 = sphi 0, %s426
      %s430 = sphi 0, %s429
      %s446 = sphi 0, %s430
      %s452 = sphi 0, %s454
      %s455 = sphi 0, %s452
      %s456 = sphi 0, %s455
      %s472 = sphi 0, %s456
      %s476 = sphi 0, %s476
      %s478 = sphi 0, %s476
      %s479 = sphi 0, %s478
      %s493 = sphi 0, %s479
    $region4: #{tpu_custom_call.1} parent=1 // loop_header_branch
      %36 = sbr.rel (%p34) target = $region8
    $region5: #{tpu_custom_call.1} parent=1 // loop_body
      %s38 = ssub.s32 %s33, 1
      %s39 = ssub.s32 %s33, 2
      %s46 = sadd.s32 1, %s41
      %p47 = scmp.ge.s32.totalorder %s46, 4
      %s48 = scalar_select %p47, 0, %s46
      %s49 = sadd.s32 1, %s40
      %s50 = scalar_select %p47, %s49, %s40
      %p51 = scmp.ge.s32.totalorder %s50, 2
      %s52 = scalar_select %p51, 0, %s50
      %s54 = sadd.s32 %s53, 1
      %p57 = scmp.eq.s32.totalorder %s33, 7
      %p58 = scmp.ne.s32.totalorder %s53, %s55
      %p59 = scmp.eq.s32.totalorder %s33, 0
      %p60 = por %p58, %p59
      %p61 = scmp.ne.s32.totalorder %s53, %s55
      %p62 = scmp.eq.s32.totalorder %s38, 7
      %p63 = por %p61, %p62
      %p64 = scmp.ne.s32.totalorder %s55, %s56
      %p65 = scmp.eq.s32.totalorder %s38, 0
      %p66 = por %p64, %p65
      %p67 = scmp.ne.s32.totalorder %s55, %s56
      %p68 = scmp.eq.s32.totalorder %s39, 7
      %p69 = por %p67, %p68
      %p71 = scmp.ne.s32.totalorder %s56, %s70
      %p72 = scmp.eq.s32.totalorder %s39, 0
      %p73 = por %p71, %p72
      %s75 = sadd.s32 %s74, 1
      %p78 = scmp.eq.s32.totalorder %s33, 7
      %p79 = scmp.ne.s32.totalorder %s74, %s76
      %p80 = scmp.eq.s32.totalorder %s33, 0
      %p81 = por %p79, %p80
      %p82 = scmp.ne.s32.totalorder %s74, %s76
      %p83 = scmp.eq.s32.totalorder %s38, 7
      %p84 = por %p82, %p83
      %p85 = scmp.ne.s32.totalorder %s76, %s77
      %p86 = scmp.eq.s32.totalorder %s38, 0
      %p87 = por %p85, %p86
      %p88 = scmp.ne.s32.totalorder %s76, %s77
      %p89 = scmp.eq.s32.totalorder %s39, 7
      %p90 = por %p88, %p89
      %p92 = scmp.ne.s32.totalorder %s77, %s91
      %p93 = scmp.eq.s32.totalorder %s39, 0
      %p94 = por %p92, %p93
      %s96 = sadd.s32 %s95, 1
      %p99 = scmp.eq.s32.totalorder %s33, 7
      %p100 = scmp.ne.s32.totalorder %s95, %s97
      %p101 = scmp.eq.s32.totalorder %s33, 0
      %p102 = por %p100, %p101
      %p103 = scmp.ne.s32.totalorder %s95, %s97
      %p104 = scmp.eq.s32.totalorder %s38, 7
      %p105 = por %p103, %p104
      %p106 = scmp.ne.s32.totalorder %s97, %s98
      %p107 = scmp.eq.s32.totalorder %s38, 0
      %p108 = por %p106, %p107
      %p109 = scmp.ne.s32.totalorder %s97, %s98
      %p110 = scmp.eq.s32.totalorder %s39, 7
      %p111 = por %p109, %p110
      %p113 = scmp.ne.s32.totalorder %s98, %s112
      %p114 = scmp.eq.s32.totalorder %s39, 0
      %p115 = por %p113, %p114
      %s117 = sadd.s32 %s116, 1
      %p120 = scmp.eq.s32.totalorder %s33, 7
      %p121 = scmp.ne.s32.totalorder %s116, %s118
      %p122 = scmp.eq.s32.totalorder %s33, 0
      %p123 = por %p121, %p122
      %p124 = scmp.ne.s32.totalorder %s116, %s118
      %p125 = scmp.eq.s32.totalorder %s38, 7
      %p126 = por %p124, %p125
      %p127 = scmp.ne.s32.totalorder %s118, %s119
      %p128 = scmp.eq.s32.totalorder %s38, 0
      %p129 = por %p127, %p128
      %p130 = scmp.ne.s32.totalorder %s118, %s119
      %p131 = scmp.eq.s32.totalorder %s39, 7
      %p132 = por %p130, %p131
      %p134 = scmp.ne.s32.totalorder %s119, %s133
      %p135 = scmp.eq.s32.totalorder %s39, 0
      %p136 = por %p134, %p135
      %s138 = sadd.s32 %s137, 1
      %p141 = scmp.eq.s32.totalorder %s33, 7
      %p142 = scmp.ne.s32.totalorder %s137, %s139
      %p143 = scmp.eq.s32.totalorder %s33, 0
      %p144 = por %p142, %p143
      %p145 = scmp.ne.s32.totalorder %s137, %s139
      %p146 = scmp.eq.s32.totalorder %s38, 7
      %p147 = por %p145, %p146
      %p148 = scmp.ne.s32.totalorder %s139, %s140
      %p149 = scmp.eq.s32.totalorder %s38, 0
      %p150 = por %p148, %p149
      %p151 = scmp.ne.s32.totalorder %s139, %s140
      %p152 = scmp.eq.s32.totalorder %s39, 7
      %p153 = por %p151, %p152
      %p155 = scmp.ne.s32.totalorder %s140, %s154
      %p156 = scmp.eq.s32.totalorder %s39, 0
      %p157 = por %p155, %p156
      %s158 = ssub.s32 %s40, %s52
      %p159 = scmp.eq.s32.totalorder %s158, 0
      %s161 = sadd.s32 %s160, 1
      %s162 = scalar_select %p159, %s160, %s161
      %p165 = pneg %p159
      %p166 = scmp.eq.s32.totalorder %s33, 7
      %p167 = por %p165, %p166
      %p168 = scmp.ne.s32.totalorder %s160, %s163
      %p169 = scmp.eq.s32.totalorder %s33, 0
      %p170 = por %p168, %p169
      %p171 = scmp.ne.s32.totalorder %s160, %s163
      %p172 = scmp.eq.s32.totalorder %s38, 7
      %p173 = por %p171, %p172
      %p174 = scmp.ne.s32.totalorder %s163, %s164
      %p175 = scmp.eq.s32.totalorder %s38, 0
      %p176 = por %p174, %p175
      %p177 = scmp.ne.s32.totalorder %s163, %s164
      %p178 = scmp.eq.s32.totalorder %s39, 7
      %p179 = por %p177, %p178
      %p181 = scmp.ne.s32.totalorder %s164, %s180
      %p182 = scmp.eq.s32.totalorder %s39, 0
      %p183 = por %p181, %p182
      %s184 = ssub.s32 %s40, %s52
      %p185 = scmp.eq.s32.totalorder %s184, 0
      %s187 = sadd.s32 %s186, 1
      %s188 = scalar_select %p185, %s186, %s187
      %p191 = pneg %p185
      %p192 = scmp.eq.s32.totalorder %s33, 7
      %p193 = por %p191, %p192
      %p194 = scmp.ne.s32.totalorder %s186, %s189
      %p195 = scmp.eq.s32.totalorder %s33, 0
      %p196 = por %p194, %p195
      %p197 = scmp.ne.s32.totalorder %s186, %s189
      %p198 = scmp.eq.s32.totalorder %s38, 7
      %p199 = por %p197, %p198
      %p200 = scmp.ne.s32.totalorder %s189, %s190
      %p201 = scmp.eq.s32.totalorder %s38, 0
      %p202 = por %p200, %p201
      %p203 = scmp.ne.s32.totalorder %s189, %s190
      %p204 = scmp.eq.s32.totalorder %s39, 7
      %p205 = por %p203, %p204
      %p207 = scmp.ne.s32.totalorder %s190, %s206
      %p208 = scmp.eq.s32.totalorder %s39, 0
      %p209 = por %p207, %p208
      %s210 = ssub.s32 %s40, %s52
      %p211 = scmp.eq.s32.totalorder %s210, 0
      %s213 = sadd.s32 %s212, 1
      %s214 = scalar_select %p211, %s212, %s213
      %p217 = pneg %p211
      %p218 = scmp.eq.s32.totalorder %s33, 7
      %p219 = por %p217, %p218
      %p220 = scmp.ne.s32.totalorder %s212, %s215
      %p221 = scmp.eq.s32.totalorder %s33, 0
      %p222 = por %p220, %p221
      %p223 = scmp.ne.s32.totalorder %s212, %s215
      %p224 = scmp.eq.s32.totalorder %s38, 7
      %p225 = por %p223, %p224
      %p226 = scmp.ne.s32.totalorder %s215, %s216
      %p227 = scmp.eq.s32.totalorder %s38, 0
      %p228 = por %p226, %p227
      %p229 = scmp.ne.s32.totalorder %s215, %s216
      %p230 = scmp.eq.s32.totalorder %s39, 7
      %p231 = por %p229, %p230
      %p233 = scmp.ne.s32.totalorder %s216, %s232
      %p234 = scmp.eq.s32.totalorder %s39, 0
      %p235 = por %p233, %p234
      %s236 = ssub.s32 %s40, %s52
      %p237 = scmp.eq.s32.totalorder %s236, 0
      %s239 = sadd.s32 %s238, 1
      %s240 = scalar_select %p237, %s238, %s239
      %p243 = pneg %p237
      %p244 = scmp.eq.s32.totalorder %s33, 7
      %p245 = por %p243, %p244
      %p246 = scmp.ne.s32.totalorder %s238, %s241
      %p247 = scmp.eq.s32.totalorder %s33, 0
      %p248 = por %p246, %p247
      %p249 = scmp.ne.s32.totalorder %s238, %s241
      %p250 = scmp.eq.s32.totalorder %s38, 7
      %p251 = por %p249, %p250
      %p252 = scmp.ne.s32.totalorder %s241, %s242
      %p253 = scmp.eq.s32.totalorder %s38, 0
      %p254 = por %p252, %p253
      %p255 = scmp.ne.s32.totalorder %s241, %s242
      %p256 = scmp.eq.s32.totalorder %s39, 7
      %p257 = por %p255, %p256
      %p259 = scmp.ne.s32.totalorder %s242, %s258
      %p260 = scmp.eq.s32.totalorder %s39, 0
      %p261 = por %p259, %p260
      %s262 = ssub.s32 %s40, %s52
      %p263 = scmp.eq.s32.totalorder %s262, 0
      %s265 = sadd.s32 %s264, 1
      %s266 = scalar_select %p263, %s264, %s265
      %p269 = pneg %p263
      %p270 = scmp.eq.s32.totalorder %s33, 7
      %p271 = por %p269, %p270
      %p272 = scmp.ne.s32.totalorder %s264, %s267
      %p273 = scmp.eq.s32.totalorder %s33, 0
      %p274 = por %p272, %p273
      %p275 = scmp.ne.s32.totalorder %s264, %s267
      %p276 = scmp.eq.s32.totalorder %s38, 7
      %p277 = por %p275, %p276
      %p278 = scmp.ne.s32.totalorder %s267, %s268
      %p279 = scmp.eq.s32.totalorder %s38, 0
      %p280 = por %p278, %p279
      %p281 = scmp.ne.s32.totalorder %s267, %s268
      %p282 = scmp.eq.s32.totalorder %s39, 7
      %p283 = por %p281, %p282
      %p285 = scmp.ne.s32.totalorder %s268, %s284
      %p286 = scmp.eq.s32.totalorder %s39, 0
      %p287 = por %p285, %p286
      %s288 = ssub.s32 %s40, %s52
      %p289 = scmp.eq.s32.totalorder %s288, 0
      %s291 = sadd.s32 %s290, 1
      %s292 = scalar_select %p289, %s290, %s291
      %p295 = pneg %p289
      %p296 = scmp.eq.s32.totalorder %s33, 7
      %p297 = por %p295, %p296
      %p298 = scmp.ne.s32.totalorder %s290, %s293
      %p299 = scmp.eq.s32.totalorder %s33, 0
      %p300 = por %p298, %p299
      %p301 = scmp.ne.s32.totalorder %s290, %s293
      %p302 = scmp.eq.s32.totalorder %s38, 7
      %p303 = por %p301, %p302
      %p304 = scmp.ne.s32.totalorder %s293, %s294
      %p305 = scmp.eq.s32.totalorder %s38, 0
      %p306 = por %p304, %p305
      %p307 = scmp.ne.s32.totalorder %s293, %s294
      %p308 = scmp.eq.s32.totalorder %s39, 7
      %p309 = por %p307, %p308
      %p311 = scmp.ne.s32.totalorder %s294, %s310
      %p312 = scmp.eq.s32.totalorder %s39, 0
      %p313 = por %p311, %p312
      %s314 = ssub.s32 %s40, %s52
      %p315 = scmp.eq.s32.totalorder %s314, 0
      %s317 = sadd.s32 %s316, 1
      %s318 = scalar_select %p315, %s316, %s317
      %p321 = pneg %p315
      %p322 = scmp.eq.s32.totalorder %s33, 7
      %p323 = por %p321, %p322
      %p324 = scmp.ne.s32.totalorder %s316, %s319
      %p325 = scmp.eq.s32.totalorder %s33, 0
      %p326 = por %p324, %p325
      %p327 = scmp.ne.s32.totalorder %s316, %s319
      %p328 = scmp.eq.s32.totalorder %s38, 7
      %p329 = por %p327, %p328
      %p330 = scmp.ne.s32.totalorder %s319, %s320
      %p331 = scmp.eq.s32.totalorder %s38, 0
      %p332 = por %p330, %p331
      %p333 = scmp.ne.s32.totalorder %s319, %s320
      %p334 = scmp.eq.s32.totalorder %s39, 7
      %p335 = por %p333, %p334
      %p337 = scmp.ne.s32.totalorder %s320, %s336
      %p338 = scmp.eq.s32.totalorder %s39, 0
      %p339 = por %p337, %p338
      %s340 = ssub.s32 %s40, %s52
      %p341 = scmp.eq.s32.totalorder %s340, 0
      %s343 = sadd.s32 %s342, 1
      %s344 = scalar_select %p341, %s342, %s343
      %p347 = pneg %p341
      %p348 = scmp.eq.s32.totalorder %s33, 7
      %p349 = por %p347, %p348
      %p350 = scmp.ne.s32.totalorder %s342, %s345
      %p351 = scmp.eq.s32.totalorder %s33, 0
      %p352 = por %p350, %p351
      %p353 = scmp.ne.s32.totalorder %s342, %s345
      %p354 = scmp.eq.s32.totalorder %s38, 7
      %p355 = por %p353, %p354
      %p356 = scmp.ne.s32.totalorder %s345, %s346
      %p357 = scmp.eq.s32.totalorder %s38, 0
      %p358 = por %p356, %p357
      %p359 = scmp.ne.s32.totalorder %s345, %s346
      %p360 = scmp.eq.s32.totalorder %s39, 7
      %p361 = por %p359, %p360
      %p363 = scmp.ne.s32.totalorder %s346, %s362
      %p364 = scmp.eq.s32.totalorder %s39, 0
      %p365 = por %p363, %p364
      %s366 = ssub.s32 %s40, %s52
      %s367 = ssub.s32 %s41, %s48
      %s368 = sor.u32 %s366, %s367
      %p369 = scmp.eq.s32.totalorder %s368, 0
      %s371 = sadd.s32 %s370, 1
      %s372 = scalar_select %p369, %s370, %s371
      %p375 = pneg %p369
      %p376 = scmp.eq.s32.totalorder %s33, 7
      %p377 = por %p375, %p376
      %p378 = scmp.ne.s32.totalorder %s370, %s373
      %p379 = scmp.eq.s32.totalorder %s33, 0
      %p380 = por %p378, %p379
      %p381 = scmp.ne.s32.totalorder %s370, %s373
      %p382 = scmp.eq.s32.totalorder %s38, 7
      %p383 = por %p381, %p382
      %p384 = scmp.ne.s32.totalorder %s373, %s374
      %p385 = scmp.eq.s32.totalorder %s38, 0
      %p386 = por %p384, %p385
      %p387 = scmp.ne.s32.totalorder %s373, %s374
      %p388 = scmp.eq.s32.totalorder %s39, 7
      %p389 = por %p387, %p388
      %p391 = scmp.ne.s32.totalorder %s374, %s390
      %p392 = scmp.eq.s32.totalorder %s39, 0
      %p393 = por %p391, %p392
      %s394 = ssub.s32 %s40, %s52
      %s395 = ssub.s32 %s41, %s48
      %s396 = sor.u32 %s394, %s395
      %p397 = scmp.eq.s32.totalorder %s396, 0
      %s399 = sadd.s32 %s398, 1
      %s400 = scalar_select %p397, %s398, %s399
      %p403 = pneg %p397
      %p404 = scmp.eq.s32.totalorder %s33, 7
      %p405 = por %p403, %p404
      %p406 = scmp.ne.s32.totalorder %s398, %s401
      %p407 = scmp.eq.s32.totalorder %s33, 0
      %p408 = por %p406, %p407
      %p409 = scmp.ne.s32.totalorder %s398, %s401
      %p410 = scmp.eq.s32.totalorder %s38, 7
      %p411 = por %p409, %p410
      %p412 = scmp.ne.s32.totalorder %s401, %s402
      %p413 = scmp.eq.s32.totalorder %s38, 0
      %p414 = por %p412, %p413
      %p415 = scmp.ne.s32.totalorder %s401, %s402
      %p416 = scmp.eq.s32.totalorder %s39, 7
      %p417 = por %p415, %p416
      %p419 = scmp.ne.s32.totalorder %s402, %s418
      %p420 = scmp.eq.s32.totalorder %s39, 0
      %p421 = por %p419, %p420
      %s422 = ssub.s32 %s40, %s52
      %s423 = ssub.s32 %s41, %s48
      %s424 = sor.u32 %s422, %s423
      %p425 = scmp.eq.s32.totalorder %s424, 0
      %s427 = sadd.s32 %s426, 1
      %s428 = scalar_select %p425, %s426, %s427
      %p431 = pneg %p425
      %p432 = scmp.eq.s32.totalorder %s33, 7
      %p433 = por %p431, %p432
      %p434 = scmp.ne.s32.totalorder %s426, %s429
      %p435 = scmp.eq.s32.totalorder %s33, 0
      %p436 = por %p434, %p435
      %p437 = scmp.ne.s32.totalorder %s426, %s429
      %p438 = scmp.eq.s32.totalorder %s38, 7
      %p439 = por %p437, %p438
      %p440 = scmp.ne.s32.totalorder %s429, %s430
      %p441 = scmp.eq.s32.totalorder %s38, 0
      %p442 = por %p440, %p441
      %p443 = scmp.ne.s32.totalorder %s429, %s430
      %p444 = scmp.eq.s32.totalorder %s39, 7
      %p445 = por %p443, %p444
      %p447 = scmp.ne.s32.totalorder %s430, %s446
      %p448 = scmp.eq.s32.totalorder %s39, 0
      %p449 = por %p447, %p448
      %s450 = ssub.s32 %s40, %s52
      %p451 = scmp.eq.s32.totalorder %s450, 0
      %s453 = sadd.s32 %s452, 1
      %s454 = scalar_select %p451, %s452, %s453
      %p457 = pneg %p451
      %p458 = scmp.eq.s32.totalorder %s33, 7
      %p459 = por %p457, %p458
      %p460 = scmp.ne.s32.totalorder %s452, %s455
      %p461 = scmp.eq.s32.totalorder %s33, 0
      %p462 = por %p460, %p461
      %p463 = scmp.ne.s32.totalorder %s452, %s455
      %p464 = scmp.eq.s32.totalorder %s38, 7
      %p465 = por %p463, %p464
      %p466 = scmp.ne.s32.totalorder %s455, %s456
      %p467 = scmp.eq.s32.totalorder %s38, 0
      %p468 = por %p466, %p467
      %p469 = scmp.ne.s32.totalorder %s455, %s456
      %p470 = scmp.eq.s32.totalorder %s39, 7
      %p471 = por %p469, %p470
      %p473 = scmp.ne.s32.totalorder %s456, %s472
      %p474 = scmp.eq.s32.totalorder %s39, 0
      %p475 = por %p473, %p474
      %s477 = sadd.s32 %s476, 1
      %p480 = scmp.eq.s32.totalorder %s33, 7
      %p481 = scmp.ne.s32.totalorder %s476, %s478
      %p482 = scmp.eq.s32.totalorder %s33, 0
      %p483 = por %p481, %p482
      %p484 = scmp.ne.s32.totalorder %s476, %s478
      %p485 = scmp.eq.s32.totalorder %s38, 7
      %p486 = por %p484, %p485
      %p487 = scmp.ne.s32.totalorder %s478, %s479
      %p488 = scmp.eq.s32.totalorder %s38, 0
      %p489 = por %p487, %p488
      %p490 = scmp.ne.s32.totalorder %s478, %s479
      %p491 = scmp.eq.s32.totalorder %s39, 7
      %p492 = por %p490, %p491
      %p494 = scmp.ne.s32.totalorder %s479, %s493
      %p495 = scmp.eq.s32.totalorder %s39, 0
      %p496 = por %p494, %p495
      %p497 = scmp.le.s32.totalorder 1, %s33
      %p498 = scmp.lt.s32.totalorder %s33, 9
      %p499 = pnand %p497, %p498
      %p500 = pneg %p499
      // Predicated region
      $region9: #{tpu_custom_call.1} parent=5 // pred_check
        _
      $region10: #{tpu_custom_call.1} parent=5 // pred_check_branch
        %502 = sbr.rel (%p499) target = $region12
      $region11: #{tpu_custom_call.1} parent=5 // pred_region
        %s503 = ssub.s32 %s33, 1
        // Predicated region
        $region13: #{tpu_custom_call.1} parent=11 // pred_check
          %p504 = pneg %p66
        $region14: #{tpu_custom_call.1} parent=11 // pred_check_branch
          %506 = sbr.rel (%p504) target = $region16
        $region15: #{tpu_custom_call.1} parent=11 // pred_region
          %s508 = ssub.s32 256, 256
          %509 = vsyncadd [#allocation6], %s508
          %s510 = sshll.u32 [#allocation5], 4
          %s511 = int_to_ptr.vmem [resolvable:$true] %s510
          %516 = dma.hbm_to_vmem [thread:$0]  %s0, 256, %s511, [#allocation6], 128, 128, 8
        $region16: #{tpu_custom_call.1} parent=11 // pred_fallthru
          _
        // Predicated region
        $region17: #{tpu_custom_call.1} parent=11 // pred_check
          %p517 = pneg %p87
        $region18: #{tpu_custom_call.1} parent=11 // pred_check_branch
          %519 = sbr.rel (%p517) target = $region20
        $region19: #{tpu_custom_call.1} parent=11 // pred_region
          %s521 = ssub.s32 1024, 1024
          %522 = vsyncadd [#allocation9], %s521
          %s523 = sshll.u32 [#allocation8], 4
          %s524 = int_to_ptr.vmem [resolvable:$true] %s523
          %529 = dma.hbm_to_vmem [thread:$0]  %s1, 1024, %s524, [#allocation9], 64, 64, 4
        $region20: #{tpu_custom_call.1} parent=11 // pred_fallthru
          _
        // Predicated region
        $region21: #{tpu_custom_call.1} parent=11 // pred_check
          %p530 = pneg %p108
        $region22: #{tpu_custom_call.1} parent=11 // pred_check_branch
          %532 = sbr.rel (%p530) target = $region24
        $region23: #{tpu_custom_call.1} parent=11 // pred_region
          %s534 = ssub.s32 16, 16
          %535 = vsyncadd [#allocation9], %s534
          %s537 = sshll.u32 [#allocation10], 4
          %s538 = int_to_ptr.vmem [resolvable:$true] %s537
          %540 = dma.hbm_to_vmem [thread:$0]  %s2, 16, %s538, [#allocation9]
        $region24: #{tpu_custom_call.1} parent=11 // pred_fallthru
          _
        // Predicated region
        $region25: #{tpu_custom_call.1} parent=11 // pred_check
          %p541 = pneg %p129
        $region26: #{tpu_custom_call.1} parent=11 // pred_check_branch
          %543 = sbr.rel (%p541) target = $region28
        $region27: #{tpu_custom_call.1} parent=11 // pred_region
          %s545 = ssub.s32 1024, 1024
          %546 = vsyncadd [#allocation12], %s545
          %s547 = sshll.u32 [#allocation11], 4
          %s548 = int_to_ptr.vmem [resolvable:$true] %s547
          %553 = dma.hbm_to_vmem [thread:$0]  %s3, 1024, %s548, [#allocation12], 64, 64, 4
        $region28: #{tpu_custom_call.1} parent=11 // pred_fallthru
          _
        // Predicated region
        $region29: #{tpu_custom_call.1} parent=11 // pred_check
          %p554 = pneg %p150
        $region30: #{tpu_custom_call.1} parent=11 // pred_check_branch
          %556 = sbr.rel (%p554) target = $region32
        $region31: #{tpu_custom_call.1} parent=11 // pred_region
          %s558 = ssub.s32 16, 16
          %559 = vsyncadd [#allocation12], %s558
          %s561 = sshll.u32 [#allocation13], 4
          %s562 = int_to_ptr.vmem [resolvable:$true] %s561
          %564 = dma.hbm_to_vmem [thread:$0]  %s4, 16, %s562, [#allocation12]
        $region32: #{tpu_custom_call.1} parent=11 // pred_fallthru
          _
      $region12: #{tpu_custom_call.1} parent=5 // pred_fallthru
        _
      %p565 = scmp.lt.s32.totalorder %s33, 8
      // Predicated region
      $region33: #{tpu_custom_call.1} parent=5 // pred_check
        %p566 = pneg %p565
      $region34: #{tpu_custom_call.1} parent=5 // pred_check_branch
        %568 = sbr.rel (%p566) target = $region36
      $region35: #{tpu_custom_call.1} parent=5 // pred_region
        // Predicated region
        $region37: #{tpu_custom_call.1} parent=35 // pred_check
          %p569 = pneg %p170
        $region38: #{tpu_custom_call.1} parent=35 // pred_check_branch
          %571 = sbr.rel (%p569) target = $region40
        $region39: #{tpu_custom_call.1} parent=35 // pred_region
          %s572 = sand.u32 %s33, 1
          %s573 = scalar_lea.sflag [#allocation15], %s572
          %s574 = sand.u32 %s160, 1
          %s575 = smul.addr %s574, 192
          %s576 = scalar_lea.vmem [#allocation14], %s575
          %s578 = ssub.s32 3072, 3072
          %579 = vsyncadd %s573, %s578
          %s580 = smul.addr %s40, 48
          %s581 = smul.addr %s580, 64
          %s582 = scalar_lea.hbm %s5, %s581
          %s583 = sshll.u32 %s576, 4
          %s584 = int_to_ptr.vmem [resolvable:$true] %s583
          %589 = dma.hbm_to_vmem [thread:$0]  %s582, 3072, %s584, %s573, 192, 192, 12
        $region40: #{tpu_custom_call.1} parent=35 // pred_fallthru
          _
        // Predicated region
        $region41: #{tpu_custom_call.1} parent=35 // pred_check
          %p590 = pneg %p196
        $region42: #{tpu_custom_call.1} parent=35 // pred_check_branch
          %592 = sbr.rel (%p590) target = $region44
        $region43: #{tpu_custom_call.1} parent=35 // pred_region
          %p593 = scmp.lt.s32.totalorder %s40, 1
          %s594 = scalar_select %p593, %s40, 1
          %s595 = smul.addr %s594, 3
          %s596 = scalar_lea.vmem %s6, %s595
        $region44: #{tpu_custom_call.1} parent=35 // pred_fallthru
          _
        // Predicated region
        $region45: #{tpu_custom_call.1} parent=35 // pred_check
          %p597 = pneg %p222
        $region46: #{tpu_custom_call.1} parent=35 // pred_check_branch
          %599 = sbr.rel (%p597) target = $region48
        $region47: #{tpu_custom_call.1} parent=35 // pred_region
          %s600 = sand.u32 %s33, 1
          %s601 = scalar_lea.sflag [#allocation15], %s600
          %s602 = sand.u32 %s212, 1
          %s603 = smul.addr %s602, 64
          %s604 = scalar_lea.vmem [#allocation16], %s603
          %s606 = ssub.s32 1024, 1024
          %607 = vsyncadd %s601, %s606
          %s608 = smul.addr %s40, 16
          %s609 = smul.addr %s608, 64
          %s610 = scalar_lea.hbm %s7, %s609
          %s611 = sshll.u32 %s604, 4
          %s612 = int_to_ptr.vmem [resolvable:$true] %s611
          %617 = dma.hbm_to_vmem [thread:$0]  %s610, 1024, %s612, %s601, 64, 64, 4
        $region48: #{tpu_custom_call.1} parent=35 // pred_fallthru
          _
        // Predicated region
        $region49: #{tpu_custom_call.1} parent=35 // pred_check
          %p618 = pneg %p248
        $region50: #{tpu_custom_call.1} parent=35 // pred_check_branch
          %620 = sbr.rel (%p618) target = $region52
        $region51: #{tpu_custom_call.1} parent=35 // pred_region
          %p621 = scmp.lt.s32.totalorder %s40, 1
          %s622 = scalar_select %p621, %s40, 1
          %s623 = scalar_lea.vmem %s8, %s622
        $region52: #{tpu_custom_call.1} parent=35 // pred_fallthru
          _
        // Predicated region
        $region53: #{tpu_custom_call.1} parent=35 // pred_check
          %p624 = pneg %p274
        $region54: #{tpu_custom_call.1} parent=35 // pred_check_branch
          %626 = sbr.rel (%p624) target = $region56
        $region55: #{tpu_custom_call.1} parent=35 // pred_region
          %p627 = scmp.lt.s32.totalorder %s40, 1
          %s628 = scalar_select %p627, %s40, 1
          %s629 = scalar_lea.vmem %s9, %s628
        $region56: #{tpu_custom_call.1} parent=35 // pred_fallthru
          _
        // Predicated region
        $region57: #{tpu_custom_call.1} parent=35 // pred_check
          %p630 = pneg %p300
        $region58: #{tpu_custom_call.1} parent=35 // pred_check_branch
          %632 = sbr.rel (%p630) target = $region60
        $region59: #{tpu_custom_call.1} parent=35 // pred_region
          %p633 = scmp.lt.s32.totalorder %s40, 1
          %s634 = scalar_select %p633, %s40, 1
          %s635 = scalar_lea.vmem %s10, %s634
        $region60: #{tpu_custom_call.1} parent=35 // pred_fallthru
          _
        // Predicated region
        $region61: #{tpu_custom_call.1} parent=35 // pred_check
          %p636 = pneg %p326
        $region62: #{tpu_custom_call.1} parent=35 // pred_check_branch
          %638 = sbr.rel (%p636) target = $region64
        $region63: #{tpu_custom_call.1} parent=35 // pred_region
          %p639 = scmp.lt.s32.totalorder %s40, 1
          %s640 = scalar_select %p639, %s40, 1
          %s641 = scalar_lea.vmem %s11, %s640
        $region64: #{tpu_custom_call.1} parent=35 // pred_fallthru
          _
        // Predicated region
        $region65: #{tpu_custom_call.1} parent=35 // pred_check
          %p642 = pneg %p352
        $region66: #{tpu_custom_call.1} parent=35 // pred_check_branch
          %644 = sbr.rel (%p642) target = $region68
        $region67: #{tpu_custom_call.1} parent=35 // pred_region
          %p645 = scmp.lt.s32.totalorder %s40, 1
          %s646 = scalar_select %p645, %s40, 1
          %s647 = scalar_lea.vmem %s12, %s646
        $region68: #{tpu_custom_call.1} parent=35 // pred_fallthru
          _
        // Predicated region
        $region69: #{tpu_custom_call.1} parent=35 // pred_check
          %p648 = pneg %p380
        $region70: #{tpu_custom_call.1} parent=35 // pred_check_branch
          %650 = sbr.rel (%p648) target = $region72
        $region71: #{tpu_custom_call.1} parent=35 // pred_region
          %s651 = sand.u32 %s33, 1
          %s652 = scalar_lea.sflag [#allocation18], %s651
          %s653 = sand.u32 %s370, 1
          %s654 = smul.addr %s653, 256
          %s655 = scalar_lea.vmem [#allocation17], %s654
          %s656 = smul.u32 4, %s41
          %s658 = ssub.s32 4096, 4096
          %659 = vsyncadd %s652, %s658
          %s660 = smul.addr %s40, 256
          %s661 = sadd.s32 %s656, %s660
          %s662 = smul.addr %s661, 64
          %s663 = scalar_lea.hbm %s13, %s662
          %s664 = sshll.u32 %s655, 4
          %s665 = int_to_ptr.vmem [resolvable:$true] %s664
          %670 = dma.hbm_to_vmem [thread:$0]  %s663, 4096, %s665, %s652, 1024, 256, 16
        $region72: #{tpu_custom_call.1} parent=35 // pred_fallthru
          _
        // Predicated region
        $region73: #{tpu_custom_call.1} parent=35 // pred_check
          %p671 = pneg %p408
        $region74: #{tpu_custom_call.1} parent=35 // pred_check_branch
          %673 = sbr.rel (%p671) target = $region76
        $region75: #{tpu_custom_call.1} parent=35 // pred_region
          %s674 = smul.u32 4, %s41
          %p675 = scmp.lt.s32.totalorder %s40, 1
          %s676 = scalar_select %p675, %s40, 1
          %p677 = scmp.lt.s32.totalorder %s674, 15
          %s678 = scalar_select %p677, %s674, 15
          %s679 = smul.addr %s676, 16
          %s680 = sadd.s32 %s678, %s679
          %s681 = scalar_lea.vmem %s14, %s680
          %s682 = smul.u32 4, %s41
        $region76: #{tpu_custom_call.1} parent=35 // pred_fallthru
          _
        // Predicated region
        $region77: #{tpu_custom_call.1} parent=35 // pred_check
          %p683 = pneg %p436
        $region78: #{tpu_custom_call.1} parent=35 // pred_check_branch
          %685 = sbr.rel (%p683) target = $region80
        $region79: #{tpu_custom_call.1} parent=35 // pred_region
          %s686 = sand.u32 %s33, 1
          %s687 = scalar_lea.sflag [#allocation18], %s686
          %s688 = sand.u32 %s426, 1
          %s689 = smul.addr %s688, 256
          %s690 = scalar_lea.vmem [#allocation19], %s689
          %s691 = smul.u32 64, %s41
          %s693 = ssub.s32 4096, 4096
          %694 = vsyncadd %s687, %s693
          %s695 = smul.addr %s40, 256
          %s696 = sadd.s32 %s691, %s695
          %s697 = smul.addr %s696, 64
          %s698 = scalar_lea.hbm %s15, %s697
          %s699 = sshll.u32 %s690, 4
          %s700 = int_to_ptr.vmem [resolvable:$true] %s699
          %705 = dma.hbm_to_vmem [thread:$0]  %s698, 4096, %s700, %s687, 64, 64, 4
        $region80: #{tpu_custom_call.1} parent=35 // pred_fallthru
          _
        // Predicated region
        $region81: #{tpu_custom_call.1} parent=35 // pred_check
          %p706 = pneg %p462
        $region82: #{tpu_custom_call.1} parent=35 // pred_check_branch
          %708 = sbr.rel (%p706) target = $region84
        $region83: #{tpu_custom_call.1} parent=35 // pred_region
          %p709 = scmp.lt.s32.totalorder %s40, 1
          %s710 = scalar_select %p709, %s40, 1
          %s711 = scalar_lea.vmem %s16, %s710
        $region84: #{tpu_custom_call.1} parent=35 // pred_fallthru
          _
      $region36: #{tpu_custom_call.1} parent=5 // pred_fallthru
        _
      %p712 = scmp.le.s32.totalorder 1, %s33
      %p713 = scmp.lt.s32.totalorder %s33, 9
      %p714 = pnand %p712, %p713
      %p715 = pneg %p714
      // Predicated region
      $region85: #{tpu_custom_call.1} parent=5 // pred_check
        _
      $region86: #{tpu_custom_call.1} parent=5 // pred_check_branch
        %717 = sbr.rel (%p714) target = $region88
      $region87: #{tpu_custom_call.1} parent=5 // pred_region
        %s718 = ssub.s32 %s33, 1
        // Predicated region
        $region89: #{tpu_custom_call.1} parent=87 // pred_check
          %p719 = pneg %p66
        $region90: #{tpu_custom_call.1} parent=87 // pred_check_branch
          %721 = sbr.rel (%p719) target = $region92
        $region91: #{tpu_custom_call.1} parent=87 // pred_region
          %722 = dma.done [#allocation6], 256
        $region92: #{tpu_custom_call.1} parent=87 // pred_fallthru
          _
        // Predicated region
        $region93: #{tpu_custom_call.1} parent=87 // pred_check
          %p723 = pneg %p87
        $region94: #{tpu_custom_call.1} parent=87 // pred_check_branch
          %725 = sbr.rel (%p723) target = $region96
        $region95: #{tpu_custom_call.1} parent=87 // pred_region
          %726 = dma.done [#allocation9], 1024
        $region96: #{tpu_custom_call.1} parent=87 // pred_fallthru
          _
        // Predicated region
        $region97: #{tpu_custom_call.1} parent=87 // pred_check
          %p727 = pneg %p108
        $region98: #{tpu_custom_call.1} parent=87 // pred_check_branch
          %729 = sbr.rel (%p727) target = $region100
        $region99: #{tpu_custom_call.1} parent=87 // pred_region
          %730 = dma.done [#allocation9], 16
        $region100: #{tpu_custom_call.1} parent=87 // pred_fallthru
          _
        // Predicated region
        $region101: #{tpu_custom_call.1} parent=87 // pred_check
          %p731 = pneg %p129
        $region102: #{tpu_custom_call.1} parent=87 // pred_check_branch
          %733 = sbr.rel (%p731) target = $region104
        $region103: #{tpu_custom_call.1} parent=87 // pred_region
          %734 = dma.done [#allocation12], 1024
        $region104: #{tpu_custom_call.1} parent=87 // pred_fallthru
          _
        // Predicated region
        $region105: #{tpu_custom_call.1} parent=87 // pred_check
          %p735 = pneg %p150
        $region106: #{tpu_custom_call.1} parent=87 // pred_check_branch
          %737 = sbr.rel (%p735) target = $region108
        $region107: #{tpu_custom_call.1} parent=87 // pred_region
          %738 = dma.done [#allocation12], 16
        $region108: #{tpu_custom_call.1} parent=87 // pred_fallthru
          _
        %s739 = sand.u32 %s38, 1
        %s740 = scalar_lea.sflag [#allocation15], %s739
        %s741 = sand.u32 %s163, 1
        %s742 = smul.addr %s741, 192
        %s743 = scalar_lea.vmem [#allocation14], %s742
        // Predicated region
        $region109: #{tpu_custom_call.1} parent=87 // pred_check
          %p744 = pneg %p176
        $region110: #{tpu_custom_call.1} parent=87 // pred_check_branch
          %746 = sbr.rel (%p744) target = $region112
        $region111: #{tpu_custom_call.1} parent=87 // pred_region
          %747 = dma.done %s740, 3072
        $region112: #{tpu_custom_call.1} parent=87 // pred_fallthru
          _
        %s748 = sand.u32 %s38, 1
        %s749 = scalar_lea.sflag [#allocation15], %s748
        %s750 = sand.u32 %s215, 1
        %s751 = smul.addr %s750, 64
        %s752 = scalar_lea.vmem [#allocation16], %s751
        // Predicated region
        $region113: #{tpu_custom_call.1} parent=87 // pred_check
          %p753 = pneg %p228
        $region114: #{tpu_custom_call.1} parent=87 // pred_check_branch
          %755 = sbr.rel (%p753) target = $region116
        $region115: #{tpu_custom_call.1} parent=87 // pred_region
          %756 = dma.done %s749, 1024
        $region116: #{tpu_custom_call.1} parent=87 // pred_fallthru
          _
        %s757 = sand.u32 %s38, 1
        %s758 = scalar_lea.sflag [#allocation18], %s757
        %s759 = sand.u32 %s373, 1
        %s760 = smul.addr %s759, 256
        %s761 = scalar_lea.vmem [#allocation17], %s760
        // Predicated region
        $region117: #{tpu_custom_call.1} parent=87 // pred_check
          %p762 = pneg %p386
        $region118: #{tpu_custom_call.1} parent=87 // pred_check_branch
          %764 = sbr.rel (%p762) target = $region120
        $region119: #{tpu_custom_call.1} parent=87 // pred_region
          %765 = dma.done %s758, 4096
        $region120: #{tpu_custom_call.1} parent=87 // pred_fallthru
          _
        %s766 = sand.u32 %s38, 1
        %s767 = scalar_lea.sflag [#allocation18], %s766
        %s768 = sand.u32 %s429, 1
        %s769 = smul.addr %s768, 256
        %s770 = scalar_lea.vmem [#allocation19], %s769
        // Predicated region
        $region121: #{tpu_custom_call.1} parent=87 // pred_check
          %p771 = pneg %p442
        $region122: #{tpu_custom_call.1} parent=87 // pred_check_branch
          %773 = sbr.rel (%p771) target = $region124
        $region123: #{tpu_custom_call.1} parent=87 // pred_region
          %774 = dma.done %s767, 4096
        $region124: #{tpu_custom_call.1} parent=87 // pred_fallthru
          _
        %p775 = pneg %p66
        %p776 = pneg %p63
        %p777 = pneg %p87
        %p778 = pneg %p84
        %p779 = pneg %p108
        %p780 = pneg %p105
        %p781 = pneg %p129
        %p782 = pneg %p126
        %p783 = pneg %p150
        %p784 = pneg %p147
        %s785 = sand.u32 %s38, 1
        %s786 = scalar_lea.sflag [#allocation15], %s785
        %s787 = sand.u32 %s163, 1
        %s788 = smul.addr %s787, 192
        %s789 = scalar_lea.vmem [#allocation14], %s788
        %p790 = pneg %p176
        %p791 = pneg %p173
        %p792 = scmp.lt.s32.totalorder %s42, 1
        %s793 = scalar_select %p792, %s42, 1
        %s794 = smul.addr %s793, 3
        %s795 = scalar_lea.vmem %s6, %s794
        %p796 = pneg %p202
        %p797 = pneg %p199
        %s798 = sand.u32 %s38, 1
        %s799 = scalar_lea.sflag [#allocation15], %s798
        %s800 = sand.u32 %s215, 1
        %s801 = smul.addr %s800, 64
        %s802 = scalar_lea.vmem [#allocation16], %s801
        %p803 = pneg %p228
        %p804 = pneg %p225
        %p805 = scmp.lt.s32.totalorder %s42, 1
        %s806 = scalar_select %p805, %s42, 1
        %s807 = scalar_lea.vmem %s8, %s806
        %p808 = pneg %p254
        %p809 = pneg %p251
        %p810 = scmp.lt.s32.totalorder %s42, 1
        %s811 = scalar_select %p810, %s42, 1
        %s812 = scalar_lea.vmem %s9, %s811
        %p813 = pneg %p280
        %p814 = pneg %p277
        %p815 = scmp.lt.s32.totalorder %s42, 1
        %s816 = scalar_select %p815, %s42, 1
        %s817 = scalar_lea.vmem %s10, %s816
        %p818 = pneg %p306
        %p819 = pneg %p303
        %p820 = scmp.lt.s32.totalorder %s42, 1
        %s821 = scalar_select %p820, %s42, 1
        %s822 = scalar_lea.vmem %s11, %s821
        %p823 = pneg %p332
        %p824 = pneg %p329
        %p825 = scmp.lt.s32.totalorder %s42, 1
        %s826 = scalar_select %p825, %s42, 1
        %s827 = scalar_lea.vmem %s12, %s826
        %p828 = pneg %p358
        %p829 = pneg %p355
        %s830 = sand.u32 %s38, 1
        %s831 = scalar_lea.sflag [#allocation18], %s830
        %s832 = sand.u32 %s373, 1
        %s833 = smul.addr %s832, 256
        %s834 = scalar_lea.vmem [#allocation17], %s833
        %p835 = pneg %p386
        %p836 = pneg %p383
        %s837 = smul.u32 4, %s43
        %p838 = scmp.lt.s32.totalorder %s42, 1
        %s839 = scalar_select %p838, %s42, 1
        %p840 = scmp.lt.s32.totalorder %s837, 15
        %s841 = scalar_select %p840, %s837, 15
        %s842 = smul.addr %s839, 16
        %s843 = sadd.s32 %s841, %s842
        %s844 = scalar_lea.vmem %s14, %s843
        %p845 = pneg %p414
        %p846 = pneg %p411
        %s847 = sand.u32 %s38, 1
        %s848 = scalar_lea.sflag [#allocation18], %s847
        %s849 = sand.u32 %s429, 1
        %s850 = smul.addr %s849, 256
        %s851 = scalar_lea.vmem [#allocation19], %s850
        %p852 = pneg %p442
        %p853 = pneg %p439
        %p854 = scmp.lt.s32.totalorder %s42, 1
        %s855 = scalar_select %p854, %s42, 1
        %s856 = scalar_lea.vmem %s16, %s855
        %p857 = pneg %p468
        %p858 = pneg %p465
        %p859 = pneg %p489
        %p860 = pneg %p486
        %p861 = scmp.lt.s32.totalorder %s42, 1
        %s862 = scalar_select %p861, %s42, 1
        %s863 = smul.addr %s862, 3
        %s864 = scalar_lea.vmem %s6, %s863
        %p865 = scmp.lt.s32.totalorder %s42, 1
        %s866 = scalar_select %p865, %s42, 1
        %s867 = scalar_lea.vmem %s8, %s866
        %p868 = scmp.lt.s32.totalorder %s42, 1
        %s869 = scalar_select %p868, %s42, 1
        %s870 = scalar_lea.vmem %s9, %s869
        %p871 = scmp.lt.s32.totalorder %s42, 1
        %s872 = scalar_select %p871, %s42, 1
        %s873 = scalar_lea.vmem %s10, %s872
        %p874 = scmp.lt.s32.totalorder %s42, 1
        %s875 = scalar_select %p874, %s42, 1
        %s876 = scalar_lea.vmem %s11, %s875
        %p877 = scmp.lt.s32.totalorder %s42, 1
        %s878 = scalar_select %p877, %s42, 1
        %s879 = scalar_lea.vmem %s12, %s878
        %s880 = smul.u32 4, %s43
        %s881 = smul.u32 4, %s43
        %p882 = scmp.lt.s32.totalorder %s42, 1
        %s883 = scalar_select %p882, %s42, 1
        %p884 = scmp.lt.s32.totalorder %s881, 15
        %s885 = scalar_select %p884, %s881, 15
        %s886 = smul.addr %s883, 16
        %s887 = sadd.s32 %s885, %s886
        %s888 = scalar_lea.vmem %s14, %s887
        %s889 = smul.u32 4, %s43
        %s890 = smul.u32 64, %s43
        %p891 = scmp.lt.s32.totalorder %s42, 1
        %s892 = scalar_select %p891, %s42, 1
        %s893 = scalar_lea.vmem %s16, %s892
        %p895 = scmp.eq.s32.totalorder %s42, 0
        %p896 = scmp.eq.s32.totalorder %s43, 0
        %p897 = pnand %p895, %p896
        %p898 = pneg %p897
        // Predicated region
        $region125: #{tpu_custom_call.1} parent=87 // pred_check
          _
        $region126: #{tpu_custom_call.1} parent=87 // pred_check_branch
          %900 = sbr.rel (%p897) target = $region128
        $region127: #{tpu_custom_call.1} parent=87 // pred_region
          %v901 = vld [vmem:[#allocation5] sm:$0xff]
          %v902 = vld [vmem:[#allocation5 + $0x8] sm:$0xff]
          %v903 = vld [vmem:[#allocation8] sm:$0xf]
          %v904 = vld [vmem:[#allocation8 + $0x4] sm:$0xf]
          %v905 = vld [vmem:[#allocation8 + $0x8] sm:$0xf]
          %v906 = vld [vmem:[#allocation8 + $0xc] sm:$0xf]
          %v907 = vld [vmem:[#allocation8 + $0x10] sm:$0xf]
          %v908 = vld [vmem:[#allocation8 + $0x14] sm:$0xf]
          %v909 = vld [vmem:[#allocation8 + $0x18] sm:$0xf]
          %v910 = vld [vmem:[#allocation8 + $0x1c] sm:$0xf]
          %v911 = vld [vmem:[#allocation8 + $0x20] sm:$0xf]
          %v912 = vld [vmem:[#allocation8 + $0x24] sm:$0xf]
          %v913 = vld [vmem:[#allocation8 + $0x28] sm:$0xf]
          %v914 = vld [vmem:[#allocation8 + $0x2c] sm:$0xf]
          %v915 = vld [vmem:[#allocation8 + $0x30] sm:$0xf]
          %v916 = vld [vmem:[#allocation8 + $0x34] sm:$0xf]
          %v917 = vld [vmem:[#allocation8 + $0x38] sm:$0xf]
          %v918 = vld [vmem:[#allocation8 + $0x3c] sm:$0xf]
          %v919 = vpack.c.bf16 %v902, %v901
          %v920 = vld [vmem:[#allocation10] sm:$0x1]
          %v922 = vlaneseq
          %v923 = vshrl.u32 %v922, 7
          %v924 = vsub.s32 0, %v923
          %v925 = vrot.slane %v920, %v924
          %v943 = vunpack.c.l.b16 %v903
          %v944 = vunpack.c.l.b16 %v904
          %v945 = vunpack.c.l.b16 %v905
          %v946 = vunpack.c.l.b16 %v906
          %v947 = vunpack.c.l.b16 %v907
          %v948 = vunpack.c.l.b16 %v908
          %v949 = vunpack.c.l.b16 %v909
          %v950 = vunpack.c.l.b16 %v910
          %v951 = vunpack.c.l.b16 %v911
          %v952 = vunpack.c.l.b16 %v912
          %v953 = vunpack.c.l.b16 %v913
          %v954 = vunpack.c.l.b16 %v914
          %v955 = vunpack.c.l.b16 %v915
          %v956 = vunpack.c.l.b16 %v916
          %v957 = vunpack.c.l.b16 %v917
          %v958 = vunpack.c.l.b16 %v918
          %v959 = vpack.c.b16 %v944, %v943
          %v960 = vpack.c.b16 %v946, %v945
          %v961 = vpack.c.b16 %v948, %v947
          %v962 = vpack.c.b16 %v950, %v949
          %v963 = vpack.c.b16 %v952, %v951
          %v964 = vpack.c.b16 %v954, %v953
          %v965 = vpack.c.b16 %v956, %v955
          %v966 = vpack.c.b16 %v958, %v957
          %975 = vmatprep.subr.bf16.mxu0 0
          %976 = vmatpush1.bf16.msra.mxu0 %v959
          %977 = vmatprep.subr.bf16.mxu0 0
          %978 = vmatpush1.bf16.msra.mxu0 %v960
          %979 = vmatprep.subr.bf16.mxu0 0
          %980 = vmatpush1.bf16.msra.mxu0 %v961
          %981 = vmatprep.subr.bf16.mxu0 0
          %982 = vmatpush1.bf16.msra.mxu0 %v962
          %983 = vmatprep.subr.bf16.mxu0 0
          %984 = vmatpush1.bf16.msra.mxu0 %v963
          %985 = vmatprep.subr.bf16.mxu0 0
          %986 = vmatpush1.bf16.msra.mxu0 %v964
          %987 = vmatprep.subr.bf16.mxu0 0
          %988 = vmatpush1.bf16.msra.mxu0 %v965
          %989 = vmatprep.subr.bf16.mxu0 0
          %990 = vmatpush1.bf16.msra.mxu0 %v966
          %991 = vmatprep.subr.bf16.mxu0 0
          %992 = vmatpush1.bf16.msra.mxu0 0
          %993 = vmatprep.subr.bf16.mxu0 0
          %994 = vmatpush1.bf16.msra.mxu0 0
          %995 = vmatprep.subr.bf16.mxu0 0
          %996 = vmatpush1.bf16.msra.mxu0 0
          %997 = vmatprep.subr.bf16.mxu0 0
          %998 = vmatpush1.bf16.msra.mxu0 0
          %999 = vmatprep.subr.bf16.mxu0 0
          %1000 = vmatpush1.bf16.msra.mxu0 0
          %1001 = vmatprep.subr.bf16.mxu0 0
          %1002 = vmatpush1.bf16.msra.mxu0 0
          %1003 = vmatprep.subr.bf16.mxu0 0
          %1004 = vmatpush1.bf16.msra.mxu0 0
          %1005 = vmatprep.subr.bf16.mxu0 0
          %1006 = vmatpush1.bf16.msra.mxu0 0
          %1007 = vmatprep.mubr.bf16.mxu0 0
          %1008 = vmatmul.mubr.bf16.gmra.mrb[0].mxu0 %v919
          %v1009 = vpop.f32.mrb[0].mxu0
          %v1010 = vadd.f32 %v925, %v1009
          %v1011 = vpop.f32.mrb[0].mxu0
          %v1012 = vpop.f32.mrb[0].mxu0
          %v1013 = vadd.f32 %v925, %v1012
          %v1014 = vpop.f32.mrb[0].mxu0
          %1015 = vdwg.mxu0
          %1016 = vst [vmem:[#allocation2] sm:$0xff] %v1010
          %1017 = vst [vmem:[#allocation2 + $0x8] sm:$0xff] %v1013
        $region128: #{tpu_custom_call.1} parent=87 // pred_fallthru
          _
        // Predicated region
        $region129: #{tpu_custom_call.1} parent=87 // pred_check
          %p1018 = pneg %p896
        $region130: #{tpu_custom_call.1} parent=87 // pred_check_branch
          %1020 = sbr.rel (%p1018) target = $region132
        $region131: #{tpu_custom_call.1} parent=87 // pred_region
          %v1021 = vld [vmem:[#allocation2] sm:$0xff]
          %v1022 = vld [vmem:[#allocation2 + $0x8] sm:$0xff]
          %v1023 = vld [vmem:[%s743] sm:$0xff]
          %v1024 = vld [vmem:[%s743 + $0x8] sm:$0xf]
          %v1025 = vld [vmem:[%s743 + $0xc] sm:$0xff]
          %v1026 = vld [vmem:[%s743 + $0x14] sm:$0xf]
          %v1027 = vld [vmem:[%s743 + $0x18] sm:$0xff]
          %v1028 = vld [vmem:[%s743 + $0x20] sm:$0xf]
          %v1029 = vld [vmem:[%s743 + $0x24] sm:$0xff]
          %v1030 = vld [vmem:[%s743 + $0x2c] sm:$0xf]
          %v1031 = vld [vmem:[%s743 + $0x30] sm:$0xff]
          %v1032 = vld [vmem:[%s743 + $0x38] sm:$0xf]
          %v1033 = vld [vmem:[%s743 + $0x3c] sm:$0xff]
          %v1034 = vld [vmem:[%s743 + $0x44] sm:$0xf]
          %v1035 = vld [vmem:[%s743 + $0x48] sm:$0xff]
          %v1036 = vld [vmem:[%s743 + $0x50] sm:$0xf]
          %v1037 = vld [vmem:[%s743 + $0x54] sm:$0xff]
          %v1038 = vld [vmem:[%s743 + $0x5c] sm:$0xf]
          %v1039 = vld [vmem:[%s743 + $0x60] sm:$0xff]
          %v1040 = vld [vmem:[%s743 + $0x68] sm:$0xf]
          %v1041 = vld [vmem:[%s743 + $0x6c] sm:$0xff]
          %v1042 = vld [vmem:[%s743 + $0x74] sm:$0xf]
          %v1043 = vld [vmem:[%s743 + $0x78] sm:$0xff]
          %v1044 = vld [vmem:[%s743 + $0x80] sm:$0xf]
          %v1045 = vld [vmem:[%s743 + $0x84] sm:$0xff]
          %v1046 = vld [vmem:[%s743 + $0x8c] sm:$0xf]
          %v1047 = vld [vmem:[%s743 + $0x90] sm:$0xff]
          %v1048 = vld [vmem:[%s743 + $0x98] sm:$0xf]
          %v1049 = vld [vmem:[%s743 + $0x9c] sm:$0xff]
          %v1050 = vld [vmem:[%s743 + $0xa4] sm:$0xf]
          %v1051 = vld [vmem:[%s743 + $0xa8] sm:$0xff]
          %v1052 = vld [vmem:[%s743 + $0xb0] sm:$0xf]
          %v1053 = vld [vmem:[%s743 + $0xb4] sm:$0xff]
          %v1054 = vld [vmem:[%s743 + $0xbc] sm:$0xf]
          %v1055 = vpack.c.bf16 %v1022, %v1021
          %v1056 = vld [vmem:[%s864] sm:$0x7]
          %v1058 = vlaneseq
          %v1059 = vshrl.u32 %v1058, 7
          %v1060 = vsub.s32 0, %v1059
          %v1061 = vrot.slane %v1056, %v1060
          %v1062 = vlaneseq
          %v1063 = vshrl.u32 %v1062, 7
          %v1064 = vsub.s32 1, %v1063
          %v1065 = vrot.slane %v1056, %v1064
          %v1066 = vlaneseq
          %v1067 = vshrl.u32 %v1066, 7
          %v1068 = vsub.s32 2, %v1067
          %v1069 = vrot.slane %v1056, %v1068
          %v1105 = vunpack.c.l.b16 %v1023
          %v1106 = vunpack.c.h.b16 %v1023
          %v1107 = vunpack.c.l.b16 %v1024
          %v1108 = vunpack.c.l.b16 %v1025
          %v1109 = vunpack.c.h.b16 %v1025
          %v1110 = vunpack.c.l.b16 %v1026
          %v1111 = vunpack.c.l.b16 %v1027
          %v1112 = vunpack.c.h.b16 %v1027
          %v1113 = vunpack.c.l.b16 %v1028
          %v1114 = vunpack.c.l.b16 %v1029
          %v1115 = vunpack.c.h.b16 %v1029
          %v1116 = vunpack.c.l.b16 %v1030
          %v1117 = vunpack.c.l.b16 %v1031
          %v1118 = vunpack.c.h.b16 %v1031
          %v1119 = vunpack.c.l.b16 %v1032
          %v1120 = vunpack.c.l.b16 %v1033
          %v1121 = vunpack.c.h.b16 %v1033
          %v1122 = vunpack.c.l.b16 %v1034
          %v1123 = vunpack.c.l.b16 %v1035
          %v1124 = vunpack.c.h.b16 %v1035
          %v1125 = vunpack.c.l.b16 %v1036
          %v1126 = vunpack.c.l.b16 %v1037
          %v1127 = vunpack.c.h.b16 %v1037
          %v1128 = vunpack.c.l.b16 %v1038
          %v1129 = vunpack.c.l.b16 %v1039
          %v1130 = vunpack.c.h.b16 %v1039
          %v1131 = vunpack.c.l.b16 %v1040
          %v1132 = vunpack.c.l.b16 %v1041
          %v1133 = vunpack.c.h.b16 %v1041
          %v1134 = vunpack.c.l.b16 %v1042
          %v1135 = vunpack.c.l.b16 %v1043
          %v1136 = vunpack.c.h.b16 %v1043
          %v1137 = vunpack.c.l.b16 %v1044
          %v1138 = vunpack.c.l.b16 %v1045
          %v1139 = vunpack.c.h.b16 %v1045
          %v1140 = vunpack.c.l.b16 %v1046
          %v1141 = vunpack.c.l.b16 %v1047
          %v1142 = vunpack.c.h.b16 %v1047
          %v1143 = vunpack.c.l.b16 %v1048
          %v1144 = vunpack.c.l.b16 %v1049
          %v1145 = vunpack.c.h.b16 %v1049
          %v1146 = vunpack.c.l.b16 %v1050
          %v1147 = vunpack.c.l.b16 %v1051
          %v1148 = vunpack.c.h.b16 %v1051
          %v1149 = vunpack.c.l.b16 %v1052
          %v1150 = vunpack.c.l.b16 %v1053
          %v1151 = vunpack.c.h.b16 %v1053
          %v1152 = vunpack.c.l.b16 %v1054
          %v1153 = vpack.c.b16 %v1108, %v1105
          %v1154 = vpack.c.b16 %v1109, %v1106
          %v1155 = vpack.c.b16 %v1110, %v1107
          %v1156 = vpack.c.b16 %v1114, %v1111
          %v1157 = vpack.c.b16 %v1115, %v1112
          %v1158 = vpack.c.b16 %v1116, %v1113
          %v1159 = vpack.c.b16 %v1120, %v1117
          %v1160 = vpack.c.b16 %v1121, %v1118
          %v1161 = vpack.c.b16 %v1122, %v1119
          %v1162 = vpack.c.b16 %v1126, %v1123
          %v1163 = vpack.c.b16 %v1127, %v1124
          %v1164 = vpack.c.b16 %v1128, %v1125
          %v1165 = vpack.c.b16 %v1132, %v1129
          %v1166 = vpack.c.b16 %v1133, %v1130
          %v1167 = vpack.c.b16 %v1134, %v1131
          %v1168 = vpack.c.b16 %v1138, %v1135
          %v1169 = vpack.c.b16 %v1139, %v1136
          %v1170 = vpack.c.b16 %v1140, %v1137
          %v1171 = vpack.c.b16 %v1144, %v1141
          %v1172 = vpack.c.b16 %v1145, %v1142
          %v1173 = vpack.c.b16 %v1146, %v1143
          %v1174 = vpack.c.b16 %v1150, %v1147
          %v1175 = vpack.c.b16 %v1151, %v1148
          %v1176 = vpack.c.b16 %v1152, %v1149
          %1201 = vmatprep.subr.bf16.mxu0 %v1154
          %1202 = vmatpush1.bf16.msra.mxu0 %v1153
          %1203 = vmatprep.subr.bf16.mxu0 %v1157
          %1204 = vmatpush1.bf16.msra.mxu0 %v1156
          %1205 = vmatprep.subr.bf16.mxu0 %v1160
          %1206 = vmatpush1.bf16.msra.mxu0 %v1159
          %1207 = vmatprep.subr.bf16.mxu0 %v1163
          %1208 = vmatpush1.bf16.msra.mxu0 %v1162
          %1209 = vmatprep.subr.bf16.mxu0 %v1166
          %1210 = vmatpush1.bf16.msra.mxu0 %v1165
          %1211 = vmatprep.subr.bf16.mxu0 %v1169
          %1212 = vmatpush1.bf16.msra.mxu0 %v1168
          %1213 = vmatprep.subr.bf16.mxu0 %v1172
          %1214 = vmatpush1.bf16.msra.mxu0 %v1171
          %1215 = vmatprep.subr.bf16.mxu0 %v1175
          %1216 = vmatpush1.bf16.msra.mxu0 %v1174
          %1217 = vmatprep.subr.bf16.mxu0 0
          %1218 = vmatpush1.bf16.msra.mxu0 0
          %1219 = vmatprep.subr.bf16.mxu0 0
          %1220 = vmatpush1.bf16.msra.mxu0 0
          %1221 = vmatprep.subr.bf16.mxu0 0
          %1222 = vmatpush1.bf16.msra.mxu0 0
          %1223 = vmatprep.subr.bf16.mxu0 0
          %1224 = vmatpush1.bf16.msra.mxu0 0
          %1225 = vmatprep.subr.bf16.mxu0 0
          %1226 = vmatpush1.bf16.msra.mxu0 0
          %1227 = vmatprep.subr.bf16.mxu0 0
          %1228 = vmatpush1.bf16.msra.mxu0 0
          %1229 = vmatprep.subr.bf16.mxu0 0
          %1230 = vmatpush1.bf16.msra.mxu0 0
          %1231 = vmatprep.subr.bf16.mxu0 0
          %1232 = vmatpush1.bf16.msra.mxu0 0
          %1233 = vmatprep.mubr.bf16.mxu0 0
          %1234 = vmatmul.mubr.bf16.gmra.mrb[0].mxu0 %v1055
          %v1235 = vpop.f32.mrb[0].mxu0
          %v1236 = vadd.f32 %v1061, %v1235
          %v1237 = vpop.f32.mrb[0].mxu0
          %v1238 = vadd.f32 %v1065, %v1237
          %v1239 = vpop.f32.mrb[0].mxu0
          %v1240 = vadd.f32 %v1061, %v1239
          %v1241 = vpop.f32.mrb[0].mxu0
          %v1242 = vadd.f32 %v1065, %v1241
          %1243 = vdwg.mxu0
          %1244 = vmatprep.subr.bf16.mxu0 0
          %1245 = vmatpush1.bf16.msra.mxu0 %v1155
          %1246 = vmatprep.subr.bf16.mxu0 0
          %1247 = vmatpush1.bf16.msra.mxu0 %v1158
          %1248 = vmatprep.subr.bf16.mxu0 0
          %1249 = vmatpush1.bf16.msra.mxu0 %v1161
          %1250 = vmatprep.subr.bf16.mxu0 0
          %1251 = vmatpush1.bf16.msra.mxu0 %v1164
          %1252 = vmatprep.subr.bf16.mxu0 0
          %1253 = vmatpush1.bf16.msra.mxu0 %v1167
          %1254 = vmatprep.subr.bf16.mxu0 0
          %1255 = vmatpush1.bf16.msra.mxu0 %v1170
          %1256 = vmatprep.subr.bf16.mxu0 0
          %1257 = vmatpush1.bf16.msra.mxu0 %v1173
          %1258 = vmatprep.subr.bf16.mxu0 0
          %1259 = vmatpush1.bf16.msra.mxu0 %v1176
          %1260 = vmatprep.subr.bf16.mxu0 0
          %1261 = vmatpush1.bf16.msra.mxu0 0
          %1262 = vmatprep.subr.bf16.mxu0 0
          %1263 = vmatpush1.bf16.msra.mxu0 0
          %1264 = vmatprep.subr.bf16.mxu0 0
          %1265 = vmatpush1.bf16.msra.mxu0 0
          %1266 = vmatprep.subr.bf16.mxu0 0
          %1267 = vmatpush1.bf16.msra.mxu0 0
          %1268 = vmatprep.subr.bf16.mxu0 0
          %1269 = vmatpush1.bf16.msra.mxu0 0
          %1270 = vmatprep.subr.bf16.mxu0 0
          %1271 = vmatpush1.bf16.msra.mxu0 0
          %1272 = vmatprep.subr.bf16.mxu0 0
          %1273 = vmatpush1.bf16.msra.mxu0 0
          %1274 = vmatprep.subr.bf16.mxu0 0
          %1275 = vmatpush1.bf16.msra.mxu0 0
          %1276 = vmatprep.mubr.bf16.mxu0 0
          %1277 = vmatmul.mubr.bf16.gmra.mrb[0].mxu0 %v1055
          %v1278 = vpop.f32.mrb[0].mxu0
          %v1279 = vadd.f32 %v1069, %v1278
          %v1280 = vpop.f32.mrb[0].mxu0
          %v1281 = vpop.f32.mrb[0].mxu0
          %v1282 = vadd.f32 %v1069, %v1281
          %v1283 = vpop.f32.mrb[0].mxu0
          %1284 = vdwg.mxu0
          %v1285 = vpack.c.bf16 %v1236, %v1236
          %v1286 = vpack.c.bf16 %v1240, %v1240
          %v1287 = vpack.c.bf16 %v1238, %v1238
          %v1288 = vpack.c.bf16 %v1242, %v1242
          %v1289 = vpack.c.bf16 %v1279, %v1279
          %v1290 = vpack.c.bf16 %v1282, %v1282
          %vm1291 = vcmask 261120
          %v1293 = vsel %vm1291, %v1285, 0
          %v1296 = vsel %vm1291, %v1287, 0
          %1298 = vmatprep.subr.bf16.mxu0 0
          %1299 = vmatpush1.bf16.xpose.msra.mxu0 %v1296
          %1300 = vmatprep.subr.bf16.mxu0 0
          %1301 = vmatpush1.bf16.xpose.msra.mxu0 0
          %1302 = vmatprep.subr.bf16.mxu0 0
          %1303 = vmatpush1.bf16.xpose.msra.mxu0 0
          %1304 = vmatprep.subr.bf16.mxu0 0
          %1305 = vmatpush1.bf16.xpose.msra.mxu0 0
          %1306 = vmatprep.subr.bf16.mxu0 0
          %1307 = vmatpush1.bf16.xpose.msra.mxu0 0
          %1308 = vmatprep.subr.bf16.mxu0 0
          %1309 = vmatpush1.bf16.xpose.msra.mxu0 0
          %1310 = vmatprep.subr.bf16.mxu0 0
          %1311 = vmatpush1.bf16.xpose.msra.mxu0 0
          %1312 = vmatprep.subr.bf16.mxu0 0
          %1313 = vmatpush1.bf16.xpose.msra.mxu0 0
          %1314 = vmatprep.subr.bf16.mxu0 0
          %1315 = vmatpush1.bf16.xpose.msra.mxu0 0
          %1316 = vmatprep.subr.bf16.mxu0 0
          %1317 = vmatpush1.bf16.xpose.msra.mxu0 0
          %1318 = vmatprep.subr.bf16.mxu0 0
          %1319 = vmatpush1.bf16.xpose.msra.mxu0 0
          %1320 = vmatprep.subr.bf16.mxu0 0
          %1321 = vmatpush1.bf16.xpose.msra.mxu0 0
          %1322 = vmatprep.subr.bf16.mxu0 0
          %1323 = vmatpush1.bf16.xpose.msra.mxu0 0
          %1324 = vmatprep.subr.bf16.mxu0 0
          %1325 = vmatpush1.bf16.xpose.msra.mxu0 0
          %1326 = vmatprep.subr.bf16.mxu0 0
          %1327 = vmatpush1.bf16.xpose.msra.mxu0 0
          %1328 = vmatprep.subr.bf16.mxu0 0
          %1329 = vmatpush1.bf16.xpose.msra.mxu0 0
          %1330 = vmatprep.mubr.bf16.mxu0 0
          %1331 = vmatmul.mubr.bf16.gmra.mrb[0].mxu0 %v1293
          %v1332 = vpop.f32.mrb[0].mxu0
          %v1333 = vadd.f32 0.0, %v1332
          %v1334 = vpop.f32.mrb[0].mxu0
          %v1335 = vpop.f32.mrb[0].mxu0
          %v1336 = vpop.f32.mrb[0].mxu0
          %1337 = vdwg.mxu0
          %v1339 = vsel %vm1291, %v1286, 0
          %v1342 = vsel %vm1291, %v1288, 0
          %1344 = vmatprep.subr.bf16.mxu0 0
          %1345 = vmatpush1.bf16.xpose.msra.mxu0 %v1342
          %1346 = vmatprep.subr.bf16.mxu0 0
          %1347 = vmatpush1.bf16.xpose.msra.mxu0 0
          %1348 = vmatprep.subr.bf16.mxu0 0
          %1349 = vmatpush1.bf16.xpose.msra.mxu0 0
          %1350 = vmatprep.subr.bf16.mxu0 0
          %1351 = vmatpush1.bf16.xpose.msra.mxu0 0
          %1352 = vmatprep.subr.bf16.mxu0 0
          %1353 = vmatpush1.bf16.xpose.msra.mxu0 0
          %1354 = vmatprep.subr.bf16.mxu0 0
          %1355 = vmatpush1.bf16.xpose.msra.mxu0 0
          %1356 = vmatprep.subr.bf16.mxu0 0
          %1357 = vmatpush1.bf16.xpose.msra.mxu0 0
          %1358 = vmatprep.subr.bf16.mxu0 0
          %1359 = vmatpush1.bf16.xpose.msra.mxu0 0
          %1360 = vmatprep.subr.bf16.mxu0 0
          %1361 = vmatpush1.bf16.xpose.msra.mxu0 0
          %1362 = vmatprep.subr.bf16.mxu0 0
          %1363 = vmatpush1.bf16.xpose.msra.mxu0 0
          %1364 = vmatprep.subr.bf16.mxu0 0
          %1365 = vmatpush1.bf16.xpose.msra.mxu0 0
          %1366 = vmatprep.subr.bf16.mxu0 0
          %1367 = vmatpush1.bf16.xpose.msra.mxu0 0
          %1368 = vmatprep.subr.bf16.mxu0 0
          %1369 = vmatpush1.bf16.xpose.msra.mxu0 0
          %1370 = vmatprep.subr.bf16.mxu0 0
          %1371 = vmatpush1.bf16.xpose.msra.mxu0 0
          %1372 = vmatprep.subr.bf16.mxu0 0
          %1373 = vmatpush1.bf16.xpose.msra.mxu0 0
          %1374 = vmatprep.subr.bf16.mxu0 0
          %1375 = vmatpush1.bf16.xpose.msra.mxu0 0
          %1376 = vmatprep.mubr.bf16.mxu0 0
          %1377 = vmatmul.mubr.bf16.gmra.mrb[0].mxu0 %v1339
          %v1378 = vpop.f32.mrb[0].mxu0
          %v1379 = vadd.f32 0.0, %v1378
          %v1380 = vpop.f32.mrb[0].mxu0
          %v1381 = vpop.f32.mrb[0].mxu0
          %v1382 = vpop.f32.mrb[0].mxu0
          %1383 = vdwg.mxu0
          %v1384 = vmul.f32 %v1333, 0.17677669
          %v1385 = vmul.f32 %v1379, 0.17677669
          %vm1386 = vcmask 64512
          %v1387 = vsel %vm1386, %v1384, -inf
          %1388 = vmax.xlane.f32.xlu0 %v1387
          %v1389 = vpop.xlane.xlu0 %1388
          %v1390 = vsel %vm1386, %v1385, -inf
          %1391 = vmax.xlane.f32.xlu0 %v1390
          %v1392 = vpop.xlane.xlu0 %1391
          %v1393 = vsub.f32 %v1384, %v1389
          %v1394 = vsub.f32 %v1385, %v1392
          %v1395 = vmul.f32 %v1393, 1.442695
          %v1396 = vpow.pop %v1395
          %v1397 = vmul.f32 %v1394, 1.442695
          %v1398 = vpow.pop %v1397
          %v1399 = vsel %vm1386, %v1396, 0.0
          %1400 = vadd.xlane.f32.xlu0 %v1399
          %v1401 = vpop.xlane.xlu0 %1400
          %v1402 = vsel %vm1386, %v1398, 0.0
          %1403 = vadd.xlane.f32.xlu0 %v1402
          %v1404 = vpop.xlane.xlu0 %1403
          %v1405 = vrcp.pop %v1401
          %v1406 = vrcp.pop %v1404
          %v1407 = vmul.f32 %v1396, %v1405
          %v1408 = vmul.f32 %v1398, %v1406
          %v1409 = vpack.c.bf16 %v1407, %v1407
          %v1410 = vpack.c.bf16 %v1408, %v1408
          %v1412 = vsel %vm1386, %v1409, 0
          %vm1414 = vcmask 1043456
          %v1416 = vsel %vm1414, %v1289, 0
          %1418 = vmatprep.subr.bf16.mxu0 0
          %1419 = vmatpush1.bf16.msra.mxu0 %v1416
          %1420 = vmatprep.subr.bf16.mxu0 0
          %1421 = vmatpush1.bf16.msra.mxu0 0
          %1422 = vmatprep.subr.bf16.mxu0 0
          %1423 = vmatpush1.bf16.msra.mxu0 0
          %1424 = vmatprep.subr.bf16.mxu0 0
          %1425 = vmatpush1.bf16.msra.mxu0 0
          %1426 = vmatprep.subr.bf16.mxu0 0
          %1427 = vmatpush1.bf16.msra.mxu0 0
          %1428 = vmatprep.subr.bf16.mxu0 0
          %1429 = vmatpush1.bf16.msra.mxu0 0
          %1430 = vmatprep.subr.bf16.mxu0 0
          %1431 = vmatpush1.bf16.msra.mxu0 0
          %1432 = vmatprep.subr.bf16.mxu0 0
          %1433 = vmatpush1.bf16.msra.mxu0 0
          %1434 = vmatprep.subr.bf16.mxu0 0
          %1435 = vmatpush1.bf16.msra.mxu0 0
          %1436 = vmatprep.subr.bf16.mxu0 0
          %1437 = vmatpush1.bf16.msra.mxu0 0
          %1438 = vmatprep.subr.bf16.mxu0 0
          %1439 = vmatpush1.bf16.msra.mxu0 0
          %1440 = vmatprep.subr.bf16.mxu0 0
          %1441 = vmatpush1.bf16.msra.mxu0 0
          %1442 = vmatprep.subr.bf16.mxu0 0
          %1443 = vmatpush1.bf16.msra.mxu0 0
          %1444 = vmatprep.subr.bf16.mxu0 0
          %1445 = vmatpush1.bf16.msra.mxu0 0
          %1446 = vmatprep.subr.bf16.mxu0 0
          %1447 = vmatpush1.bf16.msra.mxu0 0
          %1448 = vmatprep.subr.bf16.mxu0 0
          %1449 = vmatpush1.bf16.msra.mxu0 0
          %1450 = vmatprep.mubr.bf16.mxu0 0
          %1451 = vmatmul.mubr.bf16.gmra.mrb[0].mxu0 %v1412
          %v1452 = vpop.f32.mrb[0].mxu0
          %v1453 = vadd.f32 0.0, %v1452
          %v1454 = vpop.f32.mrb[0].mxu0
          %v1455 = vpop.f32.mrb[0].mxu0
          %v1456 = vpop.f32.mrb[0].mxu0
          %1457 = vdwg.mxu0
          %v1459 = vsel %vm1386, %v1410, 0
          %v1462 = vsel %vm1414, %v1290, 0
          %1464 = vmatprep.subr.bf16.mxu0 0
          %1465 = vmatpush1.bf16.msra.mxu0 %v1462
          %1466 = vmatprep.subr.bf16.mxu0 0
          %1467 = vmatpush1.bf16.msra.mxu0 0
          %1468 = vmatprep.subr.bf16.mxu0 0
          %1469 = vmatpush1.bf16.msra.mxu0 0
          %1470 = vmatprep.subr.bf16.mxu0 0
          %1471 = vmatpush1.bf16.msra.mxu0 0
          %1472 = vmatprep.subr.bf16.mxu0 0
          %1473 = vmatpush1.bf16.msra.mxu0 0
          %1474 = vmatprep.subr.bf16.mxu0 0
          %1475 = vmatpush1.bf16.msra.mxu0 0
          %1476 = vmatprep.subr.bf16.mxu0 0
          %1477 = vmatpush1.bf16.msra.mxu0 0
          %1478 = vmatprep.subr.bf16.mxu0 0
          %1479 = vmatpush1.bf16.msra.mxu0 0
          %1480 = vmatprep.subr.bf16.mxu0 0
          %1481 = vmatpush1.bf16.msra.mxu0 0
          %1482 = vmatprep.subr.bf16.mxu0 0
          %1483 = vmatpush1.bf16.msra.mxu0 0
          %1484 = vmatprep.subr.bf16.mxu0 0
          %1485 = vmatpush1.bf16.msra.mxu0 0
          %1486 = vmatprep.subr.bf16.mxu0 0
          %1487 = vmatpush1.bf16.msra.mxu0 0
          %1488 = vmatprep.subr.bf16.mxu0 0
          %1489 = vmatpush1.bf16.msra.mxu0 0
          %1490 = vmatprep.subr.bf16.mxu0 0
          %1491 = vmatpush1.bf16.msra.mxu0 0
          %1492 = vmatprep.subr.bf16.mxu0 0
          %1493 = vmatpush1.bf16.msra.mxu0 0
          %1494 = vmatprep.subr.bf16.mxu0 0
          %1495 = vmatpush1.bf16.msra.mxu0 0
          %1496 = vmatprep.mubr.bf16.mxu0 0
          %1497 = vmatmul.mubr.bf16.gmra.mrb[0].mxu0 %v1459
          %v1498 = vpop.f32.mrb[0].mxu0
          %v1499 = vadd.f32 0.0, %v1498
          %v1500 = vpop.f32.mrb[0].mxu0
          %v1501 = vpop.f32.mrb[0].mxu0
          %v1502 = vpop.f32.mrb[0].mxu0
          %1503 = vdwg.mxu0
          %1505 = vrot.lane.b32.xlu0 %v1285, 96
          %v1506 = vpop.permute.xlu0 %1505
          %1508 = vrot.lane.b32.xlu0 %v1287, 96
          %v1509 = vpop.permute.xlu0 %1508
          %v1511 = vsel %vm1291, %v1506, 0
          %v1514 = vsel %vm1291, %v1509, 0
          %1516 = vmatprep.subr.bf16.mxu0 0
          %1517 = vmatpush1.bf16.xpose.msra.mxu0 %v1514
          %1518 = vmatprep.subr.bf16.mxu0 0
          %1519 = vmatpush1.bf16.xpose.msra.mxu0 0
          %1520 = vmatprep.subr.bf16.mxu0 0
          %1521 = vmatpush1.bf16.xpose.msra.mxu0 0
          %1522 = vmatprep.subr.bf16.mxu0 0
          %1523 = vmatpush1.bf16.xpose.msra.mxu0 0
          %1524 = vmatprep.subr.bf16.mxu0 0
          %1525 = vmatpush1.bf16.xpose.msra.mxu0 0
          %1526 = vmatprep.subr.bf16.mxu0 0
          %1527 = vmatpush1.bf16.xpose.msra.mxu0 0
          %1528 = vmatprep.subr.bf16.mxu0 0
          %1529 = vmatpush1.bf16.xpose.msra.mxu0 0
          %1530 = vmatprep.subr.bf16.mxu0 0
          %1531 = vmatpush1.bf16.xpose.msra.mxu0 0
          %1532 = vmatprep.subr.bf16.mxu0 0
          %1533 = vmatpush1.bf16.xpose.msra.mxu0 0
          %1534 = vmatprep.subr.bf16.mxu0 0
          %1535 = vmatpush1.bf16.xpose.msra.mxu0 0
          %1536 = vmatprep.subr.bf16.mxu0 0
          %1537 = vmatpush1.bf16.xpose.msra.mxu0 0
          %1538 = vmatprep.subr.bf16.mxu0 0
          %1539 = vmatpush1.bf16.xpose.msra.mxu0 0
          %1540 = vmatprep.subr.bf16.mxu0 0
          %1541 = vmatpush1.bf16.xpose.msra.mxu0 0
          %1542 = vmatprep.subr.bf16.mxu0 0
          %1543 = vmatpush1.bf16.xpose.msra.mxu0 0
          %1544 = vmatprep.subr.bf16.mxu0 0
          %1545 = vmatpush1.bf16.xpose.msra.mxu0 0
          %1546 = vmatprep.subr.bf16.mxu0 0
          %1547 = vmatpush1.bf16.xpose.msra.mxu0 0
          %1548 = vmatprep.mubr.bf16.mxu0 0
          %1549 = vmatmul.mubr.bf16.gmra.mrb[0].mxu0 %v1511
          %v1550 = vpop.f32.mrb[0].mxu0
          %v1551 = vadd.f32 0.0, %v1550
          %v1552 = vpop.f32.mrb[0].mxu0
          %v1553 = vpop.f32.mrb[0].mxu0
          %v1554 = vpop.f32.mrb[0].mxu0
          %1555 = vdwg.mxu0
          %1557 = vrot.lane.b32.xlu0 %v1286, 96
          %v1558 = vpop.permute.xlu0 %1557
          %1560 = vrot.lane.b32.xlu0 %v1288, 96
          %v1561 = vpop.permute.xlu0 %1560
          %v1563 = vsel %vm1291, %v1558, 0
          %v1566 = vsel %vm1291, %v1561, 0
          %1568 = vmatprep.subr.bf16.mxu0 0
          %1569 = vmatpush1.bf16.xpose.msra.mxu0 %v1566
          %1570 = vmatprep.subr.bf16.mxu0 0
          %1571 = vmatpush1.bf16.xpose.msra.mxu0 0
          %1572 = vmatprep.subr.bf16.mxu0 0
          %1573 = vmatpush1.bf16.xpose.msra.mxu0 0
          %1574 = vmatprep.subr.bf16.mxu0 0
          %1575 = vmatpush1.bf16.xpose.msra.mxu0 0
          %1576 = vmatprep.subr.bf16.mxu0 0
          %1577 = vmatpush1.bf16.xpose.msra.mxu0 0
          %1578 = vmatprep.subr.bf16.mxu0 0
          %1579 = vmatpush1.bf16.xpose.msra.mxu0 0
          %1580 = vmatprep.subr.bf16.mxu0 0
          %1581 = vmatpush1.bf16.xpose.msra.mxu0 0
          %1582 = vmatprep.subr.bf16.mxu0 0
          %1583 = vmatpush1.bf16.xpose.msra.mxu0 0
          %1584 = vmatprep.subr.bf16.mxu0 0
          %1585 = vmatpush1.bf16.xpose.msra.mxu0 0
          %1586 = vmatprep.subr.bf16.mxu0 0
          %1587 = vmatpush1.bf16.xpose.msra.mxu0 0
          %1588 = vmatprep.subr.bf16.mxu0 0
          %1589 = vmatpush1.bf16.xpose.msra.mxu0 0
          %1590 = vmatprep.subr.bf16.mxu0 0
          %1591 = vmatpush1.bf16.xpose.msra.mxu0 0
          %1592 = vmatprep.subr.bf16.mxu0 0
          %1593 = vmatpush1.bf16.xpose.msra.mxu0 0
          %1594 = vmatprep.subr.bf16.mxu0 0
          %1595 = vmatpush1.bf16.xpose.msra.mxu0 0
          %1596 = vmatprep.subr.bf16.mxu0 0
          %1597 = vmatpush1.bf16.xpose.msra.mxu0 0
          %1598 = vmatprep.subr.bf16.mxu0 0
          %1599 = vmatpush1.bf16.xpose.msra.mxu0 0
          %1600 = vmatprep.mubr.bf16.mxu0 0
          %1601 = vmatmul.mubr.bf16.gmra.mrb[0].mxu0 %v1563
          %v1602 = vpop.f32.mrb[0].mxu0
          %v1603 = vadd.f32 0.0, %v1602
          %v1604 = vpop.f32.mrb[0].mxu0
          %v1605 = vpop.f32.mrb[0].mxu0
          %v1606 = vpop.f32.mrb[0].mxu0
          %1607 = vdwg.mxu0
          %v1608 = vmul.f32 %v1551, 0.17677669
          %v1609 = vmul.f32 %v1603, 0.17677669
          %v1610 = vsel %vm1386, %v1608, -inf
          %1611 = vmax.xlane.f32.xlu0 %v1610
          %v1612 = vpop.xlane.xlu0 %1611
          %v1613 = vsel %vm1386, %v1609, -inf
          %1614 = vmax.xlane.f32.xlu0 %v1613
          %v1615 = vpop.xlane.xlu0 %1614
          %v1616 = vsub.f32 %v1608, %v1612
          %v1617 = vsub.f32 %v1609, %v1615
          %v1618 = vmul.f32 %v1616, 1.442695
          %v1619 = vpow.pop %v1618
          %v1620 = vmul.f32 %v1617, 1.442695
          %v1621 = vpow.pop %v1620
          %v1622 = vsel %vm1386, %v1619, 0.0
          %1623 = vadd.xlane.f32.xlu0 %v1622
          %v1624 = vpop.xlane.xlu0 %1623
          %v1625 = vsel %vm1386, %v1621, 0.0
          %1626 = vadd.xlane.f32.xlu0 %v1625
          %v1627 = vpop.xlane.xlu0 %1626
          %v1628 = vrcp.pop %v1624
          %v1629 = vrcp.pop %v1627
          %v1630 = vmul.f32 %v1619, %v1628
          %v1631 = vmul.f32 %v1621, %v1629
          %v1632 = vpack.c.bf16 %v1630, %v1630
          %v1633 = vpack.c.bf16 %v1631, %v1631
          %1635 = vrot.lane.b32.xlu0 %v1289, 96
          %v1636 = vpop.permute.xlu0 %1635
          %v1638 = vsel %vm1386, %v1632, 0
          %v1641 = vsel %vm1414, %v1636, 0
          %1643 = vmatprep.subr.bf16.mxu0 0
          %1644 = vmatpush1.bf16.msra.mxu0 %v1641
          %1645 = vmatprep.subr.bf16.mxu0 0
          %1646 = vmatpush1.bf16.msra.mxu0 0
          %1647 = vmatprep.subr.bf16.mxu0 0
          %1648 = vmatpush1.bf16.msra.mxu0 0
          %1649 = vmatprep.subr.bf16.mxu0 0
          %1650 = vmatpush1.bf16.msra.mxu0 0
          %1651 = vmatprep.subr.bf16.mxu0 0
          %1652 = vmatpush1.bf16.msra.mxu0 0
          %1653 = vmatprep.subr.bf16.mxu0 0
          %1654 = vmatpush1.bf16.msra.mxu0 0
          %1655 = vmatprep.subr.bf16.mxu0 0
          %1656 = vmatpush1.bf16.msra.mxu0 0
          %1657 = vmatprep.subr.bf16.mxu0 0
          %1658 = vmatpush1.bf16.msra.mxu0 0
          %1659 = vmatprep.subr.bf16.mxu0 0
          %1660 = vmatpush1.bf16.msra.mxu0 0
          %1661 = vmatprep.subr.bf16.mxu0 0
          %1662 = vmatpush1.bf16.msra.mxu0 0
          %1663 = vmatprep.subr.bf16.mxu0 0
          %1664 = vmatpush1.bf16.msra.mxu0 0
          %1665 = vmatprep.subr.bf16.mxu0 0
          %1666 = vmatpush1.bf16.msra.mxu0 0
          %1667 = vmatprep.subr.bf16.mxu0 0
          %1668 = vmatpush1.bf16.msra.mxu0 0
          %1669 = vmatprep.subr.bf16.mxu0 0
          %1670 = vmatpush1.bf16.msra.mxu0 0
          %1671 = vmatprep.subr.bf16.mxu0 0
          %1672 = vmatpush1.bf16.msra.mxu0 0
          %1673 = vmatprep.subr.bf16.mxu0 0
          %1674 = vmatpush1.bf16.msra.mxu0 0
          %1675 = vmatprep.mubr.bf16.mxu0 0
          %1676 = vmatmul.mubr.bf16.gmra.mrb[0].mxu0 %v1638
          %v1677 = vpop.f32.mrb[0].mxu0
          %v1678 = vadd.f32 0.0, %v1677
          %v1679 = vpop.f32.mrb[0].mxu0
          %v1680 = vpop.f32.mrb[0].mxu0
          %v1681 = vpop.f32.mrb[0].mxu0
          %1682 = vdwg.mxu0
          %1684 = vrot.lane.b32.xlu0 %v1290, 96
          %v1685 = vpop.permute.xlu0 %1684
          %v1687 = vsel %vm1386, %v1633, 0
          %v1690 = vsel %vm1414, %v1685, 0
          %1692 = vmatprep.subr.bf16.mxu0 0
          %1693 = vmatpush1.bf16.msra.mxu0 %v1690
          %1694 = vmatprep.subr.bf16.mxu0 0
          %1695 = vmatpush1.bf16.msra.mxu0 0
          %1696 = vmatprep.subr.bf16.mxu0 0
          %1697 = vmatpush1.bf16.msra.mxu0 0
          %1698 = vmatprep.subr.bf16.mxu0 0
          %1699 = vmatpush1.bf16.msra.mxu0 0
          %1700 = vmatprep.subr.bf16.mxu0 0
          %1701 = vmatpush1.bf16.msra.mxu0 0
          %1702 = vmatprep.subr.bf16.mxu0 0
          %1703 = vmatpush1.bf16.msra.mxu0 0
          %1704 = vmatprep.subr.bf16.mxu0 0
          %1705 = vmatpush1.bf16.msra.mxu0 0
          %1706 = vmatprep.subr.bf16.mxu0 0
          %1707 = vmatpush1.bf16.msra.mxu0 0
          %1708 = vmatprep.subr.bf16.mxu0 0
          %1709 = vmatpush1.bf16.msra.mxu0 0
          %1710 = vmatprep.subr.bf16.mxu0 0
          %1711 = vmatpush1.bf16.msra.mxu0 0
          %1712 = vmatprep.subr.bf16.mxu0 0
          %1713 = vmatpush1.bf16.msra.mxu0 0
          %1714 = vmatprep.subr.bf16.mxu0 0
          %1715 = vmatpush1.bf16.msra.mxu0 0
          %1716 = vmatprep.subr.bf16.mxu0 0
          %1717 = vmatpush1.bf16.msra.mxu0 0
          %1718 = vmatprep.subr.bf16.mxu0 0
          %1719 = vmatpush1.bf16.msra.mxu0 0
          %1720 = vmatprep.subr.bf16.mxu0 0
          %1721 = vmatpush1.bf16.msra.mxu0 0
          %1722 = vmatprep.subr.bf16.mxu0 0
          %1723 = vmatpush1.bf16.msra.mxu0 0
          %1724 = vmatprep.mubr.bf16.mxu0 0
          %1725 = vmatmul.mubr.bf16.gmra.mrb[0].mxu0 %v1687
          %v1726 = vpop.f32.mrb[0].mxu0
          %v1727 = vadd.f32 0.0, %v1726
          %v1728 = vpop.f32.mrb[0].mxu0
          %v1729 = vpop.f32.mrb[0].mxu0
          %v1730 = vpop.f32.mrb[0].mxu0
          %1731 = vdwg.mxu0
          %1732 = vrot.lane.b32.xlu0 %v1285, 64
          %v1733 = vpop.permute.xlu0 %1732
          %1734 = vrot.lane.b32.xlu0 %v1287, 64
          %v1735 = vpop.permute.xlu0 %1734
          %v1737 = vsel %vm1291, %v1733, 0
          %v1740 = vsel %vm1291, %v1735, 0
          %1742 = vmatprep.subr.bf16.mxu0 0
          %1743 = vmatpush1.bf16.xpose.msra.mxu0 %v1740
          %1744 = vmatprep.subr.bf16.mxu0 0
          %1745 = vmatpush1.bf16.xpose.msra.mxu0 0
          %1746 = vmatprep.subr.bf16.mxu0 0
          %1747 = vmatpush1.bf16.xpose.msra.mxu0 0
          %1748 = vmatprep.subr.bf16.mxu0 0
          %1749 = vmatpush1.bf16.xpose.msra.mxu0 0
          %1750 = vmatprep.subr.bf16.mxu0 0
          %1751 = vmatpush1.bf16.xpose.msra.mxu0 0
          %1752 = vmatprep.subr.bf16.mxu0 0
          %1753 = vmatpush1.bf16.xpose.msra.mxu0 0
          %1754 = vmatprep.subr.bf16.mxu0 0
          %1755 = vmatpush1.bf16.xpose.msra.mxu0 0
          %1756 = vmatprep.subr.bf16.mxu0 0
          %1757 = vmatpush1.bf16.xpose.msra.mxu0 0
          %1758 = vmatprep.subr.bf16.mxu0 0
          %1759 = vmatpush1.bf16.xpose.msra.mxu0 0
          %1760 = vmatprep.subr.bf16.mxu0 0
          %1761 = vmatpush1.bf16.xpose.msra.mxu0 0
          %1762 = vmatprep.subr.bf16.mxu0 0
          %1763 = vmatpush1.bf16.xpose.msra.mxu0 0
          %1764 = vmatprep.subr.bf16.mxu0 0
          %1765 = vmatpush1.bf16.xpose.msra.mxu0 0
          %1766 = vmatprep.subr.bf16.mxu0 0
          %1767 = vmatpush1.bf16.xpose.msra.mxu0 0
          %1768 = vmatprep.subr.bf16.mxu0 0
          %1769 = vmatpush1.bf16.xpose.msra.mxu0 0
          %1770 = vmatprep.subr.bf16.mxu0 0
          %1771 = vmatpush1.bf16.xpose.msra.mxu0 0
          %1772 = vmatprep.subr.bf16.mxu0 0
          %1773 = vmatpush1.bf16.xpose.msra.mxu0 0
          %1774 = vmatprep.mubr.bf16.mxu0 0
          %1775 = vmatmul.mubr.bf16.gmra.mrb[0].mxu0 %v1737
          %v1776 = vpop.f32.mrb[0].mxu0
          %v1777 = vadd.f32 0.0, %v1776
          %v1778 = vpop.f32.mrb[0].mxu0
          %v1779 = vpop.f32.mrb[0].mxu0
          %v1780 = vpop.f32.mrb[0].mxu0
          %1781 = vdwg.mxu0
          %1782 = vrot.lane.b32.xlu0 %v1286, 64
          %v1783 = vpop.permute.xlu0 %1782
          %1784 = vrot.lane.b32.xlu0 %v1288, 64
          %v1785 = vpop.permute.xlu0 %1784
          %v1787 = vsel %vm1291, %v1783, 0
          %v1790 = vsel %vm1291, %v1785, 0
          %1792 = vmatprep.subr.bf16.mxu0 0
          %1793 = vmatpush1.bf16.xpose.msra.mxu0 %v1790
          %1794 = vmatprep.subr.bf16.mxu0 0
          %1795 = vmatpush1.bf16.xpose.msra.mxu0 0
          %1796 = vmatprep.subr.bf16.mxu0 0
          %1797 = vmatpush1.bf16.xpose.msra.mxu0 0
          %1798 = vmatprep.subr.bf16.mxu0 0
          %1799 = vmatpush1.bf16.xpose.msra.mxu0 0
          %1800 = vmatprep.subr.bf16.mxu0 0
          %1801 = vmatpush1.bf16.xpose.msra.mxu0 0
          %1802 = vmatprep.subr.bf16.mxu0 0
          %1803 = vmatpush1.bf16.xpose.msra.mxu0 0
          %1804 = vmatprep.subr.bf16.mxu0 0
          %1805 = vmatpush1.bf16.xpose.msra.mxu0 0
          %1806 = vmatprep.subr.bf16.mxu0 0
          %1807 = vmatpush1.bf16.xpose.msra.mxu0 0
          %1808 = vmatprep.subr.bf16.mxu0 0
          %1809 = vmatpush1.bf16.xpose.msra.mxu0 0
          %1810 = vmatprep.subr.bf16.mxu0 0
          %1811 = vmatpush1.bf16.xpose.msra.mxu0 0
          %1812 = vmatprep.subr.bf16.mxu0 0
          %1813 = vmatpush1.bf16.xpose.msra.mxu0 0
          %1814 = vmatprep.subr.bf16.mxu0 0
          %1815 = vmatpush1.bf16.xpose.msra.mxu0 0
          %1816 = vmatprep.subr.bf16.mxu0 0
          %1817 = vmatpush1.bf16.xpose.msra.mxu0 0
          %1818 = vmatprep.subr.bf16.mxu0 0
          %1819 = vmatpush1.bf16.xpose.msra.mxu0 0
          %1820 = vmatprep.subr.bf16.mxu0 0
          %1821 = vmatpush1.bf16.xpose.msra.mxu0 0
          %1822 = vmatprep.subr.bf16.mxu0 0
          %1823 = vmatpush1.bf16.xpose.msra.mxu0 0
          %1824 = vmatprep.mubr.bf16.mxu0 0
          %1825 = vmatmul.mubr.bf16.gmra.mrb[0].mxu0 %v1787
          %v1826 = vpop.f32.mrb[0].mxu0
          %v1827 = vadd.f32 0.0, %v1826
          %v1828 = vpop.f32.mrb[0].mxu0
          %v1829 = vpop.f32.mrb[0].mxu0
          %v1830 = vpop.f32.mrb[0].mxu0
          %1831 = vdwg.mxu0
          %v1832 = vmul.f32 %v1777, 0.17677669
          %v1833 = vmul.f32 %v1827, 0.17677669
          %v1834 = vsel %vm1386, %v1832, -inf
          %1835 = vmax.xlane.f32.xlu0 %v1834
          %v1836 = vpop.xlane.xlu0 %1835
          %v1837 = vsel %vm1386, %v1833, -inf
          %1838 = vmax.xlane.f32.xlu0 %v1837
          %v1839 = vpop.xlane.xlu0 %1838
          %v1840 = vsub.f32 %v1832, %v1836
          %v1841 = vsub.f32 %v1833, %v1839
          %v1842 = vmul.f32 %v1840, 1.442695
          %v1843 = vpow.pop %v1842
          %v1844 = vmul.f32 %v1841, 1.442695
          %v1845 = vpow.pop %v1844
          %v1846 = vsel %vm1386, %v1843, 0.0
          %1847 = vadd.xlane.f32.xlu0 %v1846
          %v1848 = vpop.xlane.xlu0 %1847
          %v1849 = vsel %vm1386, %v1845, 0.0
          %1850 = vadd.xlane.f32.xlu0 %v1849
          %v1851 = vpop.xlane.xlu0 %1850
          %v1852 = vrcp.pop %v1848
          %v1853 = vrcp.pop %v1851
          %v1854 = vmul.f32 %v1843, %v1852
          %v1855 = vmul.f32 %v1845, %v1853
          %v1856 = vpack.c.bf16 %v1854, %v1854
          %v1857 = vpack.c.bf16 %v1855, %v1855
          %1858 = vrot.lane.b32.xlu0 %v1289, 64
          %v1859 = vpop.permute.xlu0 %1858
          %v1861 = vsel %vm1386, %v1856, 0
          %v1864 = vsel %vm1414, %v1859, 0
          %1866 = vmatprep.subr.bf16.mxu0 0
          %1867 = vmatpush1.bf16.msra.mxu0 %v1864
          %1868 = vmatprep.subr.bf16.mxu0 0
          %1869 = vmatpush1.bf16.msra.mxu0 0
          %1870 = vmatprep.subr.bf16.mxu0 0
          %1871 = vmatpush1.bf16.msra.mxu0 0
          %1872 = vmatprep.subr.bf16.mxu0 0
          %1873 = vmatpush1.bf16.msra.mxu0 0
          %1874 = vmatprep.subr.bf16.mxu0 0
          %1875 = vmatpush1.bf16.msra.mxu0 0
          %1876 = vmatprep.subr.bf16.mxu0 0
          %1877 = vmatpush1.bf16.msra.mxu0 0
          %1878 = vmatprep.subr.bf16.mxu0 0
          %1879 = vmatpush1.bf16.msra.mxu0 0
          %1880 = vmatprep.subr.bf16.mxu0 0
          %1881 = vmatpush1.bf16.msra.mxu0 0
          %1882 = vmatprep.subr.bf16.mxu0 0
          %1883 = vmatpush1.bf16.msra.mxu0 0
          %1884 = vmatprep.subr.bf16.mxu0 0
          %1885 = vmatpush1.bf16.msra.mxu0 0
          %1886 = vmatprep.subr.bf16.mxu0 0
          %1887 = vmatpush1.bf16.msra.mxu0 0
          %1888 = vmatprep.subr.bf16.mxu0 0
          %1889 = vmatpush1.bf16.msra.mxu0 0
          %1890 = vmatprep.subr.bf16.mxu0 0
          %1891 = vmatpush1.bf16.msra.mxu0 0
          %1892 = vmatprep.subr.bf16.mxu0 0
          %1893 = vmatpush1.bf16.msra.mxu0 0
          %1894 = vmatprep.subr.bf16.mxu0 0
          %1895 = vmatpush1.bf16.msra.mxu0 0
          %1896 = vmatprep.subr.bf16.mxu0 0
          %1897 = vmatpush1.bf16.msra.mxu0 0
          %1898 = vmatprep.mubr.bf16.mxu0 0
          %1899 = vmatmul.mubr.bf16.gmra.mrb[0].mxu0 %v1861
          %v1900 = vpop.f32.mrb[0].mxu0
          %v1901 = vadd.f32 0.0, %v1900
          %v1902 = vpop.f32.mrb[0].mxu0
          %v1903 = vpop.f32.mrb[0].mxu0
          %v1904 = vpop.f32.mrb[0].mxu0
          %1905 = vdwg.mxu0
          %1906 = vrot.lane.b32.xlu0 %v1290, 64
          %v1907 = vpop.permute.xlu0 %1906
          %v1909 = vsel %vm1386, %v1857, 0
          %v1912 = vsel %vm1414, %v1907, 0
          %1914 = vmatprep.subr.bf16.mxu0 0
          %1915 = vmatpush1.bf16.msra.mxu0 %v1912
          %1916 = vmatprep.subr.bf16.mxu0 0
          %1917 = vmatpush1.bf16.msra.mxu0 0
          %1918 = vmatprep.subr.bf16.mxu0 0
          %1919 = vmatpush1.bf16.msra.mxu0 0
          %1920 = vmatprep.subr.bf16.mxu0 0
          %1921 = vmatpush1.bf16.msra.mxu0 0
          %1922 = vmatprep.subr.bf16.mxu0 0
          %1923 = vmatpush1.bf16.msra.mxu0 0
          %1924 = vmatprep.subr.bf16.mxu0 0
          %1925 = vmatpush1.bf16.msra.mxu0 0
          %1926 = vmatprep.subr.bf16.mxu0 0
          %1927 = vmatpush1.bf16.msra.mxu0 0
          %1928 = vmatprep.subr.bf16.mxu0 0
          %1929 = vmatpush1.bf16.msra.mxu0 0
          %1930 = vmatprep.subr.bf16.mxu0 0
          %1931 = vmatpush1.bf16.msra.mxu0 0
          %1932 = vmatprep.subr.bf16.mxu0 0
          %1933 = vmatpush1.bf16.msra.mxu0 0
          %1934 = vmatprep.subr.bf16.mxu0 0
          %1935 = vmatpush1.bf16.msra.mxu0 0
          %1936 = vmatprep.subr.bf16.mxu0 0
          %1937 = vmatpush1.bf16.msra.mxu0 0
          %1938 = vmatprep.subr.bf16.mxu0 0
          %1939 = vmatpush1.bf16.msra.mxu0 0
          %1940 = vmatprep.subr.bf16.mxu0 0
          %1941 = vmatpush1.bf16.msra.mxu0 0
          %1942 = vmatprep.subr.bf16.mxu0 0
          %1943 = vmatpush1.bf16.msra.mxu0 0
          %1944 = vmatprep.subr.bf16.mxu0 0
          %1945 = vmatpush1.bf16.msra.mxu0 0
          %1946 = vmatprep.mubr.bf16.mxu0 0
          %1947 = vmatmul.mubr.bf16.gmra.mrb[0].mxu0 %v1909
          %v1948 = vpop.f32.mrb[0].mxu0
          %v1949 = vadd.f32 0.0, %v1948
          %v1950 = vpop.f32.mrb[0].mxu0
          %v1951 = vpop.f32.mrb[0].mxu0
          %v1952 = vpop.f32.mrb[0].mxu0
          %1953 = vdwg.mxu0
          %1954 = vrot.lane.b32.xlu0 %v1285, 32
          %v1955 = vpop.permute.xlu0 %1954
          %1956 = vrot.lane.b32.xlu0 %v1287, 32
          %v1957 = vpop.permute.xlu0 %1956
          %v1959 = vsel %vm1291, %v1955, 0
          %v1962 = vsel %vm1291, %v1957, 0
          %1964 = vmatprep.subr.bf16.mxu0 0
          %1965 = vmatpush1.bf16.xpose.msra.mxu0 %v1962
          %1966 = vmatprep.subr.bf16.mxu0 0
          %1967 = vmatpush1.bf16.xpose.msra.mxu0 0
          %1968 = vmatprep.subr.bf16.mxu0 0
          %1969 = vmatpush1.bf16.xpose.msra.mxu0 0
          %1970 = vmatprep.subr.bf16.mxu0 0
          %1971 = vmatpush1.bf16.xpose.msra.mxu0 0
          %1972 = vmatprep.subr.bf16.mxu0 0
          %1973 = vmatpush1.bf16.xpose.msra.mxu0 0
          %1974 = vmatprep.subr.bf16.mxu0 0
          %1975 = vmatpush1.bf16.xpose.msra.mxu0 0
          %1976 = vmatprep.subr.bf16.mxu0 0
          %1977 = vmatpush1.bf16.xpose.msra.mxu0 0
          %1978 = vmatprep.subr.bf16.mxu0 0
          %1979 = vmatpush1.bf16.xpose.msra.mxu0 0
          %1980 = vmatprep.subr.bf16.mxu0 0
          %1981 = vmatpush1.bf16.xpose.msra.mxu0 0
          %1982 = vmatprep.subr.bf16.mxu0 0
          %1983 = vmatpush1.bf16.xpose.msra.mxu0 0
          %1984 = vmatprep.subr.bf16.mxu0 0
          %1985 = vmatpush1.bf16.xpose.msra.mxu0 0
          %1986 = vmatprep.subr.bf16.mxu0 0
          %1987 = vmatpush1.bf16.xpose.msra.mxu0 0
          %1988 = vmatprep.subr.bf16.mxu0 0
          %1989 = vmatpush1.bf16.xpose.msra.mxu0 0
          %1990 = vmatprep.subr.bf16.mxu0 0
          %1991 = vmatpush1.bf16.xpose.msra.mxu0 0
          %1992 = vmatprep.subr.bf16.mxu0 0
          %1993 = vmatpush1.bf16.xpose.msra.mxu0 0
          %1994 = vmatprep.subr.bf16.mxu0 0
          %1995 = vmatpush1.bf16.xpose.msra.mxu0 0
          %1996 = vmatprep.mubr.bf16.mxu0 0
          %1997 = vmatmul.mubr.bf16.gmra.mrb[0].mxu0 %v1959
          %v1998 = vpop.f32.mrb[0].mxu0
          %v1999 = vadd.f32 0.0, %v1998
          %v2000 = vpop.f32.mrb[0].mxu0
          %v2001 = vpop.f32.mrb[0].mxu0
          %v2002 = vpop.f32.mrb[0].mxu0
          %2003 = vdwg.mxu0
          %2004 = vrot.lane.b32.xlu0 %v1286, 32
          %v2005 = vpop.permute.xlu0 %2004
          %2006 = vrot.lane.b32.xlu0 %v1288, 32
          %v2007 = vpop.permute.xlu0 %2006
          %v2009 = vsel %vm1291, %v2005, 0
          %v2012 = vsel %vm1291, %v2007, 0
          %2014 = vmatprep.subr.bf16.mxu0 0
          %2015 = vmatpush1.bf16.xpose.msra.mxu0 %v2012
          %2016 = vmatprep.subr.bf16.mxu0 0
          %2017 = vmatpush1.bf16.xpose.msra.mxu0 0
          %2018 = vmatprep.subr.bf16.mxu0 0
          %2019 = vmatpush1.bf16.xpose.msra.mxu0 0
          %2020 = vmatprep.subr.bf16.mxu0 0
          %2021 = vmatpush1.bf16.xpose.msra.mxu0 0
          %2022 = vmatprep.subr.bf16.mxu0 0
          %2023 = vmatpush1.bf16.xpose.msra.mxu0 0
          %2024 = vmatprep.subr.bf16.mxu0 0
          %2025 = vmatpush1.bf16.xpose.msra.mxu0 0
          %2026 = vmatprep.subr.bf16.mxu0 0
          %2027 = vmatpush1.bf16.xpose.msra.mxu0 0
          %2028 = vmatprep.subr.bf16.mxu0 0
          %2029 = vmatpush1.bf16.xpose.msra.mxu0 0
          %2030 = vmatprep.subr.bf16.mxu0 0
          %2031 = vmatpush1.bf16.xpose.msra.mxu0 0
          %2032 = vmatprep.subr.bf16.mxu0 0
          %2033 = vmatpush1.bf16.xpose.msra.mxu0 0
          %2034 = vmatprep.subr.bf16.mxu0 0
          %2035 = vmatpush1.bf16.xpose.msra.mxu0 0
          %2036 = vmatprep.subr.bf16.mxu0 0
          %2037 = vmatpush1.bf16.xpose.msra.mxu0 0
          %2038 = vmatprep.subr.bf16.mxu0 0
          %2039 = vmatpush1.bf16.xpose.msra.mxu0 0
          %2040 = vmatprep.subr.bf16.mxu0 0
          %2041 = vmatpush1.bf16.xpose.msra.mxu0 0
          %2042 = vmatprep.subr.bf16.mxu0 0
          %2043 = vmatpush1.bf16.xpose.msra.mxu0 0
          %2044 = vmatprep.subr.bf16.mxu0 0
          %2045 = vmatpush1.bf16.xpose.msra.mxu0 0
          %2046 = vmatprep.mubr.bf16.mxu0 0
          %2047 = vmatmul.mubr.bf16.gmra.mrb[0].mxu0 %v2009
          %v2048 = vpop.f32.mrb[0].mxu0
          %v2049 = vadd.f32 0.0, %v2048
          %v2050 = vpop.f32.mrb[0].mxu0
          %v2051 = vpop.f32.mrb[0].mxu0
          %v2052 = vpop.f32.mrb[0].mxu0
          %2053 = vdwg.mxu0
          %v2054 = vmul.f32 %v1999, 0.17677669
          %v2055 = vmul.f32 %v2049, 0.17677669
          %v2056 = vsel %vm1386, %v2054, -inf
          %2057 = vmax.xlane.f32.xlu0 %v2056
          %v2058 = vpop.xlane.xlu0 %2057
          %v2059 = vsel %vm1386, %v2055, -inf
          %2060 = vmax.xlane.f32.xlu0 %v2059
          %v2061 = vpop.xlane.xlu0 %2060
          %v2062 = vsub.f32 %v2054, %v2058
          %v2063 = vsub.f32 %v2055, %v2061
          %v2064 = vmul.f32 %v2062, 1.442695
          %v2065 = vpow.pop %v2064
          %v2066 = vmul.f32 %v2063, 1.442695
          %v2067 = vpow.pop %v2066
          %v2068 = vsel %vm1386, %v2065, 0.0
          %2069 = vadd.xlane.f32.xlu0 %v2068
          %v2070 = vpop.xlane.xlu0 %2069
          %v2071 = vsel %vm1386, %v2067, 0.0
          %2072 = vadd.xlane.f32.xlu0 %v2071
          %v2073 = vpop.xlane.xlu0 %2072
          %v2074 = vrcp.pop %v2070
          %v2075 = vrcp.pop %v2073
          %v2076 = vmul.f32 %v2065, %v2074
          %v2077 = vmul.f32 %v2067, %v2075
          %v2078 = vpack.c.bf16 %v2076, %v2076
          %v2079 = vpack.c.bf16 %v2077, %v2077
          %2080 = vrot.lane.b32.xlu0 %v1289, 32
          %v2081 = vpop.permute.xlu0 %2080
          %v2083 = vsel %vm1386, %v2078, 0
          %v2086 = vsel %vm1414, %v2081, 0
          %2088 = vmatprep.subr.bf16.mxu0 0
          %2089 = vmatpush1.bf16.msra.mxu0 %v2086
          %2090 = vmatprep.subr.bf16.mxu0 0
          %2091 = vmatpush1.bf16.msra.mxu0 0
          %2092 = vmatprep.subr.bf16.mxu0 0
          %2093 = vmatpush1.bf16.msra.mxu0 0
          %2094 = vmatprep.subr.bf16.mxu0 0
          %2095 = vmatpush1.bf16.msra.mxu0 0
          %2096 = vmatprep.subr.bf16.mxu0 0
          %2097 = vmatpush1.bf16.msra.mxu0 0
          %2098 = vmatprep.subr.bf16.mxu0 0
          %2099 = vmatpush1.bf16.msra.mxu0 0
          %2100 = vmatprep.subr.bf16.mxu0 0
          %2101 = vmatpush1.bf16.msra.mxu0 0
          %2102 = vmatprep.subr.bf16.mxu0 0
          %2103 = vmatpush1.bf16.msra.mxu0 0
          %2104 = vmatprep.subr.bf16.mxu0 0
          %2105 = vmatpush1.bf16.msra.mxu0 0
          %2106 = vmatprep.subr.bf16.mxu0 0
          %2107 = vmatpush1.bf16.msra.mxu0 0
          %2108 = vmatprep.subr.bf16.mxu0 0
          %2109 = vmatpush1.bf16.msra.mxu0 0
          %2110 = vmatprep.subr.bf16.mxu0 0
          %2111 = vmatpush1.bf16.msra.mxu0 0
          %2112 = vmatprep.subr.bf16.mxu0 0
          %2113 = vmatpush1.bf16.msra.mxu0 0
          %2114 = vmatprep.subr.bf16.mxu0 0
          %2115 = vmatpush1.bf16.msra.mxu0 0
          %2116 = vmatprep.subr.bf16.mxu0 0
          %2117 = vmatpush1.bf16.msra.mxu0 0
          %2118 = vmatprep.subr.bf16.mxu0 0
          %2119 = vmatpush1.bf16.msra.mxu0 0
          %2120 = vmatprep.mubr.bf16.mxu0 0
          %2121 = vmatmul.mubr.bf16.gmra.mrb[0].mxu0 %v2083
          %v2122 = vpop.f32.mrb[0].mxu0
          %v2123 = vadd.f32 0.0, %v2122
          %v2124 = vpop.f32.mrb[0].mxu0
          %v2125 = vpop.f32.mrb[0].mxu0
          %v2126 = vpop.f32.mrb[0].mxu0
          %2127 = vdwg.mxu0
          %2128 = vrot.lane.b32.xlu0 %v1290, 32
          %v2129 = vpop.permute.xlu0 %2128
          %v2131 = vsel %vm1386, %v2079, 0
          %v2134 = vsel %vm1414, %v2129, 0
          %2136 = vmatprep.subr.bf16.mxu0 0
          %2137 = vmatpush1.bf16.msra.mxu0 %v2134
          %2138 = vmatprep.subr.bf16.mxu0 0
          %2139 = vmatpush1.bf16.msra.mxu0 0
          %2140 = vmatprep.subr.bf16.mxu0 0
          %2141 = vmatpush1.bf16.msra.mxu0 0
          %2142 = vmatprep.subr.bf16.mxu0 0
          %2143 = vmatpush1.bf16.msra.mxu0 0
          %2144 = vmatprep.subr.bf16.mxu0 0
          %2145 = vmatpush1.bf16.msra.mxu0 0
          %2146 = vmatprep.subr.bf16.mxu0 0
          %2147 = vmatpush1.bf16.msra.mxu0 0
          %2148 = vmatprep.subr.bf16.mxu0 0
          %2149 = vmatpush1.bf16.msra.mxu0 0
          %2150 = vmatprep.subr.bf16.mxu0 0
          %2151 = vmatpush1.bf16.msra.mxu0 0
          %2152 = vmatprep.subr.bf16.mxu0 0
          %2153 = vmatpush1.bf16.msra.mxu0 0
          %2154 = vmatprep.subr.bf16.mxu0 0
          %2155 = vmatpush1.bf16.msra.mxu0 0
          %2156 = vmatprep.subr.bf16.mxu0 0
          %2157 = vmatpush1.bf16.msra.mxu0 0
          %2158 = vmatprep.subr.bf16.mxu0 0
          %2159 = vmatpush1.bf16.msra.mxu0 0
          %2160 = vmatprep.subr.bf16.mxu0 0
          %2161 = vmatpush1.bf16.msra.mxu0 0
          %2162 = vmatprep.subr.bf16.mxu0 0
          %2163 = vmatpush1.bf16.msra.mxu0 0
          %2164 = vmatprep.subr.bf16.mxu0 0
          %2165 = vmatpush1.bf16.msra.mxu0 0
          %2166 = vmatprep.subr.bf16.mxu0 0
          %2167 = vmatpush1.bf16.msra.mxu0 0
          %2168 = vmatprep.mubr.bf16.mxu0 0
          %2169 = vmatmul.mubr.bf16.gmra.mrb[0].mxu0 %v2131
          %v2170 = vpop.f32.mrb[0].mxu0
          %v2171 = vadd.f32 0.0, %v2170
          %v2172 = vpop.f32.mrb[0].mxu0
          %v2173 = vpop.f32.mrb[0].mxu0
          %v2174 = vpop.f32.mrb[0].mxu0
          %2175 = vdwg.mxu0
          %2178 = vrot.lane.b32.xlu0 %v1678, 32
          %v2179 = vpop.permute.xlu0 %2178
          %2180 = vrot.lane.b32.xlu0 %v1727, 32
          %v2181 = vpop.permute.xlu0 %2180
          %2186 = vrot.lane.b32.xlu0 %v1901, 64
          %v2187 = vpop.permute.xlu0 %2186
          %2188 = vrot.lane.b32.xlu0 %v1949, 64
          %v2189 = vpop.permute.xlu0 %2188
          %2194 = vrot.lane.b32.xlu0 %v2123, 96
          %v2195 = vpop.permute.xlu0 %2194
          %2196 = vrot.lane.b32.xlu0 %v2171, 96
          %v2197 = vpop.permute.xlu0 %2196
          %v2200 = vsel %vm1291, %v1453, %v2179
          %v2201 = vsel %vm1291, %v1499, %v2181
          %vm2202 = vcmask 523264
          %v2203 = vsel %vm2202, %v2200, %v2187
          %v2204 = vsel %vm2202, %v2201, %v2189
          %vm2205 = vcmask 785408
          %v2206 = vsel %vm2205, %v2203, %v2195
          %v2207 = vsel %vm2205, %v2204, %v2197
          %v2208 = vld [vmem:[%s752] sm:$0xf]
          %v2209 = vld [vmem:[%s752 + $0x4] sm:$0xf]
          %v2210 = vld [vmem:[%s752 + $0x8] sm:$0xf]
          %v2211 = vld [vmem:[%s752 + $0xc] sm:$0xf]
          %v2212 = vld [vmem:[%s752 + $0x10] sm:$0xf]
          %v2213 = vld [vmem:[%s752 + $0x14] sm:$0xf]
          %v2214 = vld [vmem:[%s752 + $0x18] sm:$0xf]
          %v2215 = vld [vmem:[%s752 + $0x1c] sm:$0xf]
          %v2216 = vld [vmem:[%s752 + $0x20] sm:$0xf]
          %v2217 = vld [vmem:[%s752 + $0x24] sm:$0xf]
          %v2218 = vld [vmem:[%s752 + $0x28] sm:$0xf]
          %v2219 = vld [vmem:[%s752 + $0x2c] sm:$0xf]
          %v2220 = vld [vmem:[%s752 + $0x30] sm:$0xf]
          %v2221 = vld [vmem:[%s752 + $0x34] sm:$0xf]
          %v2222 = vld [vmem:[%s752 + $0x38] sm:$0xf]
          %v2223 = vld [vmem:[%s752 + $0x3c] sm:$0xf]
          %v2224 = vpack.c.bf16 %v2207, %v2206
          %v2241 = vunpack.c.l.b16 %v2208
          %v2242 = vunpack.c.l.b16 %v2209
          %v2243 = vunpack.c.l.b16 %v2210
          %v2244 = vunpack.c.l.b16 %v2211
          %v2245 = vunpack.c.l.b16 %v2212
          %v2246 = vunpack.c.l.b16 %v2213
          %v2247 = vunpack.c.l.b16 %v2214
          %v2248 = vunpack.c.l.b16 %v2215
          %v2249 = vunpack.c.l.b16 %v2216
          %v2250 = vunpack.c.l.b16 %v2217
          %v2251 = vunpack.c.l.b16 %v2218
          %v2252 = vunpack.c.l.b16 %v2219
          %v2253 = vunpack.c.l.b16 %v2220
          %v2254 = vunpack.c.l.b16 %v2221
          %v2255 = vunpack.c.l.b16 %v2222
          %v2256 = vunpack.c.l.b16 %v2223
          %v2257 = vpack.c.b16 %v2242, %v2241
          %v2258 = vpack.c.b16 %v2244, %v2243
          %v2259 = vpack.c.b16 %v2246, %v2245
          %v2260 = vpack.c.b16 %v2248, %v2247
          %v2261 = vpack.c.b16 %v2250, %v2249
          %v2262 = vpack.c.b16 %v2252, %v2251
          %v2263 = vpack.c.b16 %v2254, %v2253
          %v2264 = vpack.c.b16 %v2256, %v2255
          %2273 = vmatprep.subr.bf16.mxu0 0
          %2274 = vmatpush1.bf16.msra.mxu0 %v2257
          %2275 = vmatprep.subr.bf16.mxu0 0
          %2276 = vmatpush1.bf16.msra.mxu0 %v2258
          %2277 = vmatprep.subr.bf16.mxu0 0
          %2278 = vmatpush1.bf16.msra.mxu0 %v2259
          %2279 = vmatprep.subr.bf16.mxu0 0
          %2280 = vmatpush1.bf16.msra.mxu0 %v2260
          %2281 = vmatprep.subr.bf16.mxu0 0
          %2282 = vmatpush1.bf16.msra.mxu0 %v2261
          %2283 = vmatprep.subr.bf16.mxu0 0
          %2284 = vmatpush1.bf16.msra.mxu0 %v2262
          %2285 = vmatprep.subr.bf16.mxu0 0
          %2286 = vmatpush1.bf16.msra.mxu0 %v2263
          %2287 = vmatprep.subr.bf16.mxu0 0
          %2288 = vmatpush1.bf16.msra.mxu0 %v2264
          %2289 = vmatprep.subr.bf16.mxu0 0
          %2290 = vmatpush1.bf16.msra.mxu0 0
          %2291 = vmatprep.subr.bf16.mxu0 0
          %2292 = vmatpush1.bf16.msra.mxu0 0
          %2293 = vmatprep.subr.bf16.mxu0 0
          %2294 = vmatpush1.bf16.msra.mxu0 0
          %2295 = vmatprep.subr.bf16.mxu0 0
          %2296 = vmatpush1.bf16.msra.mxu0 0
          %2297 = vmatprep.subr.bf16.mxu0 0
          %2298 = vmatpush1.bf16.msra.mxu0 0
          %2299 = vmatprep.subr.bf16.mxu0 0
          %2300 = vmatpush1.bf16.msra.mxu0 0
          %2301 = vmatprep.subr.bf16.mxu0 0
          %2302 = vmatpush1.bf16.msra.mxu0 0
          %2303 = vmatprep.subr.bf16.mxu0 0
          %2304 = vmatpush1.bf16.msra.mxu0 0
          %2305 = vmatprep.mubr.bf16.mxu0 0
          %2306 = vmatmul.mubr.bf16.gmra.mrb[0].mxu0 %v2224
          %v2307 = vpop.f32.mrb[0].mxu0
          %v2308 = vadd.f32 0.0, %v2307
          %v2309 = vpop.f32.mrb[0].mxu0
          %v2310 = vpop.f32.mrb[0].mxu0
          %v2311 = vadd.f32 0.0, %v2310
          %v2312 = vpop.f32.mrb[0].mxu0
          %2313 = vdwg.mxu0
          %v2314 = vadd.f32 %v1021, %v2308
          %v2315 = vadd.f32 %v1022, %v2311
          %v2316 = vld [vmem:[%s867] sm:$0x1]
          %v2318 = vlaneseq
          %v2319 = vshrl.u32 %v2318, 7
          %v2320 = vsub.s32 0, %v2319
          %v2321 = vrot.slane %v2316, %v2320
          %v2323 = vadd.f32 %v2314, %v2321
          %v2324 = vadd.f32 %v2315, %v2321
          %v2325 = vld [vmem:[%s870] sm:$0x1]
          %v2326 = vld [vmem:[%s873] sm:$0x1]
          %2327 = vadd.xlane.f32.xlu0 %v2323
          %v2328 = vpop.xlane.xlu0 %2327
          %2329 = vadd.xlane.f32.xlu0 %v2324
          %v2330 = vpop.xlane.xlu0 %2329
          %v2331 = vrcp.pop 128.0
          %v2332 = vmul.f32 %v2328, %v2331
          %v2333 = vmul.f32 %v2330, %v2331
          %v2334 = vsub.f32 %v2323, %v2332
          %v2335 = vsub.f32 %v2324, %v2333
          %v2336 = vmul.f32 %v2334, %v2334
          %v2337 = vmul.f32 %v2335, %v2335
          %2338 = vadd.xlane.f32.xlu0 %v2336
          %v2339 = vpop.xlane.xlu0 %2338
          %2340 = vadd.xlane.f32.xlu0 %v2337
          %v2341 = vpop.xlane.xlu0 %2340
          %v2342 = vmul.f32 %v2339, %v2331
          %v2343 = vmul.f32 %v2341, %v2331
          %v2344 = vadd.f32 %v2342, 1e-05
          %v2345 = vadd.f32 %v2343, 1e-05
          %v2346 = vrsqrt.pop %v2344
          %v2347 = vrsqrt.pop %v2345
          %v2348 = vmul.f32 %v2334, %v2346
          %v2349 = vmul.f32 %v2335, %v2347
          %v2351 = vlaneseq
          %v2352 = vshrl.u32 %v2351, 7
          %v2353 = vsub.s32 0, %v2352
          %v2354 = vrot.slane %v2325, %v2353
          %v2356 = vmul.f32 %v2348, %v2354
          %v2357 = vmul.f32 %v2349, %v2354
          %v2359 = vlaneseq
          %v2360 = vshrl.u32 %v2359, 7
          %v2361 = vsub.s32 0, %v2360
          %v2362 = vrot.slane %v2326, %v2361
          %v2364 = vadd.f32 %v2356, %v2362
          %v2365 = vadd.f32 %v2357, %v2362
          %2366 = vst [vmem:[#allocation3] sm:$0xff] %v2364
          %2367 = vst [vmem:[#allocation3 + $0x8] sm:$0xff] %v2365
        $region132: #{tpu_custom_call.1} parent=87 // pred_fallthru
          _
        %v2368 = vld [vmem:[#allocation3] sm:$0xff]
        %v2369 = vld [vmem:[#allocation3 + $0x8] sm:$0xff]
        %v2370 = vld [vmem:[%s761] sm:$0xff]
        %v2371 = vld [vmem:[%s761 + $0x8] sm:$0xff]
        %v2372 = vld [vmem:[%s761 + $0x10] sm:$0xff]
        %v2373 = vld [vmem:[%s761 + $0x18] sm:$0xff]
        %v2374 = vld [vmem:[%s761 + $0x20] sm:$0xff]
        %v2375 = vld [vmem:[%s761 + $0x28] sm:$0xff]
        %v2376 = vld [vmem:[%s761 + $0x30] sm:$0xff]
        %v2377 = vld [vmem:[%s761 + $0x38] sm:$0xff]
        %v2378 = vld [vmem:[%s761 + $0x40] sm:$0xff]
        %v2379 = vld [vmem:[%s761 + $0x48] sm:$0xff]
        %v2380 = vld [vmem:[%s761 + $0x50] sm:$0xff]
        %v2381 = vld [vmem:[%s761 + $0x58] sm:$0xff]
        %v2382 = vld [vmem:[%s761 + $0x60] sm:$0xff]
        %v2383 = vld [vmem:[%s761 + $0x68] sm:$0xff]
        %v2384 = vld [vmem:[%s761 + $0x70] sm:$0xff]
        %v2385 = vld [vmem:[%s761 + $0x78] sm:$0xff]
        %v2386 = vld [vmem:[%s761 + $0x80] sm:$0xff]
        %v2387 = vld [vmem:[%s761 + $0x88] sm:$0xff]
        %v2388 = vld [vmem:[%s761 + $0x90] sm:$0xff]
        %v2389 = vld [vmem:[%s761 + $0x98] sm:$0xff]
        %v2390 = vld [vmem:[%s761 + $0xa0] sm:$0xff]
        %v2391 = vld [vmem:[%s761 + $0xa8] sm:$0xff]
        %v2392 = vld [vmem:[%s761 + $0xb0] sm:$0xff]
        %v2393 = vld [vmem:[%s761 + $0xb8] sm:$0xff]
        %v2394 = vld [vmem:[%s761 + $0xc0] sm:$0xff]
        %v2395 = vld [vmem:[%s761 + $0xc8] sm:$0xff]
        %v2396 = vld [vmem:[%s761 + $0xd0] sm:$0xff]
        %v2397 = vld [vmem:[%s761 + $0xd8] sm:$0xff]
        %v2398 = vld [vmem:[%s761 + $0xe0] sm:$0xff]
        %v2399 = vld [vmem:[%s761 + $0xe8] sm:$0xff]
        %v2400 = vld [vmem:[%s761 + $0xf0] sm:$0xff]
        %v2401 = vld [vmem:[%s761 + $0xf8] sm:$0xff]
        %v2402 = vpack.c.bf16 %v2369, %v2368
        %v2403 = vld [vmem:[%s888] sm:$0xf]
        %v2405 = vlaneseq
        %v2406 = vshrl.u32 %v2405, 7
        %v2407 = vsub.s32 0, %v2406
        %v2408 = vrot.slane %v2403, %v2407
        %v2409 = vlaneseq
        %v2410 = vshrl.u32 %v2409, 7
        %v2411 = vsub.s32 1, %v2410
        %v2412 = vrot.slane %v2403, %v2411
        %v2413 = vlaneseq
        %v2414 = vshrl.u32 %v2413, 7
        %v2415 = vsub.s32 2, %v2414
        %v2416 = vrot.slane %v2403, %v2415
        %v2417 = vlaneseq
        %v2418 = vshrl.u32 %v2417, 7
        %v2419 = vsub.s32 3, %v2418
        %v2420 = vrot.slane %v2403, %v2419
        %v2457 = vunpack.c.l.b16 %v2370
        %v2458 = vunpack.c.h.b16 %v2370
        %v2459 = vunpack.c.l.b16 %v2371
        %v2460 = vunpack.c.h.b16 %v2371
        %v2461 = vunpack.c.l.b16 %v2372
        %v2462 = vunpack.c.h.b16 %v2372
        %v2463 = vunpack.c.l.b16 %v2373
        %v2464 = vunpack.c.h.b16 %v2373
        %v2465 = vunpack.c.l.b16 %v2374
        %v2466 = vunpack.c.h.b16 %v2374
        %v2467 = vunpack.c.l.b16 %v2375
        %v2468 = vunpack.c.h.b16 %v2375
        %v2469 = vunpack.c.l.b16 %v2376
        %v2470 = vunpack.c.h.b16 %v2376
        %v2471 = vunpack.c.l.b16 %v2377
        %v2472 = vunpack.c.h.b16 %v2377
        %v2473 = vunpack.c.l.b16 %v2378
        %v2474 = vunpack.c.h.b16 %v2378
        %v2475 = vunpack.c.l.b16 %v2379
        %v2476 = vunpack.c.h.b16 %v2379
        %v2477 = vunpack.c.l.b16 %v2380
        %v2478 = vunpack.c.h.b16 %v2380
        %v2479 = vunpack.c.l.b16 %v2381
        %v2480 = vunpack.c.h.b16 %v2381
        %v2481 = vunpack.c.l.b16 %v2382
        %v2482 = vunpack.c.h.b16 %v2382
        %v2483 = vunpack.c.l.b16 %v2383
        %v2484 = vunpack.c.h.b16 %v2383
        %v2485 = vunpack.c.l.b16 %v2384
        %v2486 = vunpack.c.h.b16 %v2384
        %v2487 = vunpack.c.l.b16 %v2385
        %v2488 = vunpack.c.h.b16 %v2385
        %v2489 = vunpack.c.l.b16 %v2386
        %v2490 = vunpack.c.h.b16 %v2386
        %v2491 = vunpack.c.l.b16 %v2387
        %v2492 = vunpack.c.h.b16 %v2387
        %v2493 = vunpack.c.l.b16 %v2388
        %v2494 = vunpack.c.h.b16 %v2388
        %v2495 = vunpack.c.l.b16 %v2389
        %v2496 = vunpack.c.h.b16 %v2389
        %v2497 = vunpack.c.l.b16 %v2390
        %v2498 = vunpack.c.h.b16 %v2390
        %v2499 = vunpack.c.l.b16 %v2391
        %v2500 = vunpack.c.h.b16 %v2391
        %v2501 = vunpack.c.l.b16 %v2392
        %v2502 = vunpack.c.h.b16 %v2392
        %v2503 = vunpack.c.l.b16 %v2393
        %v2504 = vunpack.c.h.b16 %v2393
        %v2505 = vunpack.c.l.b16 %v2394
        %v2506 = vunpack.c.h.b16 %v2394
        %v2507 = vunpack.c.l.b16 %v2395
        %v2508 = vunpack.c.h.b16 %v2395
        %v2509 = vunpack.c.l.b16 %v2396
        %v2510 = vunpack.c.h.b16 %v2396
        %v2511 = vunpack.c.l.b16 %v2397
        %v2512 = vunpack.c.h.b16 %v2397
        %v2513 = vunpack.c.l.b16 %v2398
        %v2514 = vunpack.c.h.b16 %v2398
        %v2515 = vunpack.c.l.b16 %v2399
        %v2516 = vunpack.c.h.b16 %v2399
        %v2517 = vunpack.c.l.b16 %v2400
        %v2518 = vunpack.c.h.b16 %v2400
        %v2519 = vunpack.c.l.b16 %v2401
        %v2520 = vunpack.c.h.b16 %v2401
        %v2521 = vpack.c.b16 %v2461, %v2457
        %v2522 = vpack.c.b16 %v2462, %v2458
        %v2523 = vpack.c.b16 %v2463, %v2459
        %v2524 = vpack.c.b16 %v2464, %v2460
        %v2525 = vpack.c.b16 %v2469, %v2465
        %v2526 = vpack.c.b16 %v2470, %v2466
        %v2527 = vpack.c.b16 %v2471, %v2467
        %v2528 = vpack.c.b16 %v2472, %v2468
        %v2529 = vpack.c.b16 %v2477, %v2473
        %v2530 = vpack.c.b16 %v2478, %v2474
        %v2531 = vpack.c.b16 %v2479, %v2475
        %v2532 = vpack.c.b16 %v2480, %v2476
        %v2533 = vpack.c.b16 %v2485, %v2481
        %v2534 = vpack.c.b16 %v2486, %v2482
        %v2535 = vpack.c.b16 %v2487, %v2483
        %v2536 = vpack.c.b16 %v2488, %v2484
        %v2537 = vpack.c.b16 %v2493, %v2489
        %v2538 = vpack.c.b16 %v2494, %v2490
        %v2539 = vpack.c.b16 %v2495, %v2491
        %v2540 = vpack.c.b16 %v2496, %v2492
        %v2541 = vpack.c.b16 %v2501, %v2497
        %v2542 = vpack.c.b16 %v2502, %v2498
        %v2543 = vpack.c.b16 %v2503, %v2499
        %v2544 = vpack.c.b16 %v2504, %v2500
        %v2545 = vpack.c.b16 %v2509, %v2505
        %v2546 = vpack.c.b16 %v2510, %v2506
        %v2547 = vpack.c.b16 %v2511, %v2507
        %v2548 = vpack.c.b16 %v2512, %v2508
        %v2549 = vpack.c.b16 %v2517, %v2513
        %v2550 = vpack.c.b16 %v2518, %v2514
        %v2551 = vpack.c.b16 %v2519, %v2515
        %v2552 = vpack.c.b16 %v2520, %v2516
        %2585 = vmatprep.subr.bf16.mxu0 %v2522
        %2586 = vmatpush1.bf16.msra.mxu0 %v2521
        %2587 = vmatprep.subr.bf16.mxu0 %v2526
        %2588 = vmatpush1.bf16.msra.mxu0 %v2525
        %2589 = vmatprep.subr.bf16.mxu0 %v2530
        %2590 = vmatpush1.bf16.msra.mxu0 %v2529
        %2591 = vmatprep.subr.bf16.mxu0 %v2534
        %2592 = vmatpush1.bf16.msra.mxu0 %v2533
        %2593 = vmatprep.subr.bf16.mxu0 %v2538
        %2594 = vmatpush1.bf16.msra.mxu0 %v2537
        %2595 = vmatprep.subr.bf16.mxu0 %v2542
        %2596 = vmatpush1.bf16.msra.mxu0 %v2541
        %2597 = vmatprep.subr.bf16.mxu0 %v2546
        %2598 = vmatpush1.bf16.msra.mxu0 %v2545
        %2599 = vmatprep.subr.bf16.mxu0 %v2550
        %2600 = vmatpush1.bf16.msra.mxu0 %v2549
        %2601 = vmatprep.subr.bf16.mxu0 0
        %2602 = vmatpush1.bf16.msra.mxu0 0
        %2603 = vmatprep.subr.bf16.mxu0 0
        %2604 = vmatpush1.bf16.msra.mxu0 0
        %2605 = vmatprep.subr.bf16.mxu0 0
        %2606 = vmatpush1.bf16.msra.mxu0 0
        %2607 = vmatprep.subr.bf16.mxu0 0
        %2608 = vmatpush1.bf16.msra.mxu0 0
        %2609 = vmatprep.subr.bf16.mxu0 0
        %2610 = vmatpush1.bf16.msra.mxu0 0
        %2611 = vmatprep.subr.bf16.mxu0 0
        %2612 = vmatpush1.bf16.msra.mxu0 0
        %2613 = vmatprep.subr.bf16.mxu0 0
        %2614 = vmatpush1.bf16.msra.mxu0 0
        %2615 = vmatprep.subr.bf16.mxu0 0
        %2616 = vmatpush1.bf16.msra.mxu0 0
        %2617 = vmatprep.mubr.bf16.mxu0 0
        %2618 = vmatmul.mubr.bf16.gmra.mrb[0].mxu0 %v2402
        %v2619 = vpop.f32.mrb[0].mxu0
        %v2620 = vadd.f32 %v2408, %v2619
        %v2621 = vpop.f32.mrb[0].mxu0
        %v2622 = vadd.f32 %v2412, %v2621
        %v2623 = vpop.f32.mrb[0].mxu0
        %v2624 = vadd.f32 %v2408, %v2623
        %v2625 = vpop.f32.mrb[0].mxu0
        %v2626 = vadd.f32 %v2412, %v2625
        %2627 = vdwg.mxu0
        %2628 = vmatprep.subr.bf16.mxu0 %v2524
        %2629 = vmatpush1.bf16.msra.mxu0 %v2523
        %2630 = vmatprep.subr.bf16.mxu0 %v2528
        %2631 = vmatpush1.bf16.msra.mxu0 %v2527
        %2632 = vmatprep.subr.bf16.mxu0 %v2532
        %2633 = vmatpush1.bf16.msra.mxu0 %v2531
        %2634 = vmatprep.subr.bf16.mxu0 %v2536
        %2635 = vmatpush1.bf16.msra.mxu0 %v2535
        %2636 = vmatprep.subr.bf16.mxu0 %v2540
        %2637 = vmatpush1.bf16.msra.mxu0 %v2539
        %2638 = vmatprep.subr.bf16.mxu0 %v2544
        %2639 = vmatpush1.bf16.msra.mxu0 %v2543
        %2640 = vmatprep.subr.bf16.mxu0 %v2548
        %2641 = vmatpush1.bf16.msra.mxu0 %v2547
        %2642 = vmatprep.subr.bf16.mxu0 %v2552
        %2643 = vmatpush1.bf16.msra.mxu0 %v2551
        %2644 = vmatprep.subr.bf16.mxu0 0
        %2645 = vmatpush1.bf16.msra.mxu0 0
        %2646 = vmatprep.subr.bf16.mxu0 0
        %2647 = vmatpush1.bf16.msra.mxu0 0
        %2648 = vmatprep.subr.bf16.mxu0 0
        %2649 = vmatpush1.bf16.msra.mxu0 0
        %2650 = vmatprep.subr.bf16.mxu0 0
        %2651 = vmatpush1.bf16.msra.mxu0 0
        %2652 = vmatprep.subr.bf16.mxu0 0
        %2653 = vmatpush1.bf16.msra.mxu0 0
        %2654 = vmatprep.subr.bf16.mxu0 0
        %2655 = vmatpush1.bf16.msra.mxu0 0
        %2656 = vmatprep.subr.bf16.mxu0 0
        %2657 = vmatpush1.bf16.msra.mxu0 0
        %2658 = vmatprep.subr.bf16.mxu0 0
        %2659 = vmatpush1.bf16.msra.mxu0 0
        %2660 = vmatprep.mubr.bf16.mxu0 0
        %2661 = vmatmul.mubr.bf16.gmra.mrb[0].mxu0 %v2402
        %v2662 = vpop.f32.mrb[0].mxu0
        %v2663 = vadd.f32 %v2416, %v2662
        %v2664 = vpop.f32.mrb[0].mxu0
        %v2665 = vadd.f32 %v2420, %v2664
        %v2666 = vpop.f32.mrb[0].mxu0
        %v2667 = vadd.f32 %v2416, %v2666
        %v2668 = vpop.f32.mrb[0].mxu0
        %v2669 = vadd.f32 %v2420, %v2668
        %2670 = vdwg.mxu0
        %v2671 = vmax.f32 %v2620, 0.0
        %v2672 = vmax.f32 %v2622, 0.0
        %v2673 = vmax.f32 %v2663, 0.0
        %v2674 = vmax.f32 %v2665, 0.0
        %v2675 = vmax.f32 %v2624, 0.0
        %v2676 = vmax.f32 %v2626, 0.0
        %v2677 = vmax.f32 %v2667, 0.0
        %v2678 = vmax.f32 %v2669, 0.0
        %v2679 = vpack.c.bf16 %v2675, %v2671
        %v2680 = vpack.c.bf16 %v2676, %v2672
        %v2681 = vpack.c.bf16 %v2677, %v2673
        %v2682 = vpack.c.bf16 %v2678, %v2674
        %v2683 = vld [vmem:[%s770] sm:$0xf]
        %v2684 = vld [vmem:[%s770 + $0x4] sm:$0xf]
        %v2685 = vld [vmem:[%s770 + $0x8] sm:$0xf]
        %v2686 = vld [vmem:[%s770 + $0xc] sm:$0xf]
        %v2687 = vld [vmem:[%s770 + $0x10] sm:$0xf]
        %v2688 = vld [vmem:[%s770 + $0x14] sm:$0xf]
        %v2689 = vld [vmem:[%s770 + $0x18] sm:$0xf]
        %v2690 = vld [vmem:[%s770 + $0x1c] sm:$0xf]
        %v2691 = vld [vmem:[%s770 + $0x20] sm:$0xf]
        %v2692 = vld [vmem:[%s770 + $0x24] sm:$0xf]
        %v2693 = vld [vmem:[%s770 + $0x28] sm:$0xf]
        %v2694 = vld [vmem:[%s770 + $0x2c] sm:$0xf]
        %v2695 = vld [vmem:[%s770 + $0x30] sm:$0xf]
        %v2696 = vld [vmem:[%s770 + $0x34] sm:$0xf]
        %v2697 = vld [vmem:[%s770 + $0x38] sm:$0xf]
        %v2698 = vld [vmem:[%s770 + $0x3c] sm:$0xf]
        %v2699 = vld [vmem:[%s770 + $0x40] sm:$0xf]
        %v2700 = vld [vmem:[%s770 + $0x44] sm:$0xf]
        %v2701 = vld [vmem:[%s770 + $0x48] sm:$0xf]
        %v2702 = vld [vmem:[%s770 + $0x4c] sm:$0xf]
        %v2703 = vld [vmem:[%s770 + $0x50] sm:$0xf]
        %v2704 = vld [vmem:[%s770 + $0x54] sm:$0xf]
        %v2705 = vld [vmem:[%s770 + $0x58] sm:$0xf]
        %v2706 = vld [vmem:[%s770 + $0x5c] sm:$0xf]
        %v2707 = vld [vmem:[%s770 + $0x60] sm:$0xf]
        %v2708 = vld [vmem:[%s770 + $0x64] sm:$0xf]
        %v2709 = vld [vmem:[%s770 + $0x68] sm:$0xf]
        %v2710 = vld [vmem:[%s770 + $0x6c] sm:$0xf]
        %v2711 = vld [vmem:[%s770 + $0x70] sm:$0xf]
        %v2712 = vld [vmem:[%s770 + $0x74] sm:$0xf]
        %v2713 = vld [vmem:[%s770 + $0x78] sm:$0xf]
        %v2714 = vld [vmem:[%s770 + $0x7c] sm:$0xf]
        %v2715 = vld [vmem:[%s770 + $0x80] sm:$0xf]
        %v2716 = vld [vmem:[%s770 + $0x84] sm:$0xf]
        %v2717 = vld [vmem:[%s770 + $0x88] sm:$0xf]
        %v2718 = vld [vmem:[%s770 + $0x8c] sm:$0xf]
        %v2719 = vld [vmem:[%s770 + $0x90] sm:$0xf]
        %v2720 = vld [vmem:[%s770 + $0x94] sm:$0xf]
        %v2721 = vld [vmem:[%s770 + $0x98] sm:$0xf]
        %v2722 = vld [vmem:[%s770 + $0x9c] sm:$0xf]
        %v2723 = vld [vmem:[%s770 + $0xa0] sm:$0xf]
        %v2724 = vld [vmem:[%s770 + $0xa4] sm:$0xf]
        %v2725 = vld [vmem:[%s770 + $0xa8] sm:$0xf]
        %v2726 = vld [vmem:[%s770 + $0xac] sm:$0xf]
        %v2727 = vld [vmem:[%s770 + $0xb0] sm:$0xf]
        %v2728 = vld [vmem:[%s770 + $0xb4] sm:$0xf]
        %v2729 = vld [vmem:[%s770 + $0xb8] sm:$0xf]
        %v2730 = vld [vmem:[%s770 + $0xbc] sm:$0xf]
        %v2731 = vld [vmem:[%s770 + $0xc0] sm:$0xf]
        %v2732 = vld [vmem:[%s770 + $0xc4] sm:$0xf]
        %v2733 = vld [vmem:[%s770 + $0xc8] sm:$0xf]
        %v2734 = vld [vmem:[%s770 + $0xcc] sm:$0xf]
        %v2735 = vld [vmem:[%s770 + $0xd0] sm:$0xf]
        %v2736 = vld [vmem:[%s770 + $0xd4] sm:$0xf]
        %v2737 = vld [vmem:[%s770 + $0xd8] sm:$0xf]
        %v2738 = vld [vmem:[%s770 + $0xdc] sm:$0xf]
        %v2739 = vld [vmem:[%s770 + $0xe0] sm:$0xf]
        %v2740 = vld [vmem:[%s770 + $0xe4] sm:$0xf]
        %v2741 = vld [vmem:[%s770 + $0xe8] sm:$0xf]
        %v2742 = vld [vmem:[%s770 + $0xec] sm:$0xf]
        %v2743 = vld [vmem:[%s770 + $0xf0] sm:$0xf]
        %v2744 = vld [vmem:[%s770 + $0xf4] sm:$0xf]
        %v2745 = vld [vmem:[%s770 + $0xf8] sm:$0xf]
        %v2746 = vld [vmem:[%s770 + $0xfc] sm:$0xf]
        %v2811 = vunpack.c.l.b16 %v2683
        %v2812 = vunpack.c.l.b16 %v2684
        %v2813 = vunpack.c.l.b16 %v2685
        %v2814 = vunpack.c.l.b16 %v2686
        %v2815 = vunpack.c.l.b16 %v2687
        %v2816 = vunpack.c.l.b16 %v2688
        %v2817 = vunpack.c.l.b16 %v2689
        %v2818 = vunpack.c.l.b16 %v2690
        %v2819 = vunpack.c.l.b16 %v2691
        %v2820 = vunpack.c.l.b16 %v2692
        %v2821 = vunpack.c.l.b16 %v2693
        %v2822 = vunpack.c.l.b16 %v2694
        %v2823 = vunpack.c.l.b16 %v2695
        %v2824 = vunpack.c.l.b16 %v2696
        %v2825 = vunpack.c.l.b16 %v2697
        %v2826 = vunpack.c.l.b16 %v2698
        %v2827 = vunpack.c.l.b16 %v2699
        %v2828 = vunpack.c.l.b16 %v2700
        %v2829 = vunpack.c.l.b16 %v2701
        %v2830 = vunpack.c.l.b16 %v2702
        %v2831 = vunpack.c.l.b16 %v2703
        %v2832 = vunpack.c.l.b16 %v2704
        %v2833 = vunpack.c.l.b16 %v2705
        %v2834 = vunpack.c.l.b16 %v2706
        %v2835 = vunpack.c.l.b16 %v2707
        %v2836 = vunpack.c.l.b16 %v2708
        %v2837 = vunpack.c.l.b16 %v2709
        %v2838 = vunpack.c.l.b16 %v2710
        %v2839 = vunpack.c.l.b16 %v2711
        %v2840 = vunpack.c.l.b16 %v2712
        %v2841 = vunpack.c.l.b16 %v2713
        %v2842 = vunpack.c.l.b16 %v2714
        %v2843 = vunpack.c.l.b16 %v2715
        %v2844 = vunpack.c.l.b16 %v2716
        %v2845 = vunpack.c.l.b16 %v2717
        %v2846 = vunpack.c.l.b16 %v2718
        %v2847 = vunpack.c.l.b16 %v2719
        %v2848 = vunpack.c.l.b16 %v2720
        %v2849 = vunpack.c.l.b16 %v2721
        %v2850 = vunpack.c.l.b16 %v2722
        %v2851 = vunpack.c.l.b16 %v2723
        %v2852 = vunpack.c.l.b16 %v2724
        %v2853 = vunpack.c.l.b16 %v2725
        %v2854 = vunpack.c.l.b16 %v2726
        %v2855 = vunpack.c.l.b16 %v2727
        %v2856 = vunpack.c.l.b16 %v2728
        %v2857 = vunpack.c.l.b16 %v2729
        %v2858 = vunpack.c.l.b16 %v2730
        %v2859 = vunpack.c.l.b16 %v2731
        %v2860 = vunpack.c.l.b16 %v2732
        %v2861 = vunpack.c.l.b16 %v2733
        %v2862 = vunpack.c.l.b16 %v2734
        %v2863 = vunpack.c.l.b16 %v2735
        %v2864 = vunpack.c.l.b16 %v2736
        %v2865 = vunpack.c.l.b16 %v2737
        %v2866 = vunpack.c.l.b16 %v2738
        %v2867 = vunpack.c.l.b16 %v2739
        %v2868 = vunpack.c.l.b16 %v2740
        %v2869 = vunpack.c.l.b16 %v2741
        %v2870 = vunpack.c.l.b16 %v2742
        %v2871 = vunpack.c.l.b16 %v2743
        %v2872 = vunpack.c.l.b16 %v2744
        %v2873 = vunpack.c.l.b16 %v2745
        %v2874 = vunpack.c.l.b16 %v2746
        %v2875 = vpack.c.b16 %v2812, %v2811
        %v2876 = vpack.c.b16 %v2814, %v2813
        %v2877 = vpack.c.b16 %v2816, %v2815
        %v2878 = vpack.c.b16 %v2818, %v2817
        %v2879 = vpack.c.b16 %v2820, %v2819
        %v2880 = vpack.c.b16 %v2822, %v2821
        %v2881 = vpack.c.b16 %v2824, %v2823
        %v2882 = vpack.c.b16 %v2826, %v2825
        %v2883 = vpack.c.b16 %v2828, %v2827
        %v2884 = vpack.c.b16 %v2830, %v2829
        %v2885 = vpack.c.b16 %v2832, %v2831
        %v2886 = vpack.c.b16 %v2834, %v2833
        %v2887 = vpack.c.b16 %v2836, %v2835
        %v2888 = vpack.c.b16 %v2838, %v2837
        %v2889 = vpack.c.b16 %v2840, %v2839
        %v2890 = vpack.c.b16 %v2842, %v2841
        %v2891 = vpack.c.b16 %v2844, %v2843
        %v2892 = vpack.c.b16 %v2846, %v2845
        %v2893 = vpack.c.b16 %v2848, %v2847
        %v2894 = vpack.c.b16 %v2850, %v2849
        %v2895 = vpack.c.b16 %v2852, %v2851
        %v2896 = vpack.c.b16 %v2854, %v2853
        %v2897 = vpack.c.b16 %v2856, %v2855
        %v2898 = vpack.c.b16 %v2858, %v2857
        %v2899 = vpack.c.b16 %v2860, %v2859
        %v2900 = vpack.c.b16 %v2862, %v2861
        %v2901 = vpack.c.b16 %v2864, %v2863
        %v2902 = vpack.c.b16 %v2866, %v2865
        %v2903 = vpack.c.b16 %v2868, %v2867
        %v2904 = vpack.c.b16 %v2870, %v2869
        %v2905 = vpack.c.b16 %v2872, %v2871
        %v2906 = vpack.c.b16 %v2874, %v2873
        %2939 = vmatprep.subr.bf16.mxu0 0
        %2940 = vmatpush1.bf16.msra.mxu0 %v2875
        %2941 = vmatprep.subr.bf16.mxu0 0
        %2942 = vmatpush1.bf16.msra.mxu0 %v2876
        %2943 = vmatprep.subr.bf16.mxu0 0
        %2944 = vmatpush1.bf16.msra.mxu0 %v2877
        %2945 = vmatprep.subr.bf16.mxu0 0
        %2946 = vmatpush1.bf16.msra.mxu0 %v2878
        %2947 = vmatprep.subr.bf16.mxu0 0
        %2948 = vmatpush1.bf16.msra.mxu0 %v2879
        %2949 = vmatprep.subr.bf16.mxu0 0
        %2950 = vmatpush1.bf16.msra.mxu0 %v2880
        %2951 = vmatprep.subr.bf16.mxu0 0
        %2952 = vmatpush1.bf16.msra.mxu0 %v2881
        %2953 = vmatprep.subr.bf16.mxu0 0
        %2954 = vmatpush1.bf16.msra.mxu0 %v2882
        %2955 = vmatprep.subr.bf16.mxu0 0
        %2956 = vmatpush1.bf16.msra.mxu0 %v2883
        %2957 = vmatprep.subr.bf16.mxu0 0
        %2958 = vmatpush1.bf16.msra.mxu0 %v2884
        %2959 = vmatprep.subr.bf16.mxu0 0
        %2960 = vmatpush1.bf16.msra.mxu0 %v2885
        %2961 = vmatprep.subr.bf16.mxu0 0
        %2962 = vmatpush1.bf16.msra.mxu0 %v2886
        %2963 = vmatprep.subr.bf16.mxu0 0
        %2964 = vmatpush1.bf16.msra.mxu0 %v2887
        %2965 = vmatprep.subr.bf16.mxu0 0
        %2966 = vmatpush1.bf16.msra.mxu0 %v2888
        %2967 = vmatprep.subr.bf16.mxu0 0
        %2968 = vmatpush1.bf16.msra.mxu0 %v2889
        %2969 = vmatprep.subr.bf16.mxu0 0
        %2970 = vmatpush1.bf16.msra.mxu0 %v2890
        %2971 = vmatprep.mubr.bf16.mxu0 %v2680
        %2972 = vmatmul.mubr.bf16.gmra.mrb[0].mxu0 %v2679
        %v2973 = vpop.f32.mrb[0].mxu0
        %v2974 = vadd.f32 0.0, %v2973
        %v2975 = vpop.f32.mrb[0].mxu0
        %v2976 = vpop.f32.mrb[0].mxu0
        %v2977 = vadd.f32 0.0, %v2976
        %v2978 = vpop.f32.mrb[0].mxu0
        %2979 = vdwg.mxu0
        %2980 = vmatprep.subr.bf16.mxu0 0
        %2981 = vmatpush1.bf16.msra.mxu0 %v2891
        %2982 = vmatprep.subr.bf16.mxu0 0
        %2983 = vmatpush1.bf16.msra.mxu0 %v2892
        %2984 = vmatprep.subr.bf16.mxu0 0
        %2985 = vmatpush1.bf16.msra.mxu0 %v2893
        %2986 = vmatprep.subr.bf16.mxu0 0
        %2987 = vmatpush1.bf16.msra.mxu0 %v2894
        %2988 = vmatprep.subr.bf16.mxu0 0
        %2989 = vmatpush1.bf16.msra.mxu0 %v2895
        %2990 = vmatprep.subr.bf16.mxu0 0
        %2991 = vmatpush1.bf16.msra.mxu0 %v2896
        %2992 = vmatprep.subr.bf16.mxu0 0
        %2993 = vmatpush1.bf16.msra.mxu0 %v2897
        %2994 = vmatprep.subr.bf16.mxu0 0
        %2995 = vmatpush1.bf16.msra.mxu0 %v2898
        %2996 = vmatprep.subr.bf16.mxu0 0
        %2997 = vmatpush1.bf16.msra.mxu0 %v2899
        %2998 = vmatprep.subr.bf16.mxu0 0
        %2999 = vmatpush1.bf16.msra.mxu0 %v2900
        %3000 = vmatprep.subr.bf16.mxu0 0
        %3001 = vmatpush1.bf16.msra.mxu0 %v2901
        %3002 = vmatprep.subr.bf16.mxu0 0
        %3003 = vmatpush1.bf16.msra.mxu0 %v2902
        %3004 = vmatprep.subr.bf16.mxu0 0
        %3005 = vmatpush1.bf16.msra.mxu0 %v2903
        %3006 = vmatprep.subr.bf16.mxu0 0
        %3007 = vmatpush1.bf16.msra.mxu0 %v2904
        %3008 = vmatprep.subr.bf16.mxu0 0
        %3009 = vmatpush1.bf16.msra.mxu0 %v2905
        %3010 = vmatprep.subr.bf16.mxu0 0
        %3011 = vmatpush1.bf16.msra.mxu0 %v2906
        %3012 = vmatprep.mubr.bf16.mxu0 %v2682
        %3013 = vmatmul.mubr.bf16.gmra.mrb[0].mxu0 %v2681
        %v3014 = vpop.f32.mrb[0].mxu0
        %v3015 = vadd.f32 %v2974, %v3014
        %v3016 = vpop.f32.mrb[0].mxu0
        %v3017 = vpop.f32.mrb[0].mxu0
        %v3018 = vadd.f32 %v2977, %v3017
        %v3019 = vpop.f32.mrb[0].mxu0
        %3020 = vdwg.mxu0
        // Predicated region
        $region133: #{tpu_custom_call.1} parent=87 // pred_check
          %p3021 = pneg %p896
        $region134: #{tpu_custom_call.1} parent=87 // pred_check_branch
          %3023 = sbr.rel (%p3021) target = $region136
        $region135: #{tpu_custom_call.1} parent=87 // pred_region
          %3024 = vst [vmem:[#allocation4] sm:$0xff] %v3015
          %3025 = vst [vmem:[#allocation4 + $0x8] sm:$0xff] %v3018
        $region136: #{tpu_custom_call.1} parent=87 // pred_fallthru
          _
        %p3026 = scmp.gt.s32.totalorder %s43, 0
        // Predicated region
        $region137: #{tpu_custom_call.1} parent=87 // pred_check
          %p3027 = pneg %p3026
        $region138: #{tpu_custom_call.1} parent=87 // pred_check_branch
          %3029 = sbr.rel (%p3027) target = $region140
        $region139: #{tpu_custom_call.1} parent=87 // pred_region
          %v3030 = vld [vmem:[#allocation4] sm:$0xff]
          %v3031 = vld [vmem:[#allocation4 + $0x8] sm:$0xff]
          %v3032 = vadd.f32 %v3030, %v3015
          %v3033 = vadd.f32 %v3031, %v3018
          %3034 = vst [vmem:[#allocation4] sm:$0xff] %v3032
          %3035 = vst [vmem:[#allocation4 + $0x8] sm:$0xff] %v3033
        $region140: #{tpu_custom_call.1} parent=87 // pred_fallthru
          _
        %p3036 = scmp.eq.s32.totalorder %s43, 3
        // Predicated region
        $region141: #{tpu_custom_call.1} parent=87 // pred_check
          %p3037 = pneg %p3036
        $region142: #{tpu_custom_call.1} parent=87 // pred_check_branch
          %3039 = sbr.rel (%p3037) target = $region144
        $region143: #{tpu_custom_call.1} parent=87 // pred_region
          %v3040 = vld [vmem:[#allocation3] sm:$0xff]
          %v3041 = vld [vmem:[#allocation3 + $0x8] sm:$0xff]
          %v3042 = vld [vmem:[#allocation4] sm:$0xff]
          %v3043 = vld [vmem:[#allocation4 + $0x8] sm:$0xff]
          %v3044 = vadd.f32 %v3040, %v3042
          %v3045 = vadd.f32 %v3041, %v3043
          %v3046 = vld [vmem:[%s893] sm:$0x1]
          %v3048 = vlaneseq
          %v3049 = vshrl.u32 %v3048, 7
          %v3050 = vsub.s32 0, %v3049
          %v3051 = vrot.slane %v3046, %v3050
          %v3053 = vadd.f32 %v3044, %v3051
          %v3054 = vadd.f32 %v3045, %v3051
          %v3055 = vld [vmem:[%s876] sm:$0x1]
          %v3056 = vld [vmem:[%s879] sm:$0x1]
          %3057 = vadd.xlane.f32.xlu0 %v3053
          %v3058 = vpop.xlane.xlu0 %3057
          %3059 = vadd.xlane.f32.xlu0 %v3054
          %v3060 = vpop.xlane.xlu0 %3059
          %v3061 = vrcp.pop 128.0
          %v3062 = vmul.f32 %v3058, %v3061
          %v3063 = vmul.f32 %v3060, %v3061
          %v3064 = vsub.f32 %v3053, %v3062
          %v3065 = vsub.f32 %v3054, %v3063
          %v3066 = vmul.f32 %v3064, %v3064
          %v3067 = vmul.f32 %v3065, %v3065
          %3068 = vadd.xlane.f32.xlu0 %v3066
          %v3069 = vpop.xlane.xlu0 %3068
          %3070 = vadd.xlane.f32.xlu0 %v3067
          %v3071 = vpop.xlane.xlu0 %3070
          %v3072 = vmul.f32 %v3069, %v3061
          %v3073 = vmul.f32 %v3071, %v3061
          %v3074 = vadd.f32 %v3072, 1e-05
          %v3075 = vadd.f32 %v3073, 1e-05
          %v3076 = vrsqrt.pop %v3074
          %v3077 = vrsqrt.pop %v3075
          %v3078 = vmul.f32 %v3064, %v3076
          %v3079 = vmul.f32 %v3065, %v3077
          %v3081 = vlaneseq
          %v3082 = vshrl.u32 %v3081, 7
          %v3083 = vsub.s32 0, %v3082
          %v3084 = vrot.slane %v3055, %v3083
          %v3086 = vmul.f32 %v3078, %v3084
          %v3087 = vmul.f32 %v3079, %v3084
          %v3089 = vlaneseq
          %v3090 = vshrl.u32 %v3089, 7
          %v3091 = vsub.s32 0, %v3090
          %v3092 = vrot.slane %v3056, %v3091
          %v3094 = vadd.f32 %v3086, %v3092
          %v3095 = vadd.f32 %v3087, %v3092
          %3096 = vst [vmem:[#allocation2] sm:$0xff] %v3094
          %3097 = vst [vmem:[#allocation2 + $0x8] sm:$0xff] %v3095
        $region144: #{tpu_custom_call.1} parent=87 // pred_fallthru
          _
        %p3098 = scmp.eq.s32.totalorder %s42, 1
        %p3099 = pnand %p3098, %p3036
        %p3100 = pneg %p3099
        // Predicated region
        $region145: #{tpu_custom_call.1} parent=87 // pred_check
          _
        $region146: #{tpu_custom_call.1} parent=87 // pred_check_branch
          %3102 = sbr.rel (%p3099) target = $region148
        $region147: #{tpu_custom_call.1} parent=87 // pred_region
          %v3103 = vld [vmem:[#allocation2] sm:$0xff]
          %v3104 = vld [vmem:[#allocation2 + $0x8] sm:$0xff]
          %v3105 = vld [vmem:[#allocation11] sm:$0xf]
          %v3106 = vld [vmem:[#allocation11 + $0x4] sm:$0xf]
          %v3107 = vld [vmem:[#allocation11 + $0x8] sm:$0xf]
          %v3108 = vld [vmem:[#allocation11 + $0xc] sm:$0xf]
          %v3109 = vld [vmem:[#allocation11 + $0x10] sm:$0xf]
          %v3110 = vld [vmem:[#allocation11 + $0x14] sm:$0xf]
          %v3111 = vld [vmem:[#allocation11 + $0x18] sm:$0xf]
          %v3112 = vld [vmem:[#allocation11 + $0x1c] sm:$0xf]
          %v3113 = vld [vmem:[#allocation11 + $0x20] sm:$0xf]
          %v3114 = vld [vmem:[#allocation11 + $0x24] sm:$0xf]
          %v3115 = vld [vmem:[#allocation11 + $0x28] sm:$0xf]
          %v3116 = vld [vmem:[#allocation11 + $0x2c] sm:$0xf]
          %v3117 = vld [vmem:[#allocation11 + $0x30] sm:$0xf]
          %v3118 = vld [vmem:[#allocation11 + $0x34] sm:$0xf]
          %v3119 = vld [vmem:[#allocation11 + $0x38] sm:$0xf]
          %v3120 = vld [vmem:[#allocation11 + $0x3c] sm:$0xf]
          %v3121 = vpack.c.bf16 %v3104, %v3103
          %v3122 = vld [vmem:[#allocation13] sm:$0x1]
          %v3124 = vlaneseq
          %v3125 = vshrl.u32 %v3124, 7
          %v3126 = vsub.s32 0, %v3125
          %v3127 = vrot.slane %v3122, %v3126
          %v3145 = vunpack.c.l.b16 %v3105
          %v3146 = vunpack.c.l.b16 %v3106
          %v3147 = vunpack.c.l.b16 %v3107
          %v3148 = vunpack.c.l.b16 %v3108
          %v3149 = vunpack.c.l.b16 %v3109
          %v3150 = vunpack.c.l.b16 %v3110
          %v3151 = vunpack.c.l.b16 %v3111
          %v3152 = vunpack.c.l.b16 %v3112
          %v3153 = vunpack.c.l.b16 %v3113
          %v3154 = vunpack.c.l.b16 %v3114
          %v3155 = vunpack.c.l.b16 %v3115
          %v3156 = vunpack.c.l.b16 %v3116
          %v3157 = vunpack.c.l.b16 %v3117
          %v3158 = vunpack.c.l.b16 %v3118
          %v3159 = vunpack.c.l.b16 %v3119
          %v3160 = vunpack.c.l.b16 %v3120
          %v3161 = vpack.c.b16 %v3146, %v3145
          %v3162 = vpack.c.b16 %v3148, %v3147
          %v3163 = vpack.c.b16 %v3150, %v3149
          %v3164 = vpack.c.b16 %v3152, %v3151
          %v3165 = vpack.c.b16 %v3154, %v3153
          %v3166 = vpack.c.b16 %v3156, %v3155
          %v3167 = vpack.c.b16 %v3158, %v3157
          %v3168 = vpack.c.b16 %v3160, %v3159
          %3177 = vmatprep.subr.bf16.mxu0 0
          %3178 = vmatpush1.bf16.msra.mxu0 %v3161
          %3179 = vmatprep.subr.bf16.mxu0 0
          %3180 = vmatpush1.bf16.msra.mxu0 %v3162
          %3181 = vmatprep.subr.bf16.mxu0 0
          %3182 = vmatpush1.bf16.msra.mxu0 %v3163
          %3183 = vmatprep.subr.bf16.mxu0 0
          %3184 = vmatpush1.bf16.msra.mxu0 %v3164
          %3185 = vmatprep.subr.bf16.mxu0 0
          %3186 = vmatpush1.bf16.msra.mxu0 %v3165
          %3187 = vmatprep.subr.bf16.mxu0 0
          %3188 = vmatpush1.bf16.msra.mxu0 %v3166
          %3189 = vmatprep.subr.bf16.mxu0 0
          %3190 = vmatpush1.bf16.msra.mxu0 %v3167
          %3191 = vmatprep.subr.bf16.mxu0 0
          %3192 = vmatpush1.bf16.msra.mxu0 %v3168
          %3193 = vmatprep.subr.bf16.mxu0 0
          %3194 = vmatpush1.bf16.msra.mxu0 0
          %3195 = vmatprep.subr.bf16.mxu0 0
          %3196 = vmatpush1.bf16.msra.mxu0 0
          %3197 = vmatprep.subr.bf16.mxu0 0
          %3198 = vmatpush1.bf16.msra.mxu0 0
          %3199 = vmatprep.subr.bf16.mxu0 0
          %3200 = vmatpush1.bf16.msra.mxu0 0
          %3201 = vmatprep.subr.bf16.mxu0 0
          %3202 = vmatpush1.bf16.msra.mxu0 0
          %3203 = vmatprep.subr.bf16.mxu0 0
          %3204 = vmatpush1.bf16.msra.mxu0 0
          %3205 = vmatprep.subr.bf16.mxu0 0
          %3206 = vmatpush1.bf16.msra.mxu0 0
          %3207 = vmatprep.subr.bf16.mxu0 0
          %3208 = vmatpush1.bf16.msra.mxu0 0
          %3209 = vmatprep.mubr.bf16.mxu0 0
          %3210 = vmatmul.mubr.bf16.gmra.mrb[0].mxu0 %v3121
          %v3211 = vpop.f32.mrb[0].mxu0
          %v3212 = vadd.f32 %v3127, %v3211
          %v3213 = vpop.f32.mrb[0].mxu0
          %v3214 = vpop.f32.mrb[0].mxu0
          %v3215 = vadd.f32 %v3127, %v3214
          %v3216 = vpop.f32.mrb[0].mxu0
          %3217 = vdwg.mxu0
          %3218 = vst [vmem:[#allocation20] sm:$0xff] %v3212
          %3219 = vst [vmem:[#allocation20 + $0x8] sm:$0xff] %v3215
        $region148: #{tpu_custom_call.1} parent=87 // pred_fallthru
          _
        // Predicated region
        $region149: #{tpu_custom_call.1} parent=87 // pred_check
          %p3220 = pneg %p486
        $region150: #{tpu_custom_call.1} parent=87 // pred_check_branch
          %3222 = sbr.rel (%p3220) target = $region152
        $region151: #{tpu_custom_call.1} parent=87 // pred_region
          %s3224 = ssub.s32 256, 256
          %3225 = vsyncadd [#allocation7], %s3224
          %s3226 = sshll.u32 [#allocation20], 4
          %s3227 = int_to_ptr.vmem [resolvable:$true] %s3226
          %3232 = dma.vmem_to_hbm [thread:$0]  %s3227, 256, %s17, [#allocation7], 128, 128, 8
        $region152: #{tpu_custom_call.1} parent=87 // pred_fallthru
          _
        // Predicated region
        $region153: #{tpu_custom_call.1} parent=87 // pred_check
          %p3233 = pneg %p486
        $region154: #{tpu_custom_call.1} parent=87 // pred_check_branch
          %3235 = sbr.rel (%p3233) target = $region156
        $region155: #{tpu_custom_call.1} parent=87 // pred_region
          %3236 = dma.done [#allocation7], 256
        $region156: #{tpu_custom_call.1} parent=87 // pred_fallthru
          _
      $region88: #{tpu_custom_call.1} parent=5 // pred_fallthru
        _
      %p3237 = scmp.le.s32.totalorder 2, %s33
      // Predicated region
      $region157: #{tpu_custom_call.1} parent=5 // pred_check
        %p3238 = pneg %p3237
      $region158: #{tpu_custom_call.1} parent=5 // pred_check_branch
        %3240 = sbr.rel (%p3238) target = $region160
      $region159: #{tpu_custom_call.1} parent=5 // pred_region
        %s3241 = ssub.s32 %s33, 2
      $region160: #{tpu_custom_call.1} parent=5 // pred_fallthru
        _
    $region6: #{tpu_custom_call.1} parent=1 // loop_footer
      %s37 = sadd.s32 1, %s33
    $region7: #{tpu_custom_call.1} parent=1 // loop_footer_branch
      %32 = sbr.rel target = $region3
    $region8: #{tpu_custom_call.1} parent=1 // loop_exit
      _
    %3242 = vsyncpa [#allocation6], 1
    %s3243 = scalar_lea.sflag [#allocation6], 1
    %3244 = vsyncpa %s3243, 1
    %3245 = vsyncpa [#allocation9], 1
    %3246 = vsyncpa [#allocation12], 1
    %3247 = vsyncpa [#allocation15], 1
    %s3248 = scalar_lea.sflag [#allocation15], 1
    %3249 = vsyncpa %s3248, 1
    %3250 = vsyncpa [#allocation18], 1
    %s3251 = scalar_lea.sflag [#allocation18], 1
    %3252 = vsyncpa %s3251, 1
    %3253 = vsyncpa [#allocation7], 1
    %s3254 = scalar_lea.sflag [#allocation7], 1
    %3255 = vsyncpa %s3254, 1

</llo_original>
